<compile_context>
chip_gen: v5e
topology: v5e:2x2
jax: 0.10.0
libtpu: 0.0.40
codegen_flags: <defaults>
</compile_context>

<pallas_src>
import functools

import numpy as np
import jax
import jax.numpy as jnp
from jax import lax
from jax.experimental import pallas as pl
from jax.experimental.pallas import tpu as pltpu


VMEM_LIMIT = 64 * 1024 * 1024          # conservative cap, works on v5e/v6e/v7x
_INV_SQRT2 = 0.7071067811865476


# ---------------------------------------------------------------------------
# Elementwise helpers (run inside kernels, f32)
# ---------------------------------------------------------------------------
def _erf_approx(x):
    # TODO(synk): Mosaic has no native erf lowering; Abramowitz-Stegun 7.1.26
    # (|err| < 1.5e-7).  The cheaper tanh-approx GELU would free VALU slots but
    # slightly changes the reference semantics, so the erf form is kept.
    p = 0.3275911
    a1, a2, a3, a4, a5 = (0.254829592, -0.284496736, 1.421413741,
                          -1.453152027, 1.061405429)
    ax = jnp.abs(x)
    t = 1.0 / (1.0 + p * ax)
    poly = ((((a5 * t + a4) * t + a3) * t + a2) * t + a1) * t
    y = 1.0 - poly * jnp.exp(-ax * ax)
    return jnp.where(x < 0.0, -y, y)


def _gelu(x):
    # torch erf-based gelu: x * 0.5 * (1 + erf(x / sqrt(2)))
    return x * 0.5 * (1.0 + _erf_approx(x * _INV_SQRT2))


# ---------------------------------------------------------------------------
# In-kernel 3x3 "same" conv as 9 shifted matmuls (channels-first, flattened)
# ---------------------------------------------------------------------------
def _conv3x3_rows(x_rows, pad_ref, taps_ref, b_ref, lmask, rmask, *, rows_out, W):
    """3x3 conv over `rows_out` output rows.

    x_rows : (C_in, (rows_out+2)*W)  rows incl. a 1-row halo each side (halo
             rows already hold the correct neighbour / zero-padding values).
    pad_ref: (C_in, (rows_out+2)*W + 2) VMEM scratch; one extra element on each
             end makes every tap a plain static lane slice.
    taps_ref: (9, C_out, C_in), tap k = 3*dy + dx.   b_ref: (C_out, 1) f32.
    lmask/rmask: (1, >= rows_out*W) 0/1 masks zeroing the W-wraparound lanes.
    Returns f32 (C_out, rows_out*W) = conv + bias.
    """
    rin = rows_out + 2
    L = rows_out * W
    cout = taps_ref.shape[1]
    pad_ref[...] = jnp.zeros(pad_ref.shape, pad_ref.dtype)
    pad_ref[:, 1:1 + rin * W] = x_rows.astype(pad_ref.dtype)
    lm = lmask[:, :L]
    rm = rmask[:, :L]
    acc = jnp.zeros((cout, L), jnp.float32)
    for dy in range(3):
        for dx in range(3):
            sl = pad_ref[:, dy * W + dx: dy * W + dx + L]
            if dx == 0:
                sl = sl * lm
            elif dx == 2:
                sl = sl * rm
            acc = acc + jnp.dot(taps_ref[3 * dy + dx], sl,
                                preferred_element_type=jnp.float32)
    return acc + b_ref[...]


# ---------------------------------------------------------------------------
# Kernel A: fused conv1 -> GELU -> conv2 -> GELU over halo'd row tiles
# ---------------------------------------------------------------------------
def _fcab_convpair_kernel(xw_ref, rowm_ref, colm_ref, w1_ref, b1_ref,
                          w2_ref, b2_ref, o_ref, pad1_ref, pad2_ref,
                          *, W, rows_mid, rows_out):
    lmask = colm_ref[0]                   # (1, rows_mid*W)
    rmask = colm_ref[1]
    # conv1 (+bias) on rows_mid = tile+2 rows (1-row halo kept for conv2)
    t1 = _conv3x3_rows(xw_ref[0, 0], pad1_ref, w1_ref, b1_ref, lmask, rmask,
                       rows_out=rows_mid, W=W)
    t1 = _gelu(t1)
    # rows outside the image must behave like conv2's zero padding
    t1 = t1 * rowm_ref[0]
    # TODO(synk): nn.Dropout(p=0.8) is identity in eval mode (no torch RNG to match).
    y = _conv3x3_rows(t1, pad2_ref, w2_ref, b2_ref, lmask, rmask,
                      rows_out=rows_out, W=W)
    o_ref[0] = _gelu(y)


# ---------------------------------------------------------------------------
# Kernel B: FCA head = conv0 + ReLU + global average pool (per sample)
# ---------------------------------------------------------------------------
def _fca_head_kernel(ww_ref, colm_ref, w0_ref, b0_ref, o_ref, pad_ref,
                     *, W, rows_out):
    lmask = colm_ref[0]
    rmask = colm_ref[1]
    f = _conv3x3_rows(ww_ref[0], pad_ref, w0_ref, b0_ref, lmask, rmask,
                      rows_out=rows_out, W=W)
    f = jnp.maximum(f, 0.0)
    o_ref[0] = jnp.mean(f, axis=1, keepdims=True)     # (C, 1)


# ---------------------------------------------------------------------------
# Kernel C: tiled  out = conv * gate + residual (+ global residual)
# ---------------------------------------------------------------------------
def _scale_residual_kernel(conv_ref, g_ref, res_ref, o_ref):
    o_ref[0] = conv_ref[0] * g_ref[0] + res_ref[0]


def _scale_residual2_kernel(conv_ref, g_ref, res_ref, res2_ref, o_ref):
    o_ref[0] = conv_ref[0] * g_ref[0] + res_ref[0] + res2_ref[0]


# ---------------------------------------------------------------------------
# Trace-time helpers (numpy constants / layout plumbing)
# ---------------------------------------------------------------------------
def _taps_from_oihw(w):
    co, ci, kh, kw = w.shape
    return jnp.transpose(w, (2, 3, 0, 1)).reshape(kh * kw, co, ci)


def _col_masks(rows, W):
    w = np.arange(rows * W) % W
    left = (w >= 1).astype(np.float32)          # valid lanes for dx == 0
    right = (w <= W - 2).astype(np.float32)     # valid lanes for dx == 2
    return jnp.asarray(np.stack([left, right], axis=0))[:, None, :]   # (2,1,L)


def _row_masks(H, W, TH):
    nh = H // TH
    masks = []
    for j in range(nh):
        rows = np.arange(j * TH - 1, j * TH + TH + 1)      # t1 window rows
        valid = ((rows >= 0) & (rows < H)).astype(np.float32)
        masks.append(np.repeat(valid, W))
    return jnp.asarray(np.stack(masks, axis=0))[:, None, :]  # (nH,1,(TH+2)*W)


def _pick_row_tile(H, W, C, cap_bytes=4 << 20):
    def ok(th):
        return (H % th == 0 and (th == H or (th * W) % 128 == 0)
                and C * th * W * 4 <= cap_bytes)
    for th in range(H // 2, 0, -1):        # prefer >= 2 tiles for pipelining
        if ok(th):
            return th
    return H


def _pick_flat_tile(hw, cap=8192):
    for t in range(min(cap, hw // 2), 127, -1):
        if hw % t == 0 and t % 128 == 0:
            return t
    return hw


def _linterp_matrix(src, dst):
    # bilinear, align_corners=True, separable 1-D interpolation matrix
    a = np.zeros((dst, src), np.float32)
    if dst == 1 or src == 1:
        a[:, 0] = 1.0
        return jnp.asarray(a)
    for o in range(dst):
        s = o * (src - 1) / (dst - 1)
        i0 = int(np.floor(s))
        i1 = min(i0 + 1, src - 1)
        f = s - i0
        a[o, i0] += 1.0 - f
        a[o, i1] += f
    return jnp.asarray(a)


def _bilinear_resize_nchw(x, out_h, out_w):
    _, _, h, w = x.shape
    ah = _linterp_matrix(h, out_h)
    aw = _linterp_matrix(w, out_w)
    x = jnp.einsum("ph,nchw->ncpw", ah, x)
    return jnp.einsum("qw,ncpw->ncpq", aw, x)


def _gate_mlp(pooled, pf):
    # 1x1 convs on the pooled (N, C) vector: relu(.W1^T+b1) -> .W2^T+b2 -> sigmoid
    z = jnp.maximum(pooled @ pf["conv1_w"].T + pf["conv1_b"], 0.0)
    return jax.nn.sigmoid(z @ pf["conv2_w"].T + pf["conv2_b"])


# ---------------------------------------------------------------------------
# Wrappers around the Pallas kernels
# ---------------------------------------------------------------------------
def fcab_conv_pair(x_flat, w1, b1, w2, b2, H, W, compute_dtype):
    n, c, hw = x_flat.shape
    th = _pick_row_tile(H, W, c)
    nh = H // th
    lw1 = (th + 4) * W
    lw2 = (th + 2) * W
    # halo-2 row windows (zero padded at the image border), flattened per tile.
    # TODO(synk): for very large images this duplication could be replaced by
    # manual overlapping DMA (pl.ANY + make_async_copy).
    xp = jnp.pad(x_flat.reshape(n, c, H, W), ((0, 0), (0, 0), (2, 2), (0, 0)))
    wins = jnp.stack([xp[:, :, j * th: j * th + th + 4, :] for j in range(nh)],
                     axis=1)
    wins = wins.reshape(n, nh, c, lw1).astype(compute_dtype)
    rowm = _row_masks(H, W, th)                               # f32
    colm = _col_masks(th + 2, W).astype(compute_dtype)
    taps1 = _taps_from_oihw(w1).astype(compute_dtype)
    taps2 = _taps_from_oihw(w2).astype(compute_dtype)
    b1r = b1.reshape(c, 1).astype(jnp.float32)
    b2r = b2.reshape(c, 1).astype(jnp.float32)

    itemsize = jnp.dtype(compute_dtype).itemsize
    cost = pl.CostEstimate(
        flops=int(4 * n * H * W * 9 * c * c),
        transcendentals=int(2 * n * c * H * W),
        bytes_accessed=int(wins.size * itemsize + n * c * hw * 4
                           + 18 * c * c * itemsize),
    )
    return pl.pallas_call(
        functools.partial(_fcab_convpair_kernel, W=W, rows_mid=th + 2,
                          rows_out=th),
        out_shape=jax.ShapeDtypeStruct((n, c, hw), jnp.float32),
        grid=(n, nh),
        in_specs=[
            pl.BlockSpec((1, 1, c, lw1), lambda i, j: (i, j, 0, 0)),
            pl.BlockSpec((1, 1, lw2), lambda i, j: (j, 0, 0)),
            pl.BlockSpec((2, 1, lw2), lambda i, j: (0, 0, 0)),
            pl.BlockSpec((9, c, c), lambda i, j: (0, 0, 0)),
            pl.BlockSpec((c, 1), lambda i, j: (0, 0)),
            pl.BlockSpec((9, c, c), lambda i, j: (0, 0, 0)),
            pl.BlockSpec((c, 1), lambda i, j: (0, 0)),
        ],
        out_specs=pl.BlockSpec((1, c, th * W), lambda i, j: (i, 0, j)),
        scratch_shapes=[pltpu.VMEM((c, lw1 + 2), compute_dtype),
                        pltpu.VMEM((c, lw2 + 2), compute_dtype)],
        compiler_params=pltpu.CompilerParams(
            dimension_semantics=("parallel", "parallel"),
            vmem_limit_bytes=VMEM_LIMIT),
        cost_estimate=cost,
    )(wins, rowm, colm, taps1, b1r, taps2, b2r)


def fca_conv0_pool(wmag, w0, b0, sp, compute_dtype):
    # fused conv0 + ReLU + global-average-pool; conv0 activation stays in VMEM.
    n, c, _, _ = wmag.shape
    wp = jnp.pad(wmag, ((0, 0), (0, 0), (1, 1), (0, 0)))
    wp = wp.reshape(n, c, (sp + 2) * sp).astype(compute_dtype)
    taps = _taps_from_oihw(w0).astype(compute_dtype)
    colm = _col_masks(sp, sp).astype(compute_dtype)
    bias = b0.reshape(c, 1).astype(jnp.float32)
    out = pl.pallas_call(
        functools.partial(_fca_head_kernel, W=sp, rows_out=sp),
        out_shape=jax.ShapeDtypeStruct((n, c, 1), jnp.float32),
        grid=(n,),
        in_specs=[
            pl.BlockSpec((1, c, (sp + 2) * sp), lambda i: (i, 0, 0)),
            pl.BlockSpec((2, 1, sp * sp), lambda i: (0, 0, 0)),
            pl.BlockSpec((9, c, c), lambda i: (0, 0, 0)),
            pl.BlockSpec((c, 1), lambda i: (0, 0)),
        ],
        out_specs=pl.BlockSpec((1, c, 1), lambda i: (i, 0, 0)),
        scratch_shapes=[pltpu.VMEM((c, (sp + 2) * sp + 2), compute_dtype)],
        compiler_params=pltpu.CompilerParams(
            dimension_semantics=("parallel",), vmem_limit_bytes=VMEM_LIMIT),
    )(wp, colm, taps, bias)
    return out[:, :, 0]                                      # (N, C)


def apply_gate_residual(conv, g, res, extra=None):
    n, c, hw = conv.shape
    t = _pick_flat_tile(hw)
    nt = hw // t
    blk = pl.BlockSpec((1, c, t), lambda i, j: (i, 0, j))
    gblk = pl.BlockSpec((1, c, 1), lambda i, j: (i, 0, 0))
    if extra is None:
        kern, ins, specs = _scale_residual_kernel, (conv, g, res), [blk, gblk, blk]
    else:
        kern, ins, specs = (_scale_residual2_kernel, (conv, g, res, extra),
                            [blk, gblk, blk, blk])
    return pl.pallas_call(
        kern,
        out_shape=jax.ShapeDtypeStruct((n, c, hw), jnp.float32),
        grid=(n, nt),
        in_specs=specs,
        out_specs=blk,
        compiler_params=pltpu.CompilerParams(
            dimension_semantics=("parallel", "parallel"),
            vmem_limit_bytes=VMEM_LIMIT),
    )(*ins)


# ---------------------------------------------------------------------------
# JAX glue reproducing fft2d / fftshift2d exactly as written in the torch code
# ---------------------------------------------------------------------------
def fca_gate(conv_flat, pf, size_psc, H, W, compute_dtype):
    n, c, _ = conv_flat.shape
    x4 = conv_flat.reshape(n, c, H, W)
    # fft2d: torch applies fftn over ALL 4 dims of a permuted view; |fft|^gamma
    # is permutation-equivariant, so it equals |fftn(x_nchw)|^gamma in NCHW.
    # TODO(synk): FFT has no Pallas primitive; computed with jnp.fft in plain JAX.
    wmag = (jnp.abs(jnp.fft.fftn(x4)) + 1e-8) ** 0.8
    # fftshift2d shifts dims (1, 2) of the NCHW tensor, i.e. the (C, H) axes.
    wmag = jnp.roll(wmag, shift=(-(c // 2), -(H // 2)), axis=(1, 2))
    wmag = _bilinear_resize_nchw(wmag, size_psc, size_psc)
    pooled = fca_conv0_pool(wmag, pf["conv0_w"], pf["conv0_b"], size_psc,
                            compute_dtype)
    return _gate_mlp(pooled, pf)[:, :, None]                 # (N, C, 1)


def fcab_forward(x_flat, p, size_psc, H, W, compute_dtype, extra_residual=None):
    conv = fcab_conv_pair(x_flat, p["conv1_w"], p["conv1_b"],
                          p["conv2_w"], p["conv2_b"], H, W, compute_dtype)
    g = fca_gate(conv, p["fca"], size_psc, H, W, compute_dtype)
    # FCAB residual (and, for the last block, the global residual) fused here.
    return apply_gate_residual(conv, g, x_flat, extra_residual)


def fcabs_forward(x_nchw, params, size_psc, compute_dtype=jnp.bfloat16):
    n, c, h, w = x_nchw.shape
    x_flat = x_nchw.reshape(n, c, h * w).astype(jnp.float32)
    if not params:
        return (x_flat + x_flat).reshape(n, c, h, w)
    conv = x_flat
    last = len(params) - 1
    for i, p in enumerate(params):
        conv = fcab_forward(conv, p, size_psc, h, w, compute_dtype,
                            extra_residual=x_flat if i == last else None)
    return conv.reshape(n, c, h, w)


# ---------------------------------------------------------------------------
# Pure-JAX reference (lax.conv) used only for the correctness check in __main__
# ---------------------------------------------------------------------------
def _ref_conv3x3(x, w, b):
    y = lax.conv_general_dilated(x, w, (1, 1), ((1, 1), (1, 1)),
                                 dimension_numbers=("NCHW", "OIHW", "NCHW"),
                                 precision=lax.Precision.HIGHEST)
    return y + b[None, :, None, None]


def _ref_gelu(x):
    return x * 0.5 * (1.0 + jax.scipy.special.erf(x * _INV_SQRT2))


def _ref_fca(x, p, size_psc):
    n, c, h, w = x.shape
    wmag = (jnp.abs(jnp.fft.fftn(x)) + 1e-8) ** 0.8
    c2, h2 = c // 2, h // 2                                   # torch fftshift2d
    wmag = jnp.concatenate([wmag[:, c2:], wmag[:, :c2]], axis=1)
    wmag = jnp.concatenate([wmag[:, :, h2:], wmag[:, :, :h2]], axis=2)
    wmag = _bilinear_resize_nchw(wmag, size_psc, size_psc)
    f = jnp.maximum(_ref_conv3x3(wmag, p["conv0_w"], p["conv0_b"]), 0.0)
    pooled = jnp.mean(f, axis=(2, 3))
    return x * _gate_mlp(pooled, p)[:, :, None, None]


def _ref_fcab(x, p, size_psc):
    cv = _ref_gelu(_ref_conv3x3(x, p["conv1_w"], p["conv1_b"]))
    cv = _ref_gelu(_ref_conv3x3(cv, p["conv2_w"], p["conv2_b"]))
    return _ref_fca(cv, p["fca"], size_psc) + x


def fcabs_reference(x_nchw, params, size_psc):
    c = x_nchw
    for p in params:
        c = _ref_fcab(c, p, size_psc)
    return c + x_nchw


# ---------------------------------------------------------------------------
# Deterministic parameter initialization (shapes follow the torch __init__)
# ---------------------------------------------------------------------------
def init_fcabs_params(key, channel, n_rcab, reduction=16):
    cr = channel // reduction                 # torch requires channel >= reduction
    scale = 0.05
    params = []
    for _ in range(n_rcab):
        key, *ks = jax.random.split(key, 11)
        params.append({
            "conv1_w": jax.random.normal(ks[0], (channel, channel, 3, 3), jnp.float32) * scale,
            "conv1_b": jax.random.normal(ks[1], (channel,), jnp.float32) * scale,
            "conv2_w": jax.random.normal(ks[2], (channel, channel, 3, 3), jnp.float32) * scale,
            "conv2_b": jax.random.normal(ks[3], (channel,), jnp.float32) * scale,
            "fca": {
                "conv0_w": jax.random.normal(ks[4], (channel, channel, 3, 3), jnp.float32) * scale,
                "conv0_b": jax.random.normal(ks[5], (channel,), jnp.float32) * scale,
                "conv1_w": jax.random.normal(ks[6], (cr, channel), jnp.float32) * scale,
                "conv1_b": jax.random.normal(ks[7], (cr,), jnp.float32) * scale,
                "conv2_w": jax.random.normal(ks[8], (channel, cr), jnp.float32) * scale,
                "conv2_b": jax.random.normal(ks[9], (channel,), jnp.float32) * scale,
            },
        })
    return params


if __name__ == "__main__":
    N, C, H, W = 2, 16, 16, 16     # channel must be >= reduction (=16), as in torch
    SIZE_PSC = 16
    N_RCAB = 2

    key = jax.random.PRNGKey(0)
    kx, kp = jax.random.split(key)
    x = jax.random.normal(kx, (N, C, H, W), jnp.float32)
    params = init_fcabs_params(kp, C, N_RCAB, reduction=16)

    fwd_bf16 = jax.jit(functools.partial(fcabs_forward, size_psc=SIZE_PSC,
                                         compute_dtype=jnp.bfloat16))
    fwd_f32 = jax.jit(functools.partial(fcabs_forward, size_psc=SIZE_PSC,
                                        compute_dtype=jnp.float32))
    ref_fn = jax.jit(functools.partial(fcabs_reference, size_psc=SIZE_PSC))

    out = jax.block_until_ready(fwd_bf16(x, params))
    assert out.shape == (N, C, H, W) and out.dtype == jnp.float32
    assert bool(jnp.all(jnp.isfinite(out)))

    ref = jax.block_until_ready(ref_fn(x, params))
    out32 = jax.block_until_ready(fwd_f32(x, params))
    err32 = float(jnp.max(jnp.abs(out32 - ref)))
    errbf = float(jnp.max(jnp.abs(out - ref)))
    assert err32 < 5e-2, f"f32 kernel path mismatch vs reference: {err32}"
    assert errbf < 2e-1, f"bf16 kernel path mismatch vs reference: {errbf}"
    print("KERNEL_OK")
</pallas_src>

<mosaic_0001>
module attributes {stable_mosaic.version = 11 : i64} {
  func.func @_fcab_convpair_kernel(%arg0: i32, %arg1: i32, %arg2: memref<1x1x16x192xbf16, #tpu.memory_space<vmem>>, %arg3: memref<1x1x160xf32, #tpu.memory_space<vmem>>, %arg4: memref<2x1x160xbf16, #tpu.memory_space<vmem>>, %arg5: memref<9x16x16xbf16, #tpu.memory_space<vmem>>, %arg6: memref<16x1xf32, #tpu.memory_space<vmem>>, %arg7: memref<9x16x16xbf16, #tpu.memory_space<vmem>>, %arg8: memref<16x1xf32, #tpu.memory_space<vmem>>, %arg9: memref<1x16x128xf32, #tpu.memory_space<vmem>>, %arg10: memref<16x194xbf16, #tpu.memory_space<vmem>>, %arg11: memref<16x162xbf16, #tpu.memory_space<vmem>>) attributes {dimension_semantics = [#tpu.dimension_semantics<parallel>, #tpu.dimension_semantics<parallel>], iteration_bounds = array<i64: 2, 2>, scalar_prefetch = 0 : i64, scratch_operands = 2 : i64, tpu.core_type = #tpu.core_type<tc>, window_params = [{transform_indices = @transform_0, window_bounds = array<i64: 1, 1, 16, 192>}, {transform_indices = @transform_1, window_bounds = array<i64: 1, 1, 160>}, {pipeline_mode = #tpu.pipeline_mode<synchronous>, transform_indices = @transform_2, window_bounds = array<i64: 2, 1, 160>}, {pipeline_mode = #tpu.pipeline_mode<synchronous>, transform_indices = @transform_3, window_bounds = array<i64: 9, 16, 16>}, {pipeline_mode = #tpu.pipeline_mode<synchronous>, transform_indices = @transform_4, window_bounds = array<i64: 16, 1>}, {pipeline_mode = #tpu.pipeline_mode<synchronous>, transform_indices = @transform_5, window_bounds = array<i64: 9, 16, 16>}, {pipeline_mode = #tpu.pipeline_mode<synchronous>, transform_indices = @transform_6, window_bounds = array<i64: 16, 1>}, {transform_indices = @transform_7, window_bounds = array<i64: 1, 16, 128>}]} {
    %c0 = arith.constant 0 : index
    %c0_0 = arith.constant 0 : index
    %c0_1 = arith.constant 0 : index
    %0 = vector.load %arg4[%c0, %c0_0, %c0_1] : memref<2x1x160xbf16, #tpu.memory_space<vmem>>, vector<1x1x160xbf16>
    %1 = vector.shape_cast %0 : vector<1x1x160xbf16> to vector<1x160xbf16>
    %c1 = arith.constant 1 : index
    %c0_2 = arith.constant 0 : index
    %c0_3 = arith.constant 0 : index
    %2 = vector.load %arg4[%c1, %c0_2, %c0_3] : memref<2x1x160xbf16, #tpu.memory_space<vmem>>, vector<1x1x160xbf16>
    %3 = vector.shape_cast %2 : vector<1x1x160xbf16> to vector<1x160xbf16>
    %c0_4 = arith.constant 0 : index
    %c0_5 = arith.constant 0 : index
    %c0_6 = arith.constant 0 : index
    %c0_7 = arith.constant 0 : index
    %4 = vector.load %arg2[%c0_4, %c0_5, %c0_6, %c0_7] : memref<1x1x16x192xbf16, #tpu.memory_space<vmem>>, vector<1x1x16x192xbf16>
    %5 = vector.shape_cast %4 : vector<1x1x16x192xbf16> to vector<16x192xbf16>
    %cst = arith.constant 0.000000e+00 : bf16
    %6 = vector.broadcast %cst : bf16 to vector<16x194xbf16>
    %c0_8 = arith.constant 0 : index
    %c0_9 = arith.constant 0 : index
    %7 = vector.load %arg10[%c0_8, %c0_9] : memref<16x194xbf16, #tpu.memory_space<vmem>>, vector<16x194xbf16>
    tpu.vector_store %arg10[%c0_8, %c0_9], %6 {strides = array<i32>} : memref<16x194xbf16, #tpu.memory_space<vmem>>, vector<16x194xbf16>,
    %c0_10 = arith.constant 0 : index
    %c1_11 = arith.constant 1 : index
    %8 = vector.load %arg10[%c0_10, %c1_11] : memref<16x194xbf16, #tpu.memory_space<vmem>>, vector<16x192xbf16>
    tpu.vector_store %arg10[%c0_10, %c1_11], %5 {strides = array<i32>} : memref<16x194xbf16, #tpu.memory_space<vmem>>, vector<16x192xbf16>,
    %cst_12 = arith.constant 0.000000e+00 : f32
    %9 = vector.broadcast %cst_12 : f32 to vector<16x160xf32>
    %c0_13 = arith.constant 0 : index
    %c0_14 = arith.constant 0 : index
    %10 = vector.load %arg10[%c0_13, %c0_14] : memref<16x194xbf16, #tpu.memory_space<vmem>>, vector<16x160xbf16>
    %11 = vector.broadcast %1 : vector<1x160xbf16> to vector<16x160xbf16>
    %12 = arith.mulf %10, %11 : vector<16x160xbf16>
    %c0_15 = arith.constant 0 : index
    %c0_16 = arith.constant 0 : index
    %c0_17 = arith.constant 0 : index
    %13 = vector.load %arg5[%c0_15, %c0_16, %c0_17] : memref<9x16x16xbf16, #tpu.memory_space<vmem>>, vector<1x16x16xbf16>
    %14 = vector.shape_cast %13 : vector<1x16x16xbf16> to vector<16x16xbf16>
    %cst_18 = arith.constant dense<0.000000e+00> : vector<16x160xf32>
    %15 = tpu.matmul %14, %12, %cst_18 {dimension_numbers = #tpu.dot_dimension_numbers<[1], [0], [0], [1], [0, 0, 1, 1], [], []>} : vector<16x16xbf16>, vector<16x160xbf16>, vector<16x160xf32> -> vector<16x160xf32>
    %16 = arith.addf %9, %15 : vector<16x160xf32>
    %c0_19 = arith.constant 0 : index
    %c1_20 = arith.constant 1 : index
    %17 = vector.load %arg10[%c0_19, %c1_20] : memref<16x194xbf16, #tpu.memory_space<vmem>>, vector<16x160xbf16>
    %c1_21 = arith.constant 1 : index
    %c0_22 = arith.constant 0 : index
    %c0_23 = arith.constant 0 : index
    %18 = vector.load %arg5[%c1_21, %c0_22, %c0_23] : memref<9x16x16xbf16, #tpu.memory_space<vmem>>, vector<1x16x16xbf16>
    %19 = vector.shape_cast %18 : vector<1x16x16xbf16> to vector<16x16xbf16>
    %cst_24 = arith.constant dense<0.000000e+00> : vector<16x160xf32>
    %20 = tpu.matmul %19, %17, %cst_24 {dimension_numbers = #tpu.dot_dimension_numbers<[1], [0], [0], [1], [0, 0, 1, 1], [], []>} : vector<16x16xbf16>, vector<16x160xbf16>, vector<16x160xf32> -> vector<16x160xf32>
    %21 = arith.addf %16, %20 : vector<16x160xf32>
    %c0_25 = arith.constant 0 : index
    %c2 = arith.constant 2 : index
    %22 = vector.load %arg10[%c0_25, %c2] : memref<16x194xbf16, #tpu.memory_space<vmem>>, vector<16x160xbf16>
    %23 = vector.broadcast %3 : vector<1x160xbf16> to vector<16x160xbf16>
    %24 = arith.mulf %22, %23 : vector<16x160xbf16>
    %c2_26 = arith.constant 2 : index
    %c0_27 = arith.constant 0 : index
    %c0_28 = arith.constant 0 : index
    %25 = vector.load %arg5[%c2_26, %c0_27, %c0_28] : memref<9x16x16xbf16, #tpu.memory_space<vmem>>, vector<1x16x16xbf16>
    %26 = vector.shape_cast %25 : vector<1x16x16xbf16> to vector<16x16xbf16>
    %cst_29 = arith.constant dense<0.000000e+00> : vector<16x160xf32>
    %27 = tpu.matmul %26, %24, %cst_29 {dimension_numbers = #tpu.dot_dimension_numbers<[1], [0], [0], [1], [0, 0, 1, 1], [], []>} : vector<16x16xbf16>, vector<16x160xbf16>, vector<16x160xf32> -> vector<16x160xf32>
    %28 = arith.addf %21, %27 : vector<16x160xf32>
    %c0_30 = arith.constant 0 : index
    %c16 = arith.constant 16 : index
    %29 = vector.load %arg10[%c0_30, %c16] : memref<16x194xbf16, #tpu.memory_space<vmem>>, vector<16x160xbf16>
    %30 = vector.broadcast %1 : vector<1x160xbf16> to vector<16x160xbf16>
    %31 = arith.mulf %29, %30 : vector<16x160xbf16>
    %c3 = arith.constant 3 : index
    %c0_31 = arith.constant 0 : index
    %c0_32 = arith.constant 0 : index
    %32 = vector.load %arg5[%c3, %c0_31, %c0_32] : memref<9x16x16xbf16, #tpu.memory_space<vmem>>, vector<1x16x16xbf16>
    %33 = vector.shape_cast %32 : vector<1x16x16xbf16> to vector<16x16xbf16>
    %cst_33 = arith.constant dense<0.000000e+00> : vector<16x160xf32>
    %34 = tpu.matmul %33, %31, %cst_33 {dimension_numbers = #tpu.dot_dimension_numbers<[1], [0], [0], [1], [0, 0, 1, 1], [], []>} : vector<16x16xbf16>, vector<16x160xbf16>, vector<16x160xf32> -> vector<16x160xf32>
    %35 = arith.addf %28, %34 : vector<16x160xf32>
    %c0_34 = arith.constant 0 : index
    %c17 = arith.constant 17 : index
    %36 = vector.load %arg10[%c0_34, %c17] : memref<16x194xbf16, #tpu.memory_space<vmem>>, vector<16x160xbf16>
    %c4 = arith.constant 4 : index
    %c0_35 = arith.constant 0 : index
    %c0_36 = arith.constant 0 : index
    %37 = vector.load %arg5[%c4, %c0_35, %c0_36] : memref<9x16x16xbf16, #tpu.memory_space<vmem>>, vector<1x16x16xbf16>
    %38 = vector.shape_cast %37 : vector<1x16x16xbf16> to vector<16x16xbf16>
    %cst_37 = arith.constant dense<0.000000e+00> : vector<16x160xf32>
    %39 = tpu.matmul %38, %36, %cst_37 {dimension_numbers = #tpu.dot_dimension_numbers<[1], [0], [0], [1], [0, 0, 1, 1], [], []>} : vector<16x16xbf16>, vector<16x160xbf16>, vector<16x160xf32> -> vector<16x160xf32>
    %40 = arith.addf %35, %39 : vector<16x160xf32>
    %c0_38 = arith.constant 0 : index
    %c18 = arith.constant 18 : index
    %41 = vector.load %arg10[%c0_38, %c18] : memref<16x194xbf16, #tpu.memory_space<vmem>>, vector<16x160xbf16>
    %42 = vector.broadcast %3 : vector<1x160xbf16> to vector<16x160xbf16>
    %43 = arith.mulf %41, %42 : vector<16x160xbf16>
    %c5 = arith.constant 5 : index
    %c0_39 = arith.constant 0 : index
    %c0_40 = arith.constant 0 : index
    %44 = vector.load %arg5[%c5, %c0_39, %c0_40] : memref<9x16x16xbf16, #tpu.memory_space<vmem>>, vector<1x16x16xbf16>
    %45 = vector.shape_cast %44 : vector<1x16x16xbf16> to vector<16x16xbf16>
    %cst_41 = arith.constant dense<0.000000e+00> : vector<16x160xf32>
    %46 = tpu.matmul %45, %43, %cst_41 {dimension_numbers = #tpu.dot_dimension_numbers<[1], [0], [0], [1], [0, 0, 1, 1], [], []>} : vector<16x16xbf16>, vector<16x160xbf16>, vector<16x160xf32> -> vector<16x160xf32>
    %47 = arith.addf %40, %46 : vector<16x160xf32>
    %c0_42 = arith.constant 0 : index
    %c32 = arith.constant 32 : index
    %48 = vector.load %arg10[%c0_42, %c32] : memref<16x194xbf16, #tpu.memory_space<vmem>>, vector<16x160xbf16>
    %49 = vector.broadcast %1 : vector<1x160xbf16> to vector<16x160xbf16>
    %50 = arith.mulf %48, %49 : vector<16x160xbf16>
    %c6 = arith.constant 6 : index
    %c0_43 = arith.constant 0 : index
    %c0_44 = arith.constant 0 : index
    %51 = vector.load %arg5[%c6, %c0_43, %c0_44] : memref<9x16x16xbf16, #tpu.memory_space<vmem>>, vector<1x16x16xbf16>
    %52 = vector.shape_cast %51 : vector<1x16x16xbf16> to vector<16x16xbf16>
    %cst_45 = arith.constant dense<0.000000e+00> : vector<16x160xf32>
    %53 = tpu.matmul %52, %50, %cst_45 {dimension_numbers = #tpu.dot_dimension_numbers<[1], [0], [0], [1], [0, 0, 1, 1], [], []>} : vector<16x16xbf16>, vector<16x160xbf16>, vector<16x160xf32> -> vector<16x160xf32>
    %54 = arith.addf %47, %53 : vector<16x160xf32>
    %c0_46 = arith.constant 0 : index
    %c33 = arith.constant 33 : index
    %55 = vector.load %arg10[%c0_46, %c33] : memref<16x194xbf16, #tpu.memory_space<vmem>>, vector<16x160xbf16>
    %c7 = arith.constant 7 : index
    %c0_47 = arith.constant 0 : index
    %c0_48 = arith.constant 0 : index
    %56 = vector.load %arg5[%c7, %c0_47, %c0_48] : memref<9x16x16xbf16, #tpu.memory_space<vmem>>, vector<1x16x16xbf16>
    %57 = vector.shape_cast %56 : vector<1x16x16xbf16> to vector<16x16xbf16>
    %cst_49 = arith.constant dense<0.000000e+00> : vector<16x160xf32>
    %58 = tpu.matmul %57, %55, %cst_49 {dimension_numbers = #tpu.dot_dimension_numbers<[1], [0], [0], [1], [0, 0, 1, 1], [], []>} : vector<16x16xbf16>, vector<16x160xbf16>, vector<16x160xf32> -> vector<16x160xf32>
    %59 = arith.addf %54, %58 : vector<16x160xf32>
    %c0_50 = arith.constant 0 : index
    %c34 = arith.constant 34 : index
    %60 = vector.load %arg10[%c0_50, %c34] : memref<16x194xbf16, #tpu.memory_space<vmem>>, vector<16x160xbf16>
    %61 = vector.broadcast %3 : vector<1x160xbf16> to vector<16x160xbf16>
    %62 = arith.mulf %60, %61 : vector<16x160xbf16>
    %c8 = arith.constant 8 : index
    %c0_51 = arith.constant 0 : index
    %c0_52 = arith.constant 0 : index
    %63 = vector.load %arg5[%c8, %c0_51, %c0_52] : memref<9x16x16xbf16, #tpu.memory_space<vmem>>, vector<1x16x16xbf16>
    %64 = vector.shape_cast %63 : vector<1x16x16xbf16> to vector<16x16xbf16>
    %cst_53 = arith.constant dense<0.000000e+00> : vector<16x160xf32>
    %65 = tpu.matmul %64, %62, %cst_53 {dimension_numbers = #tpu.dot_dimension_numbers<[1], [0], [0], [1], [0, 0, 1, 1], [], []>} : vector<16x16xbf16>, vector<16x160xbf16>, vector<16x160xf32> -> vector<16x160xf32>
    %66 = arith.addf %59, %65 : vector<16x160xf32>
    %c0_54 = arith.constant 0 : index
    %c0_55 = arith.constant 0 : index
    %67 = vector.load %arg6[%c0_54, %c0_55] : memref<16x1xf32, #tpu.memory_space<vmem>>, vector<16x1xf32>
    %68 = vector.broadcast %67 : vector<16x1xf32> to vector<16x160xf32>
    %69 = arith.addf %66, %68 : vector<16x160xf32>
    %cst_56 = arith.constant 5.000000e-01 : f32
    %70 = vector.broadcast %cst_56 : f32 to vector<16x160xf32>
    %71 = arith.mulf %69, %70 : vector<16x160xf32>
    %cst_57 = arith.constant 0.707106769 : f32
    %72 = vector.broadcast %cst_57 : f32 to vector<16x160xf32>
    %73 = arith.mulf %69, %72 : vector<16x160xf32>
    %74 = math.absf %73 : vector<16x160xf32>
    %cst_58 = arith.constant 0.327591091 : f32
    %75 = vector.broadcast %cst_58 : f32 to vector<16x160xf32>
    %76 = arith.mulf %75, %74 : vector<16x160xf32>
    %cst_59 = arith.constant 1.000000e+00 : f32
    %77 = vector.broadcast %cst_59 : f32 to vector<16x160xf32>
    %78 = arith.addf %77, %76 : vector<16x160xf32>
    %cst_60 = arith.constant 1.000000e+00 : f32
    %79 = vector.broadcast %cst_60 : f32 to vector<16x160xf32>
    %80 = arith.divf %79, %78 : vector<16x160xf32>
    %cst_61 = arith.constant 1.06140542 : f32
    %81 = vector.broadcast %cst_61 : f32 to vector<16x160xf32>
    %82 = arith.mulf %81, %80 : vector<16x160xf32>
    %cst_62 = arith.constant -1.45315206 : f32
    %83 = vector.broadcast %cst_62 : f32 to vector<16x160xf32>
    %84 = arith.addf %82, %83 : vector<16x160xf32>
    %85 = arith.mulf %84, %80 : vector<16x160xf32>
    %cst_63 = arith.constant 1.42141378 : f32
    %86 = vector.broadcast %cst_63 : f32 to vector<16x160xf32>
    %87 = arith.addf %85, %86 : vector<16x160xf32>
    %88 = arith.mulf %87, %80 : vector<16x160xf32>
    %cst_64 = arith.constant -0.284496725 : f32
    %89 = vector.broadcast %cst_64 : f32 to vector<16x160xf32>
    %90 = arith.addf %88, %89 : vector<16x160xf32>
    %91 = arith.mulf %90, %80 : vector<16x160xf32>
    %cst_65 = arith.constant 0.254829586 : f32
    %92 = vector.broadcast %cst_65 : f32 to vector<16x160xf32>
    %93 = arith.addf %91, %92 : vector<16x160xf32>
    %94 = arith.mulf %93, %80 : vector<16x160xf32>
    %cst_66 = arith.constant 0.000000e+00 : f32
    %95 = vector.broadcast %cst_66 : f32 to vector<16x160xf32>
    %96 = arith.subf %95, %74 : vector<16x160xf32>
    %97 = arith.mulf %96, %74 : vector<16x160xf32>
    %98 = math.exp %97 : vector<16x160xf32>
    %99 = arith.mulf %94, %98 : vector<16x160xf32>
    %cst_67 = arith.constant 1.000000e+00 : f32
    %100 = vector.broadcast %cst_67 : f32 to vector<16x160xf32>
    %101 = arith.subf %100, %99 : vector<16x160xf32>
    %cst_68 = arith.constant 0.000000e+00 : f32
    %102 = vector.broadcast %cst_68 : f32 to vector<16x160xf32>
    %103 = arith.cmpf olt, %73, %102 : vector<16x160xf32>
    %cst_69 = arith.constant 0.000000e+00 : f32
    %104 = vector.broadcast %cst_69 : f32 to vector<16x160xf32>
    %105 = arith.subf %104, %101 : vector<16x160xf32>
    %106 = arith.select %103, %105, %101 : vector<16x160xi1>, vector<16x160xf32>
    %cst_70 = arith.constant 1.000000e+00 : f32
    %107 = vector.broadcast %cst_70 : f32 to vector<16x160xf32>
    %108 = arith.addf %107, %106 : vector<16x160xf32>
    %109 = arith.mulf %71, %108 : vector<16x160xf32>
    %c0_71 = arith.constant 0 : index
    %c0_72 = arith.constant 0 : index
    %c0_73 = arith.constant 0 : index
    %110 = vector.load %arg3[%c0_71, %c0_72, %c0_73] : memref<1x1x160xf32, #tpu.memory_space<vmem>>, vector<1x1x160xf32>
    %111 = vector.shape_cast %110 : vector<1x1x160xf32> to vector<1x160xf32>
    %112 = vector.broadcast %111 : vector<1x160xf32> to vector<16x160xf32>
    %113 = arith.mulf %109, %112 : vector<16x160xf32>
    %cst_74 = arith.constant 0.000000e+00 : bf16
    %114 = vector.broadcast %cst_74 : bf16 to vector<16x162xbf16>
    %c0_75 = arith.constant 0 : index
    %c0_76 = arith.constant 0 : index
    %115 = vector.load %arg11[%c0_75, %c0_76] : memref<16x162xbf16, #tpu.memory_space<vmem>>, vector<16x162xbf16>
    tpu.vector_store %arg11[%c0_75, %c0_76], %114 {strides = array<i32>} : memref<16x162xbf16, #tpu.memory_space<vmem>>, vector<16x162xbf16>,
    %116 = arith.truncf %113 : vector<16x160xf32> to vector<16x160xbf16>
    %c0_77 = arith.constant 0 : index
    %c1_78 = arith.constant 1 : index
    %117 = vector.load %arg11[%c0_77, %c1_78] : memref<16x162xbf16, #tpu.memory_space<vmem>>, vector<16x160xbf16>
    tpu.vector_store %arg11[%c0_77, %c1_78], %116 {strides = array<i32>} : memref<16x162xbf16, #tpu.memory_space<vmem>>, vector<16x160xbf16>,
    %118 = vector.extract_strided_slice %1 {offsets = [0, 0], sizes = [1, 128], strides = [1, 1]} : vector<1x160xbf16> to vector<1x128xbf16>
    %119 = vector.extract_strided_slice %3 {offsets = [0, 0], sizes = [1, 128], strides = [1, 1]} : vector<1x160xbf16> to vector<1x128xbf16>
    %cst_79 = arith.constant 0.000000e+00 : f32
    %120 = vector.broadcast %cst_79 : f32 to vector<16x128xf32>
    %c0_80 = arith.constant 0 : index
    %c0_81 = arith.constant 0 : index
    %121 = vector.load %arg11[%c0_80, %c0_81] : memref<16x162xbf16, #tpu.memory_space<vmem>>, vector<16x128xbf16>
    %122 = vector.broadcast %118 : vector<1x128xbf16> to vector<16x128xbf16>
    %123 = arith.mulf %121, %122 : vector<16x128xbf16>
    %c0_82 = arith.constant 0 : index
    %c0_83 = arith.constant 0 : index
    %c0_84 = arith.constant 0 : index
    %124 = vector.load %arg7[%c0_82, %c0_83, %c0_84] : memref<9x16x16xbf16, #tpu.memory_space<vmem>>, vector<1x16x16xbf16>
    %125 = vector.shape_cast %124 : vector<1x16x16xbf16> to vector<16x16xbf16>
    %cst_85 = arith.constant dense<0.000000e+00> : vector<16x128xf32>
    %126 = tpu.matmul %125, %123, %cst_85 {dimension_numbers = #tpu.dot_dimension_numbers<[1], [0], [0], [1], [0, 0, 1, 1], [], []>} : vector<16x16xbf16>, vector<16x128xbf16>, vector<16x128xf32> -> vector<16x128xf32>
    %127 = arith.addf %120, %126 : vector<16x128xf32>
    %c0_86 = arith.constant 0 : index
    %c1_87 = arith.constant 1 : index
    %128 = vector.load %arg11[%c0_86, %c1_87] : memref<16x162xbf16, #tpu.memory_space<vmem>>, vector<16x128xbf16>
    %c1_88 = arith.constant 1 : index
    %c0_89 = arith.constant 0 : index
    %c0_90 = arith.constant 0 : index
    %129 = vector.load %arg7[%c1_88, %c0_89, %c0_90] : memref<9x16x16xbf16, #tpu.memory_space<vmem>>, vector<1x16x16xbf16>
    %130 = vector.shape_cast %129 : vector<1x16x16xbf16> to vector<16x16xbf16>
    %cst_91 = arith.constant dense<0.000000e+00> : vector<16x128xf32>
    %131 = tpu.matmul %130, %128, %cst_91 {dimension_numbers = #tpu.dot_dimension_numbers<[1], [0], [0], [1], [0, 0, 1, 1], [], []>} : vector<16x16xbf16>, vector<16x128xbf16>, vector<16x128xf32> -> vector<16x128xf32>
    %132 = arith.addf %127, %131 : vector<16x128xf32>
    %c0_92 = arith.constant 0 : index
    %c2_93 = arith.constant 2 : index
    %133 = vector.load %arg11[%c0_92, %c2_93] : memref<16x162xbf16, #tpu.memory_space<vmem>>, vector<16x128xbf16>
    %134 = vector.broadcast %119 : vector<1x128xbf16> to vector<16x128xbf16>
    %135 = arith.mulf %133, %134 : vector<16x128xbf16>
    %c2_94 = arith.constant 2 : index
    %c0_95 = arith.constant 0 : index
    %c0_96 = arith.constant 0 : index
    %136 = vector.load %arg7[%c2_94, %c0_95, %c0_96] : memref<9x16x16xbf16, #tpu.memory_space<vmem>>, vector<1x16x16xbf16>
    %137 = vector.shape_cast %136 : vector<1x16x16xbf16> to vector<16x16xbf16>
    %cst_97 = arith.constant dense<0.000000e+00> : vector<16x128xf32>
    %138 = tpu.matmul %137, %135, %cst_97 {dimension_numbers = #tpu.dot_dimension_numbers<[1], [0], [0], [1], [0, 0, 1, 1], [], []>} : vector<16x16xbf16>, vector<16x128xbf16>, vector<16x128xf32> -> vector<16x128xf32>
    %139 = arith.addf %132, %138 : vector<16x128xf32>
    %c0_98 = arith.constant 0 : index
    %c16_99 = arith.constant 16 : index
    %140 = vector.load %arg11[%c0_98, %c16_99] : memref<16x162xbf16, #tpu.memory_space<vmem>>, vector<16x128xbf16>
    %141 = vector.broadcast %118 : vector<1x128xbf16> to vector<16x128xbf16>
    %142 = arith.mulf %140, %141 : vector<16x128xbf16>
    %c3_100 = arith.constant 3 : index
    %c0_101 = arith.constant 0 : index
    %c0_102 = arith.constant 0 : index
    %143 = vector.load %arg7[%c3_100, %c0_101, %c0_102] : memref<9x16x16xbf16, #tpu.memory_space<vmem>>, vector<1x16x16xbf16>
    %144 = vector.shape_cast %143 : vector<1x16x16xbf16> to vector<16x16xbf16>
    %cst_103 = arith.constant dense<0.000000e+00> : vector<16x128xf32>
    %145 = tpu.matmul %144, %142, %cst_103 {dimension_numbers = #tpu.dot_dimension_numbers<[1], [0], [0], [1], [0, 0, 1, 1], [], []>} : vector<16x16xbf16>, vector<16x128xbf16>, vector<16x128xf32> -> vector<16x128xf32>
    %146 = arith.addf %139, %145 : vector<16x128xf32>
    %c0_104 = arith.constant 0 : index
    %c17_105 = arith.constant 17 : index
    %147 = vector.load %arg11[%c0_104, %c17_105] : memref<16x162xbf16, #tpu.memory_space<vmem>>, vector<16x128xbf16>
    %c4_106 = arith.constant 4 : index
    %c0_107 = arith.constant 0 : index
    %c0_108 = arith.constant 0 : index
    %148 = vector.load %arg7[%c4_106, %c0_107, %c0_108] : memref<9x16x16xbf16, #tpu.memory_space<vmem>>, vector<1x16x16xbf16>
    %149 = vector.shape_cast %148 : vector<1x16x16xbf16> to vector<16x16xbf16>
    %cst_109 = arith.constant dense<0.000000e+00> : vector<16x128xf32>
    %150 = tpu.matmul %149, %147, %cst_109 {dimension_numbers = #tpu.dot_dimension_numbers<[1], [0], [0], [1], [0, 0, 1, 1], [], []>} : vector<16x16xbf16>, vector<16x128xbf16>, vector<16x128xf32> -> vector<16x128xf32>
    %151 = arith.addf %146, %150 : vector<16x128xf32>
    %c0_110 = arith.constant 0 : index
    %c18_111 = arith.constant 18 : index
    %152 = vector.load %arg11[%c0_110, %c18_111] : memref<16x162xbf16, #tpu.memory_space<vmem>>, vector<16x128xbf16>
    %153 = vector.broadcast %119 : vector<1x128xbf16> to vector<16x128xbf16>
    %154 = arith.mulf %152, %153 : vector<16x128xbf16>
    %c5_112 = arith.constant 5 : index
    %c0_113 = arith.constant 0 : index
    %c0_114 = arith.constant 0 : index
    %155 = vector.load %arg7[%c5_112, %c0_113, %c0_114] : memref<9x16x16xbf16, #tpu.memory_space<vmem>>, vector<1x16x16xbf16>
    %156 = vector.shape_cast %155 : vector<1x16x16xbf16> to vector<16x16xbf16>
    %cst_115 = arith.constant dense<0.000000e+00> : vector<16x128xf32>
    %157 = tpu.matmul %156, %154, %cst_115 {dimension_numbers = #tpu.dot_dimension_numbers<[1], [0], [0], [1], [0, 0, 1, 1], [], []>} : vector<16x16xbf16>, vector<16x128xbf16>, vector<16x128xf32> -> vector<16x128xf32>
    %158 = arith.addf %151, %157 : vector<16x128xf32>
    %c0_116 = arith.constant 0 : index
    %c32_117 = arith.constant 32 : index
    %159 = vector.load %arg11[%c0_116, %c32_117] : memref<16x162xbf16, #tpu.memory_space<vmem>>, vector<16x128xbf16>
    %160 = vector.broadcast %118 : vector<1x128xbf16> to vector<16x128xbf16>
    %161 = arith.mulf %159, %160 : vector<16x128xbf16>
    %c6_118 = arith.constant 6 : index
    %c0_119 = arith.constant 0 : index
    %c0_120 = arith.constant 0 : index
    %162 = vector.load %arg7[%c6_118, %c0_119, %c0_120] : memref<9x16x16xbf16, #tpu.memory_space<vmem>>, vector<1x16x16xbf16>
    %163 = vector.shape_cast %162 : vector<1x16x16xbf16> to vector<16x16xbf16>
    %cst_121 = arith.constant dense<0.000000e+00> : vector<16x128xf32>
    %164 = tpu.matmul %163, %161, %cst_121 {dimension_numbers = #tpu.dot_dimension_numbers<[1], [0], [0], [1], [0, 0, 1, 1], [], []>} : vector<16x16xbf16>, vector<16x128xbf16>, vector<16x128xf32> -> vector<16x128xf32>
    %165 = arith.addf %158, %164 : vector<16x128xf32>
    %c0_122 = arith.constant 0 : index
    %c33_123 = arith.constant 33 : index
    %166 = vector.load %arg11[%c0_122, %c33_123] : memref<16x162xbf16, #tpu.memory_space<vmem>>, vector<16x128xbf16>
    %c7_124 = arith.constant 7 : index
    %c0_125 = arith.constant 0 : index
    %c0_126 = arith.constant 0 : index
    %167 = vector.load %arg7[%c7_124, %c0_125, %c0_126] : memref<9x16x16xbf16, #tpu.memory_space<vmem>>, vector<1x16x16xbf16>
    %168 = vector.shape_cast %167 : vector<1x16x16xbf16> to vector<16x16xbf16>
    %cst_127 = arith.constant dense<0.000000e+00> : vector<16x128xf32>
    %169 = tpu.matmul %168, %166, %cst_127 {dimension_numbers = #tpu.dot_dimension_numbers<[1], [0], [0], [1], [0, 0, 1, 1], [], []>} : vector<16x16xbf16>, vector<16x128xbf16>, vector<16x128xf32> -> vector<16x128xf32>
    %170 = arith.addf %165, %169 : vector<16x128xf32>
    %c0_128 = arith.constant 0 : index
    %c34_129 = arith.constant 34 : index
    %171 = vector.load %arg11[%c0_128, %c34_129] : memref<16x162xbf16, #tpu.memory_space<vmem>>, vector<16x128xbf16>
    %172 = vector.broadcast %119 : vector<1x128xbf16> to vector<16x128xbf16>
    %173 = arith.mulf %171, %172 : vector<16x128xbf16>
    %c8_130 = arith.constant 8 : index
    %c0_131 = arith.constant 0 : index
    %c0_132 = arith.constant 0 : index
    %174 = vector.load %arg7[%c8_130, %c0_131, %c0_132] : memref<9x16x16xbf16, #tpu.memory_space<vmem>>, vector<1x16x16xbf16>
    %175 = vector.shape_cast %174 : vector<1x16x16xbf16> to vector<16x16xbf16>
    %cst_133 = arith.constant dense<0.000000e+00> : vector<16x128xf32>
    %176 = tpu.matmul %175, %173, %cst_133 {dimension_numbers = #tpu.dot_dimension_numbers<[1], [0], [0], [1], [0, 0, 1, 1], [], []>} : vector<16x16xbf16>, vector<16x128xbf16>, vector<16x128xf32> -> vector<16x128xf32>
    %177 = arith.addf %170, %176 : vector<16x128xf32>
    %c0_134 = arith.constant 0 : index
    %c0_135 = arith.constant 0 : index
    %178 = vector.load %arg8[%c0_134, %c0_135] : memref<16x1xf32, #tpu.memory_space<vmem>>, vector<16x1xf32>
    %179 = vector.broadcast %178 : vector<16x1xf32> to vector<16x128xf32>
    %180 = arith.addf %177, %179 : vector<16x128xf32>
    %cst_136 = arith.constant 5.000000e-01 : f32
    %181 = vector.broadcast %cst_136 : f32 to vector<16x128xf32>
    %182 = arith.mulf %180, %181 : vector<16x128xf32>
    %cst_137 = arith.constant 0.707106769 : f32
    %183 = vector.broadcast %cst_137 : f32 to vector<16x128xf32>
    %184 = arith.mulf %180, %183 : vector<16x128xf32>
    %185 = math.absf %184 : vector<16x128xf32>
    %cst_138 = arith.constant 0.327591091 : f32
    %186 = vector.broadcast %cst_138 : f32 to vector<16x128xf32>
    %187 = arith.mulf %186, %185 : vector<16x128xf32>
    %cst_139 = arith.constant 1.000000e+00 : f32
    %188 = vector.broadcast %cst_139 : f32 to vector<16x128xf32>
    %189 = arith.addf %188, %187 : vector<16x128xf32>
    %cst_140 = arith.constant 1.000000e+00 : f32
    %190 = vector.broadcast %cst_140 : f32 to vector<16x128xf32>
    %191 = arith.divf %190, %189 : vector<16x128xf32>
    %cst_141 = arith.constant 1.06140542 : f32
    %192 = vector.broadcast %cst_141 : f32 to vector<16x128xf32>
    %193 = arith.mulf %192, %191 : vector<16x128xf32>
    %cst_142 = arith.constant -1.45315206 : f32
    %194 = vector.broadcast %cst_142 : f32 to vector<16x128xf32>
    %195 = arith.addf %193, %194 : vector<16x128xf32>
    %196 = arith.mulf %195, %191 : vector<16x128xf32>
    %cst_143 = arith.constant 1.42141378 : f32
    %197 = vector.broadcast %cst_143 : f32 to vector<16x128xf32>
    %198 = arith.addf %196, %197 : vector<16x128xf32>
    %199 = arith.mulf %198, %191 : vector<16x128xf32>
    %cst_144 = arith.constant -0.284496725 : f32
    %200 = vector.broadcast %cst_144 : f32 to vector<16x128xf32>
    %201 = arith.addf %199, %200 : vector<16x128xf32>
    %202 = arith.mulf %201, %191 : vector<16x128xf32>
    %cst_145 = arith.constant 0.254829586 : f32
    %203 = vector.broadcast %cst_145 : f32 to vector<16x128xf32>
    %204 = arith.addf %202, %203 : vector<16x128xf32>
    %205 = arith.mulf %204, %191 : vector<16x128xf32>
    %cst_146 = arith.constant 0.000000e+00 : f32
    %206 = vector.broadcast %cst_146 : f32 to vector<16x128xf32>
    %207 = arith.subf %206, %185 : vector<16x128xf32>
    %208 = arith.mulf %207, %185 : vector<16x128xf32>
    %209 = math.exp %208 : vector<16x128xf32>
    %210 = arith.mulf %205, %209 : vector<16x128xf32>
    %cst_147 = arith.constant 1.000000e+00 : f32
    %211 = vector.broadcast %cst_147 : f32 to vector<16x128xf32>
    %212 = arith.subf %211, %210 : vector<16x128xf32>
    %cst_148 = arith.constant 0.000000e+00 : f32
    %213 = vector.broadcast %cst_148 : f32 to vector<16x128xf32>
    %214 = arith.cmpf olt, %184, %213 : vector<16x128xf32>
    %cst_149 = arith.constant 0.000000e+00 : f32
    %215 = vector.broadcast %cst_149 : f32 to vector<16x128xf32>
    %216 = arith.subf %215, %212 : vector<16x128xf32>
    %217 = arith.select %214, %216, %212 : vector<16x128xi1>, vector<16x128xf32>
    %cst_150 = arith.constant 1.000000e+00 : f32
    %218 = vector.broadcast %cst_150 : f32 to vector<16x128xf32>
    %219 = arith.addf %218, %217 : vector<16x128xf32>
    %220 = arith.mulf %182, %219 : vector<16x128xf32>
    %c0_151 = arith.constant 0 : index
    %c0_152 = arith.constant 0 : index
    %c0_153 = arith.constant 0 : index
    %221 = vector.load %arg9[%c0_151, %c0_152, %c0_153] : memref<1x16x128xf32, #tpu.memory_space<vmem>>, vector<1x16x128xf32>
    %222 = vector.shape_cast %221 : vector<1x16x128xf32> to vector<16x128xf32>
    %223 = vector.shape_cast %220 : vector<16x128xf32> to vector<1x16x128xf32>
    tpu.vector_store %arg9[%c0_151, %c0_152, %c0_153], %223 {strides = array<i32>} : memref<1x16x128xf32, #tpu.memory_space<vmem>>, vector<1x16x128xf32>,
    return
  }
  func.func @transform_0(%arg0: i32, %arg1: i32) -> (i32, i32, i32, i32) {
    %c0_i32 = arith.constant 0 : i32
    %c0_i32_0 = arith.constant 0 : i32
    %c0_i32_1 = arith.constant 0 : i32
    return %arg0, %arg1, %c0_i32, %c0_i32_0 : i32, i32, i32, i32
  }
  func.func @transform_1(%arg0: i32, %arg1: i32) -> (i32, i32, i32) {
    %c0_i32 = arith.constant 0 : i32
    %c0_i32_0 = arith.constant 0 : i32
    %c0_i32_1 = arith.constant 0 : i32
    return %arg1, %c0_i32, %c0_i32_0 : i32, i32, i32
  }
  func.func @transform_2(%arg0: i32, %arg1: i32) -> (i32, i32, i32) {
    %c0_i32 = arith.constant 0 : i32
    %c0_i32_0 = arith.constant 0 : i32
    %c0_i32_1 = arith.constant 0 : i32
    %c0_i32_2 = arith.constant 0 : i32
    return %c0_i32, %c0_i32_0, %c0_i32_1 : i32, i32, i32
  }
  func.func @transform_3(%arg0: i32, %arg1: i32) -> (i32, i32, i32) {
    %c0_i32 = arith.constant 0 : i32
    %c0_i32_0 = arith.constant 0 : i32
    %c0_i32_1 = arith.constant 0 : i32
    %c0_i32_2 = arith.constant 0 : i32
    return %c0_i32, %c0_i32_0, %c0_i32_1 : i32, i32, i32
  }
  func.func @transform_4(%arg0: i32, %arg1: i32) -> (i32, i32) {
    %c0_i32 = arith.constant 0 : i32
    %c0_i32_0 = arith.constant 0 : i32
    %c0_i32_1 = arith.constant 0 : i32
    return %c0_i32, %c0_i32_0 : i32, i32
  }
  func.func @transform_5(%arg0: i32, %arg1: i32) -> (i32, i32, i32) {
    %c0_i32 = arith.constant 0 : i32
    %c0_i32_0 = arith.constant 0 : i32
    %c0_i32_1 = arith.constant 0 : i32
    %c0_i32_2 = arith.constant 0 : i32
    return %c0_i32, %c0_i32_0, %c0_i32_1 : i32, i32, i32
  }
  func.func @transform_6(%arg0: i32, %arg1: i32) -> (i32, i32) {
    %c0_i32 = arith.constant 0 : i32
    %c0_i32_0 = arith.constant 0 : i32
    %c0_i32_1 = arith.constant 0 : i32
    return %c0_i32, %c0_i32_0 : i32, i32
  }
  func.func @transform_7(%arg0: i32, %arg1: i32) -> (i32, i32, i32) {
    %c0_i32 = arith.constant 0 : i32
    %c0_i32_0 = arith.constant 0 : i32
    return %arg0, %c0_i32, %arg1 : i32, i32, i32
  }
}

module attributes {stable_mosaic.version = 11 : i64} {
  func.func @_fca_head_kernel(%arg0: i32, %arg1: memref<1x16x288xbf16, #tpu.memory_space<vmem>>, %arg2: memref<2x1x256xbf16, #tpu.memory_space<vmem>>, %arg3: memref<9x16x16xbf16, #tpu.memory_space<vmem>>, %arg4: memref<16x1xf32, #tpu.memory_space<vmem>>, %arg5: memref<1x16x1xf32, #tpu.memory_space<vmem>>, %arg6: memref<16x290xbf16, #tpu.memory_space<vmem>>) attributes {dimension_semantics = [#tpu.dimension_semantics<parallel>], iteration_bounds = array<i64: 2>, scalar_prefetch = 0 : i64, scratch_operands = 1 : i64, tpu.core_type = #tpu.core_type<tc>, window_params = [{transform_indices = @transform_0, window_bounds = array<i64: 1, 16, 288>}, {pipeline_mode = #tpu.pipeline_mode<synchronous>, transform_indices = @transform_1, window_bounds = array<i64: 2, 1, 256>}, {pipeline_mode = #tpu.pipeline_mode<synchronous>, transform_indices = @transform_2, window_bounds = array<i64: 9, 16, 16>}, {pipeline_mode = #tpu.pipeline_mode<synchronous>, transform_indices = @transform_3, window_bounds = array<i64: 16, 1>}, {transform_indices = @transform_4, window_bounds = array<i64: 1, 16, 1>}]} {
    %c0 = arith.constant 0 : index
    %c0_0 = arith.constant 0 : index
    %c0_1 = arith.constant 0 : index
    %0 = vector.load %arg2[%c0, %c0_0, %c0_1] : memref<2x1x256xbf16, #tpu.memory_space<vmem>>, vector<1x1x256xbf16>
    %1 = vector.shape_cast %0 : vector<1x1x256xbf16> to vector<1x256xbf16>
    %c1 = arith.constant 1 : index
    %c0_2 = arith.constant 0 : index
    %c0_3 = arith.constant 0 : index
    %2 = vector.load %arg2[%c1, %c0_2, %c0_3] : memref<2x1x256xbf16, #tpu.memory_space<vmem>>, vector<1x1x256xbf16>
    %3 = vector.shape_cast %2 : vector<1x1x256xbf16> to vector<1x256xbf16>
    %c0_4 = arith.constant 0 : index
    %c0_5 = arith.constant 0 : index
    %c0_6 = arith.constant 0 : index
    %4 = vector.load %arg1[%c0_4, %c0_5, %c0_6] : memref<1x16x288xbf16, #tpu.memory_space<vmem>>, vector<1x16x288xbf16>
    %5 = vector.shape_cast %4 : vector<1x16x288xbf16> to vector<16x288xbf16>
    %cst = arith.constant 0.000000e+00 : bf16
    %6 = vector.broadcast %cst : bf16 to vector<16x290xbf16>
    %c0_7 = arith.constant 0 : index
    %c0_8 = arith.constant 0 : index
    %7 = vector.load %arg6[%c0_7, %c0_8] : memref<16x290xbf16, #tpu.memory_space<vmem>>, vector<16x290xbf16>
    tpu.vector_store %arg6[%c0_7, %c0_8], %6 {strides = array<i32>} : memref<16x290xbf16, #tpu.memory_space<vmem>>, vector<16x290xbf16>,
    %c0_9 = arith.constant 0 : index
    %c1_10 = arith.constant 1 : index
    %8 = vector.load %arg6[%c0_9, %c1_10] : memref<16x290xbf16, #tpu.memory_space<vmem>>, vector<16x288xbf16>
    tpu.vector_store %arg6[%c0_9, %c1_10], %5 {strides = array<i32>} : memref<16x290xbf16, #tpu.memory_space<vmem>>, vector<16x288xbf16>,
    %cst_11 = arith.constant 0.000000e+00 : f32
    %9 = vector.broadcast %cst_11 : f32 to vector<16x256xf32>
    %c0_12 = arith.constant 0 : index
    %c0_13 = arith.constant 0 : index
    %10 = vector.load %arg6[%c0_12, %c0_13] : memref<16x290xbf16, #tpu.memory_space<vmem>>, vector<16x256xbf16>
    %11 = vector.broadcast %1 : vector<1x256xbf16> to vector<16x256xbf16>
    %12 = arith.mulf %10, %11 : vector<16x256xbf16>
    %c0_14 = arith.constant 0 : index
    %c0_15 = arith.constant 0 : index
    %c0_16 = arith.constant 0 : index
    %13 = vector.load %arg3[%c0_14, %c0_15, %c0_16] : memref<9x16x16xbf16, #tpu.memory_space<vmem>>, vector<1x16x16xbf16>
    %14 = vector.shape_cast %13 : vector<1x16x16xbf16> to vector<16x16xbf16>
    %cst_17 = arith.constant dense<0.000000e+00> : vector<16x256xf32>
    %15 = tpu.matmul %14, %12, %cst_17 {dimension_numbers = #tpu.dot_dimension_numbers<[1], [0], [0], [1], [0, 0, 1, 1], [], []>} : vector<16x16xbf16>, vector<16x256xbf16>, vector<16x256xf32> -> vector<16x256xf32>
    %16 = arith.addf %9, %15 : vector<16x256xf32>
    %c0_18 = arith.constant 0 : index
    %c1_19 = arith.constant 1 : index
    %17 = vector.load %arg6[%c0_18, %c1_19] : memref<16x290xbf16, #tpu.memory_space<vmem>>, vector<16x256xbf16>
    %c1_20 = arith.constant 1 : index
    %c0_21 = arith.constant 0 : index
    %c0_22 = arith.constant 0 : index
    %18 = vector.load %arg3[%c1_20, %c0_21, %c0_22] : memref<9x16x16xbf16, #tpu.memory_space<vmem>>, vector<1x16x16xbf16>
    %19 = vector.shape_cast %18 : vector<1x16x16xbf16> to vector<16x16xbf16>
    %cst_23 = arith.constant dense<0.000000e+00> : vector<16x256xf32>
    %20 = tpu.matmul %19, %17, %cst_23 {dimension_numbers = #tpu.dot_dimension_numbers<[1], [0], [0], [1], [0, 0, 1, 1], [], []>} : vector<16x16xbf16>, vector<16x256xbf16>, vector<16x256xf32> -> vector<16x256xf32>
    %21 = arith.addf %16, %20 : vector<16x256xf32>
    %c0_24 = arith.constant 0 : index
    %c2 = arith.constant 2 : index
    %22 = vector.load %arg6[%c0_24, %c2] : memref<16x290xbf16, #tpu.memory_space<vmem>>, vector<16x256xbf16>
    %23 = vector.broadcast %3 : vector<1x256xbf16> to vector<16x256xbf16>
    %24 = arith.mulf %22, %23 : vector<16x256xbf16>
    %c2_25 = arith.constant 2 : index
    %c0_26 = arith.constant 0 : index
    %c0_27 = arith.constant 0 : index
    %25 = vector.load %arg3[%c2_25, %c0_26, %c0_27] : memref<9x16x16xbf16, #tpu.memory_space<vmem>>, vector<1x16x16xbf16>
    %26 = vector.shape_cast %25 : vector<1x16x16xbf16> to vector<16x16xbf16>
    %cst_28 = arith.constant dense<0.000000e+00> : vector<16x256xf32>
    %27 = tpu.matmul %26, %24, %cst_28 {dimension_numbers = #tpu.dot_dimension_numbers<[1], [0], [0], [1], [0, 0, 1, 1], [], []>} : vector<16x16xbf16>, vector<16x256xbf16>, vector<16x256xf32> -> vector<16x256xf32>
    %28 = arith.addf %21, %27 : vector<16x256xf32>
    %c0_29 = arith.constant 0 : index
    %c16 = arith.constant 16 : index
    %29 = vector.load %arg6[%c0_29, %c16] : memref<16x290xbf16, #tpu.memory_space<vmem>>, vector<16x256xbf16>
    %30 = vector.broadcast %1 : vector<1x256xbf16> to vector<16x256xbf16>
    %31 = arith.mulf %29, %30 : vector<16x256xbf16>
    %c3 = arith.constant 3 : index
    %c0_30 = arith.constant 0 : index
    %c0_31 = arith.constant 0 : index
    %32 = vector.load %arg3[%c3, %c0_30, %c0_31] : memref<9x16x16xbf16, #tpu.memory_space<vmem>>, vector<1x16x16xbf16>
    %33 = vector.shape_cast %32 : vector<1x16x16xbf16> to vector<16x16xbf16>
    %cst_32 = arith.constant dense<0.000000e+00> : vector<16x256xf32>
    %34 = tpu.matmul %33, %31, %cst_32 {dimension_numbers = #tpu.dot_dimension_numbers<[1], [0], [0], [1], [0, 0, 1, 1], [], []>} : vector<16x16xbf16>, vector<16x256xbf16>, vector<16x256xf32> -> vector<16x256xf32>
    %35 = arith.addf %28, %34 : vector<16x256xf32>
    %c0_33 = arith.constant 0 : index
    %c17 = arith.constant 17 : index
    %36 = vector.load %arg6[%c0_33, %c17] : memref<16x290xbf16, #tpu.memory_space<vmem>>, vector<16x256xbf16>
    %c4 = arith.constant 4 : index
    %c0_34 = arith.constant 0 : index
    %c0_35 = arith.constant 0 : index
    %37 = vector.load %arg3[%c4, %c0_34, %c0_35] : memref<9x16x16xbf16, #tpu.memory_space<vmem>>, vector<1x16x16xbf16>
    %38 = vector.shape_cast %37 : vector<1x16x16xbf16> to vector<16x16xbf16>
    %cst_36 = arith.constant dense<0.000000e+00> : vector<16x256xf32>
    %39 = tpu.matmul %38, %36, %cst_36 {dimension_numbers = #tpu.dot_dimension_numbers<[1], [0], [0], [1], [0, 0, 1, 1], [], []>} : vector<16x16xbf16>, vector<16x256xbf16>, vector<16x256xf32> -> vector<16x256xf32>
    %40 = arith.addf %35, %39 : vector<16x256xf32>
    %c0_37 = arith.constant 0 : index
    %c18 = arith.constant 18 : index
    %41 = vector.load %arg6[%c0_37, %c18] : memref<16x290xbf16, #tpu.memory_space<vmem>>, vector<16x256xbf16>
    %42 = vector.broadcast %3 : vector<1x256xbf16> to vector<16x256xbf16>
    %43 = arith.mulf %41, %42 : vector<16x256xbf16>
    %c5 = arith.constant 5 : index
    %c0_38 = arith.constant 0 : index
    %c0_39 = arith.constant 0 : index
    %44 = vector.load %arg3[%c5, %c0_38, %c0_39] : memref<9x16x16xbf16, #tpu.memory_space<vmem>>, vector<1x16x16xbf16>
    %45 = vector.shape_cast %44 : vector<1x16x16xbf16> to vector<16x16xbf16>
    %cst_40 = arith.constant dense<0.000000e+00> : vector<16x256xf32>
    %46 = tpu.matmul %45, %43, %cst_40 {dimension_numbers = #tpu.dot_dimension_numbers<[1], [0], [0], [1], [0, 0, 1, 1], [], []>} : vector<16x16xbf16>, vector<16x256xbf16>, vector<16x256xf32> -> vector<16x256xf32>
    %47 = arith.addf %40, %46 : vector<16x256xf32>
    %c0_41 = arith.constant 0 : index
    %c32 = arith.constant 32 : index
    %48 = vector.load %arg6[%c0_41, %c32] : memref<16x290xbf16, #tpu.memory_space<vmem>>, vector<16x256xbf16>
    %49 = vector.broadcast %1 : vector<1x256xbf16> to vector<16x256xbf16>
    %50 = arith.mulf %48, %49 : vector<16x256xbf16>
    %c6 = arith.constant 6 : index
    %c0_42 = arith.constant 0 : index
    %c0_43 = arith.constant 0 : index
    %51 = vector.load %arg3[%c6, %c0_42, %c0_43] : memref<9x16x16xbf16, #tpu.memory_space<vmem>>, vector<1x16x16xbf16>
    %52 = vector.shape_cast %51 : vector<1x16x16xbf16> to vector<16x16xbf16>
    %cst_44 = arith.constant dense<0.000000e+00> : vector<16x256xf32>
    %53 = tpu.matmul %52, %50, %cst_44 {dimension_numbers = #tpu.dot_dimension_numbers<[1], [0], [0], [1], [0, 0, 1, 1], [], []>} : vector<16x16xbf16>, vector<16x256xbf16>, vector<16x256xf32> -> vector<16x256xf32>
    %54 = arith.addf %47, %53 : vector<16x256xf32>
    %c0_45 = arith.constant 0 : index
    %c33 = arith.constant 33 : index
    %55 = vector.load %arg6[%c0_45, %c33] : memref<16x290xbf16, #tpu.memory_space<vmem>>, vector<16x256xbf16>
    %c7 = arith.constant 7 : index
    %c0_46 = arith.constant 0 : index
    %c0_47 = arith.constant 0 : index
    %56 = vector.load %arg3[%c7, %c0_46, %c0_47] : memref<9x16x16xbf16, #tpu.memory_space<vmem>>, vector<1x16x16xbf16>
    %57 = vector.shape_cast %56 : vector<1x16x16xbf16> to vector<16x16xbf16>
    %cst_48 = arith.constant dense<0.000000e+00> : vector<16x256xf32>
    %58 = tpu.matmul %57, %55, %cst_48 {dimension_numbers = #tpu.dot_dimension_numbers<[1], [0], [0], [1], [0, 0, 1, 1], [], []>} : vector<16x16xbf16>, vector<16x256xbf16>, vector<16x256xf32> -> vector<16x256xf32>
    %59 = arith.addf %54, %58 : vector<16x256xf32>
    %c0_49 = arith.constant 0 : index
    %c34 = arith.constant 34 : index
    %60 = vector.load %arg6[%c0_49, %c34] : memref<16x290xbf16, #tpu.memory_space<vmem>>, vector<16x256xbf16>
    %61 = vector.broadcast %3 : vector<1x256xbf16> to vector<16x256xbf16>
    %62 = arith.mulf %60, %61 : vector<16x256xbf16>
    %c8 = arith.constant 8 : index
    %c0_50 = arith.constant 0 : index
    %c0_51 = arith.constant 0 : index
    %63 = vector.load %arg3[%c8, %c0_50, %c0_51] : memref<9x16x16xbf16, #tpu.memory_space<vmem>>, vector<1x16x16xbf16>
    %64 = vector.shape_cast %63 : vector<1x16x16xbf16> to vector<16x16xbf16>
    %cst_52 = arith.constant dense<0.000000e+00> : vector<16x256xf32>
    %65 = tpu.matmul %64, %62, %cst_52 {dimension_numbers = #tpu.dot_dimension_numbers<[1], [0], [0], [1], [0, 0, 1, 1], [], []>} : vector<16x16xbf16>, vector<16x256xbf16>, vector<16x256xf32> -> vector<16x256xf32>
    %66 = arith.addf %59, %65 : vector<16x256xf32>
    %c0_53 = arith.constant 0 : index
    %c0_54 = arith.constant 0 : index
    %67 = vector.load %arg4[%c0_53, %c0_54] : memref<16x1xf32, #tpu.memory_space<vmem>>, vector<16x1xf32>
    %68 = vector.broadcast %67 : vector<16x1xf32> to vector<16x256xf32>
    %69 = arith.addf %66, %68 : vector<16x256xf32>
    %cst_55 = arith.constant 0.000000e+00 : f32
    %70 = vector.broadcast %cst_55 : f32 to vector<16x256xf32>
    %71 = arith.maximumf %69, %70 : vector<16x256xf32>
    %cst_56 = arith.constant dense<0.000000e+00> : vector<16xf32>
    %72 = vector.multi_reduction <add>, %71, %cst_56 [1] : vector<16x256xf32> to vector<16xf32>
    %73 = vector.shape_cast %72 : vector<16xf32> to vector<16x1xf32>
    %cst_57 = arith.constant 2.560000e+02 : f32
    %74 = vector.broadcast %cst_57 : f32 to vector<16x1xf32>
    %75 = arith.divf %73, %74 : vector<16x1xf32>
    %c0_58 = arith.constant 0 : index
    %c0_59 = arith.constant 0 : index
    %c0_60 = arith.constant 0 : index
    %76 = vector.load %arg5[%c0_58, %c0_59, %c0_60] : memref<1x16x1xf32, #tpu.memory_space<vmem>>, vector<1x16x1xf32>
    %77 = vector.shape_cast %76 : vector<1x16x1xf32> to vector<16x1xf32>
    %78 = vector.shape_cast %75 : vector<16x1xf32> to vector<1x16x1xf32>
    tpu.vector_store %arg5[%c0_58, %c0_59, %c0_60], %78 {strides = array<i32>} : memref<1x16x1xf32, #tpu.memory_space<vmem>>, vector<1x16x1xf32>,
    return
  }
  func.func @transform_0(%arg0: i32) -> (i32, i32, i32) {
    %c0_i32 = arith.constant 0 : i32
    %c0_i32_0 = arith.constant 0 : i32
    %c0_i32_1 = arith.constant 0 : i32
    return %arg0, %c0_i32, %c0_i32_0 : i32, i32, i32
  }
  func.func @transform_1(%arg0: i32) -> (i32, i32, i32) {
    %c0_i32 = arith.constant 0 : i32
    %c0_i32_0 = arith.constant 0 : i32
    %c0_i32_1 = arith.constant 0 : i32
    %c0_i32_2 = arith.constant 0 : i32
    return %c0_i32, %c0_i32_0, %c0_i32_1 : i32, i32, i32
  }
  func.func @transform_2(%arg0: i32) -> (i32, i32, i32) {
    %c0_i32 = arith.constant 0 : i32
    %c0_i32_0 = arith.constant 0 : i32
    %c0_i32_1 = arith.constant 0 : i32
    %c0_i32_2 = arith.constant 0 : i32
    return %c0_i32, %c0_i32_0, %c0_i32_1 : i32, i32, i32
  }
  func.func @transform_3(%arg0: i32) -> (i32, i32) {
    %c0_i32 = arith.constant 0 : i32
    %c0_i32_0 = arith.constant 0 : i32
    %c0_i32_1 = arith.constant 0 : i32
    return %c0_i32, %c0_i32_0 : i32, i32
  }
  func.func @transform_4(%arg0: i32) -> (i32, i32, i32) {
    %c0_i32 = arith.constant 0 : i32
    %c0_i32_0 = arith.constant 0 : i32
    %c0_i32_1 = arith.constant 0 : i32
    return %arg0, %c0_i32, %c0_i32_0 : i32, i32, i32
  }
}

module attributes {stable_mosaic.version = 11 : i64} {
  func.func @_scale_residual_kernel(%arg0: i32, %arg1: i32, %arg2: memref<1x16x128xf32, #tpu.memory_space<vmem>>, %arg3: memref<1x16x1xf32, #tpu.memory_space<vmem>>, %arg4: memref<1x16x128xf32, #tpu.memory_space<vmem>>, %arg5: memref<1x16x128xf32, #tpu.memory_space<vmem>>) attributes {dimension_semantics = [#tpu.dimension_semantics<parallel>, #tpu.dimension_semantics<parallel>], iteration_bounds = array<i64: 2, 2>, scalar_prefetch = 0 : i64, scratch_operands = 0 : i64, tpu.core_type = #tpu.core_type<tc>, window_params = [{transform_indices = @transform_0, window_bounds = array<i64: 1, 16, 128>}, {transform_indices = @transform_1, window_bounds = array<i64: 1, 16, 1>}, {transform_indices = @transform_2, window_bounds = array<i64: 1, 16, 128>}, {transform_indices = @transform_3, window_bounds = array<i64: 1, 16, 128>}]} {
    %c0 = arith.constant 0 : index
    %c0_0 = arith.constant 0 : index
    %c0_1 = arith.constant 0 : index
    %0 = vector.load %arg2[%c0, %c0_0, %c0_1] : memref<1x16x128xf32, #tpu.memory_space<vmem>>, vector<1x16x128xf32>
    %1 = vector.shape_cast %0 : vector<1x16x128xf32> to vector<16x128xf32>
    %c0_2 = arith.constant 0 : index
    %c0_3 = arith.constant 0 : index
    %c0_4 = arith.constant 0 : index
    %2 = vector.load %arg3[%c0_2, %c0_3, %c0_4] : memref<1x16x1xf32, #tpu.memory_space<vmem>>, vector<1x16x1xf32>
    %3 = vector.shape_cast %2 : vector<1x16x1xf32> to vector<16x1xf32>
    %4 = vector.broadcast %3 : vector<16x1xf32> to vector<16x128xf32>
    %5 = arith.mulf %1, %4 : vector<16x128xf32>
    %c0_5 = arith.constant 0 : index
    %c0_6 = arith.constant 0 : index
    %c0_7 = arith.constant 0 : index
    %6 = vector.load %arg4[%c0_5, %c0_6, %c0_7] : memref<1x16x128xf32, #tpu.memory_space<vmem>>, vector<1x16x128xf32>
    %7 = vector.shape_cast %6 : vector<1x16x128xf32> to vector<16x128xf32>
    %8 = arith.addf %5, %7 : vector<16x128xf32>
    %c0_8 = arith.constant 0 : index
    %c0_9 = arith.constant 0 : index
    %c0_10 = arith.constant 0 : index
    %9 = vector.load %arg5[%c0_8, %c0_9, %c0_10] : memref<1x16x128xf32, #tpu.memory_space<vmem>>, vector<1x16x128xf32>
    %10 = vector.shape_cast %9 : vector<1x16x128xf32> to vector<16x128xf32>
    %11 = vector.shape_cast %8 : vector<16x128xf32> to vector<1x16x128xf32>
    tpu.vector_store %arg5[%c0_8, %c0_9, %c0_10], %11 {strides = array<i32>} : memref<1x16x128xf32, #tpu.memory_space<vmem>>, vector<1x16x128xf32>,
    return
  }
  func.func @transform_0(%arg0: i32, %arg1: i32) -> (i32, i32, i32) {
    %c0_i32 = arith.constant 0 : i32
    %c0_i32_0 = arith.constant 0 : i32
    return %arg0, %c0_i32, %arg1 : i32, i32, i32
  }
  func.func @transform_1(%arg0: i32, %arg1: i32) -> (i32, i32, i32) {
    %c0_i32 = arith.constant 0 : i32
    %c0_i32_0 = arith.constant 0 : i32
    %c0_i32_1 = arith.constant 0 : i32
    return %arg0, %c0_i32, %c0_i32_0 : i32, i32, i32
  }
  func.func @transform_2(%arg0: i32, %arg1: i32) -> (i32, i32, i32) {
    %c0_i32 = arith.constant 0 : i32
    %c0_i32_0 = arith.constant 0 : i32
    return %arg0, %c0_i32, %arg1 : i32, i32, i32
  }
  func.func @transform_3(%arg0: i32, %arg1: i32) -> (i32, i32, i32) {
    %c0_i32 = arith.constant 0 : i32
    %c0_i32_0 = arith.constant 0 : i32
    return %arg0, %c0_i32, %arg1 : i32, i32, i32
  }
}

module attributes {stable_mosaic.version = 11 : i64} {
  func.func @_scale_residual2_kernel(%arg0: i32, %arg1: i32, %arg2: memref<1x16x128xf32, #tpu.memory_space<vmem>>, %arg3: memref<1x16x1xf32, #tpu.memory_space<vmem>>, %arg4: memref<1x16x128xf32, #tpu.memory_space<vmem>>, %arg5: memref<1x16x128xf32, #tpu.memory_space<vmem>>, %arg6: memref<1x16x128xf32, #tpu.memory_space<vmem>>) attributes {dimension_semantics = [#tpu.dimension_semantics<parallel>, #tpu.dimension_semantics<parallel>], iteration_bounds = array<i64: 2, 2>, scalar_prefetch = 0 : i64, scratch_operands = 0 : i64, tpu.core_type = #tpu.core_type<tc>, window_params = [{transform_indices = @transform_0, window_bounds = array<i64: 1, 16, 128>}, {transform_indices = @transform_1, window_bounds = array<i64: 1, 16, 1>}, {transform_indices = @transform_2, window_bounds = array<i64: 1, 16, 128>}, {transform_indices = @transform_3, window_bounds = array<i64: 1, 16, 128>}, {transform_indices = @transform_4, window_bounds = array<i64: 1, 16, 128>}]} {
    %c0 = arith.constant 0 : index
    %c0_0 = arith.constant 0 : index
    %c0_1 = arith.constant 0 : index
    %0 = vector.load %arg2[%c0, %c0_0, %c0_1] : memref<1x16x128xf32, #tpu.memory_space<vmem>>, vector<1x16x128xf32>
    %1 = vector.shape_cast %0 : vector<1x16x128xf32> to vector<16x128xf32>
    %c0_2 = arith.constant 0 : index
    %c0_3 = arith.constant 0 : index
    %c0_4 = arith.constant 0 : index
    %2 = vector.load %arg3[%c0_2, %c0_3, %c0_4] : memref<1x16x1xf32, #tpu.memory_space<vmem>>, vector<1x16x1xf32>
    %3 = vector.shape_cast %2 : vector<1x16x1xf32> to vector<16x1xf32>
    %4 = vector.broadcast %3 : vector<16x1xf32> to vector<16x128xf32>
    %5 = arith.mulf %1, %4 : vector<16x128xf32>
    %c0_5 = arith.constant 0 : index
    %c0_6 = arith.constant 0 : index
    %c0_7 = arith.constant 0 : index
    %6 = vector.load %arg4[%c0_5, %c0_6, %c0_7] : memref<1x16x128xf32, #tpu.memory_space<vmem>>, vector<1x16x128xf32>
    %7 = vector.shape_cast %6 : vector<1x16x128xf32> to vector<16x128xf32>
    %8 = arith.addf %5, %7 : vector<16x128xf32>
    %c0_8 = arith.constant 0 : index
    %c0_9 = arith.constant 0 : index
    %c0_10 = arith.constant 0 : index
    %9 = vector.load %arg5[%c0_8, %c0_9, %c0_10] : memref<1x16x128xf32, #tpu.memory_space<vmem>>, vector<1x16x128xf32>
    %10 = vector.shape_cast %9 : vector<1x16x128xf32> to vector<16x128xf32>
    %11 = arith.addf %8, %10 : vector<16x128xf32>
    %c0_11 = arith.constant 0 : index
    %c0_12 = arith.constant 0 : index
    %c0_13 = arith.constant 0 : index
    %12 = vector.load %arg6[%c0_11, %c0_12, %c0_13] : memref<1x16x128xf32, #tpu.memory_space<vmem>>, vector<1x16x128xf32>
    %13 = vector.shape_cast %12 : vector<1x16x128xf32> to vector<16x128xf32>
    %14 = vector.shape_cast %11 : vector<16x128xf32> to vector<1x16x128xf32>
    tpu.vector_store %arg6[%c0_11, %c0_12, %c0_13], %14 {strides = array<i32>} : memref<1x16x128xf32, #tpu.memory_space<vmem>>, vector<1x16x128xf32>,
    return
  }
  func.func @transform_0(%arg0: i32, %arg1: i32) -> (i32, i32, i32) {
    %c0_i32 = arith.constant 0 : i32
    %c0_i32_0 = arith.constant 0 : i32
    return %arg0, %c0_i32, %arg1 : i32, i32, i32
  }
  func.func @transform_1(%arg0: i32, %arg1: i32) -> (i32, i32, i32) {
    %c0_i32 = arith.constant 0 : i32
    %c0_i32_0 = arith.constant 0 : i32
    %c0_i32_1 = arith.constant 0 : i32
    return %arg0, %c0_i32, %c0_i32_0 : i32, i32, i32
  }
  func.func @transform_2(%arg0: i32, %arg1: i32) -> (i32, i32, i32) {
    %c0_i32 = arith.constant 0 : i32
    %c0_i32_0 = arith.constant 0 : i32
    return %arg0, %c0_i32, %arg1 : i32, i32, i32
  }
  func.func @transform_3(%arg0: i32, %arg1: i32) -> (i32, i32, i32) {
    %c0_i32 = arith.constant 0 : i32
    %c0_i32_0 = arith.constant 0 : i32
    return %arg0, %c0_i32, %arg1 : i32, i32, i32
  }
  func.func @transform_4(%arg0: i32, %arg1: i32) -> (i32, i32, i32) {
    %c0_i32 = arith.constant 0 : i32
    %c0_i32_0 = arith.constant 0 : i32
    return %arg0, %c0_i32, %arg1 : i32, i32, i32
  }
}

</mosaic_0001>

<llo_original>
// kernel: fcabs_forward.6
$region0: #{fcabs_forward.6}
  #allocation0 [shape = 'u32[]', space=smem, size = 0x4, offset = 0x4, fixed_abs, tag = 'smem constant byte address 0x4 - core index']
  #allocation1 [shape = 'u32[72,128]{1,0:T(1,128)}', space=vmem, size = 0x9000, scoped, tag = 'internal scratch']
  #allocation2 [shape = 'bf16[16,194]{1,0:T(8,128)(2,1)}', space=vmem, size = 0x2000, scoped, tag = 'scratch operand']
  #allocation3 [shape = 'bf16[16,162]{1,0:T(8,128)(2,1)}', space=vmem, size = 0x2000, scoped, tag = 'scratch operand']
  %s0 = inlined_call_operand.vmem [shape: bf16[2,2,16,192], index: 0, kind: input, shape index: {}]
  %s1 = inlined_call_operand.vmem [shape: f32[2,1,160], index: 1, kind: input, shape index: {}]
  %s2 = inlined_call_operand.vmem [shape: bf16[2,1,160], index: 2, kind: input, shape index: {}]
  %s3 = inlined_call_operand.vmem [shape: bf16[9,16,16], index: 3, kind: input, shape index: {}]
  %s4 = inlined_call_operand.vmem [shape: f32[16,1], index: 4, kind: input, shape index: {}]
  %s5 = inlined_call_operand.vmem [shape: bf16[9,16,16], index: 5, kind: input, shape index: {}]
  %s6 = inlined_call_operand.vmem [shape: f32[16,1], index: 6, kind: input, shape index: {}]
  %s7 = inlined_call_operand.vmem [shape: f32[2,16,256], index: 7, kind: output, shape index: {}]
  %s8 = sld [smem:[#allocation0]]
  $region95: #{fcabs_forward.6} parent=0
    _
  %s10 = ssub.s32 1, %s8
  %s11 = scalar_select 0, %s10, %s8
  $region1: #{fcabs_forward.6} parent=0
    #allocation4 [shape = 'u8[16384]{0}', space=vmem, size = 0x4000, scoped, tag = 'output window, operand 0']
    loop: start=0, step=1, limit=6
    $region2: #{fcabs_forward.6} parent=1 // loop_pre_header
      _
    $region3: #{fcabs_forward.6} parent=1 // loop_header
      %s13 = sphi 0, %s17
      %p14 = scmp.ge.s32.totalorder %s13, 6
      %s20 = sphi 0, %s32
      %s21 = sphi 0, %s28
      %s22 = sphi 0, %s20
      %s23 = sphi 0, %s21
      %s24 = sphi 0, %s22
      %s25 = sphi 0, %s23
      %s37 = sphi 0, %s39
      %s40 = sphi 0, %s37
      %s41 = sphi 0, %s40
      %s57 = sphi 0, %s41
      %s63 = sphi 0, %s65
      %s66 = sphi 0, %s63
      %s67 = sphi 0, %s66
      %s83 = sphi 0, %s67
      %s87 = sphi 0, %s87
      %s89 = sphi 0, %s87
      %s90 = sphi 0, %s89
      %s104 = sphi 0, %s90
      %s108 = sphi 0, %s108
      %s110 = sphi 0, %s108
      %s111 = sphi 0, %s110
      %s125 = sphi 0, %s111
      %s129 = sphi 0, %s129
      %s131 = sphi 0, %s129
      %s132 = sphi 0, %s131
      %s146 = sphi 0, %s132
      %s150 = sphi 0, %s150
      %s152 = sphi 0, %s150
      %s153 = sphi 0, %s152
      %s167 = sphi 0, %s153
      %s171 = sphi 0, %s171
      %s173 = sphi 0, %s171
      %s174 = sphi 0, %s173
      %s188 = sphi 0, %s174
      %s196 = sphi 0, %s198
      %s199 = sphi 0, %s196
      %s200 = sphi 0, %s199
      %s216 = sphi 0, %s200
    $region4: #{fcabs_forward.6} parent=1 // loop_header_branch
      %16 = sbr.rel (%p14) target = $region8
    $region5: #{fcabs_forward.6} parent=1 // loop_body
      %s18 = ssub.s32 %s13, 1
      %s19 = ssub.s32 %s13, 2
      %s26 = sadd.s32 1, %s21
      %p27 = scmp.ge.s32.totalorder %s26, 2
      %s28 = scalar_select %p27, 0, %s26
      %s29 = sadd.s32 1, %s20
      %s30 = scalar_select %p27, %s29, %s20
      %p31 = scmp.ge.s32.totalorder %s30, 2
      %s32 = scalar_select %p31, 0, %s30
      %s33 = ssub.s32 %s20, %s32
      %s34 = ssub.s32 %s21, %s28
      %s35 = sor.u32 %s33, %s34
      %p36 = scmp.eq.s32.totalorder %s35, 0
      %s38 = sadd.s32 %s37, 1
      %s39 = scalar_select %p36, %s37, %s38
      %p42 = pneg %p36
      %p43 = scmp.eq.s32.totalorder %s13, 3
      %p44 = por %p42, %p43
      %p45 = scmp.ne.s32.totalorder %s37, %s40
      %p46 = scmp.eq.s32.totalorder %s13, 0
      %p47 = por %p45, %p46
      %p48 = scmp.ne.s32.totalorder %s37, %s40
      %p49 = scmp.eq.s32.totalorder %s18, 3
      %p50 = por %p48, %p49
      %p51 = scmp.ne.s32.totalorder %s40, %s41
      %p52 = scmp.eq.s32.totalorder %s18, 0
      %p53 = por %p51, %p52
      %p54 = scmp.ne.s32.totalorder %s40, %s41
      %p55 = scmp.eq.s32.totalorder %s19, 3
      %p56 = por %p54, %p55
      %p58 = scmp.ne.s32.totalorder %s41, %s57
      %p59 = scmp.eq.s32.totalorder %s19, 0
      %p60 = por %p58, %p59
      %s61 = ssub.s32 %s21, %s28
      %p62 = scmp.eq.s32.totalorder %s61, 0
      %s64 = sadd.s32 %s63, 1
      %s65 = scalar_select %p62, %s63, %s64
      %p68 = pneg %p62
      %p69 = scmp.eq.s32.totalorder %s13, 3
      %p70 = por %p68, %p69
      %p71 = scmp.ne.s32.totalorder %s63, %s66
      %p72 = scmp.eq.s32.totalorder %s13, 0
      %p73 = por %p71, %p72
      %p74 = scmp.ne.s32.totalorder %s63, %s66
      %p75 = scmp.eq.s32.totalorder %s18, 3
      %p76 = por %p74, %p75
      %p77 = scmp.ne.s32.totalorder %s66, %s67
      %p78 = scmp.eq.s32.totalorder %s18, 0
      %p79 = por %p77, %p78
      %p80 = scmp.ne.s32.totalorder %s66, %s67
      %p81 = scmp.eq.s32.totalorder %s19, 3
      %p82 = por %p80, %p81
      %p84 = scmp.ne.s32.totalorder %s67, %s83
      %p85 = scmp.eq.s32.totalorder %s19, 0
      %p86 = por %p84, %p85
      %s88 = sadd.s32 %s87, 1
      %p91 = scmp.eq.s32.totalorder %s13, 3
      %p92 = scmp.ne.s32.totalorder %s87, %s89
      %p93 = scmp.eq.s32.totalorder %s13, 0
      %p94 = por %p92, %p93
      %p95 = scmp.ne.s32.totalorder %s87, %s89
      %p96 = scmp.eq.s32.totalorder %s18, 3
      %p97 = por %p95, %p96
      %p98 = scmp.ne.s32.totalorder %s89, %s90
      %p99 = scmp.eq.s32.totalorder %s18, 0
      %p100 = por %p98, %p99
      %p101 = scmp.ne.s32.totalorder %s89, %s90
      %p102 = scmp.eq.s32.totalorder %s19, 3
      %p103 = por %p101, %p102
      %p105 = scmp.ne.s32.totalorder %s90, %s104
      %p106 = scmp.eq.s32.totalorder %s19, 0
      %p107 = por %p105, %p106
      %s109 = sadd.s32 %s108, 1
      %p112 = scmp.eq.s32.totalorder %s13, 3
      %p113 = scmp.ne.s32.totalorder %s108, %s110
      %p114 = scmp.eq.s32.totalorder %s13, 0
      %p115 = por %p113, %p114
      %p116 = scmp.ne.s32.totalorder %s108, %s110
      %p117 = scmp.eq.s32.totalorder %s18, 3
      %p118 = por %p116, %p117
      %p119 = scmp.ne.s32.totalorder %s110, %s111
      %p120 = scmp.eq.s32.totalorder %s18, 0
      %p121 = por %p119, %p120
      %p122 = scmp.ne.s32.totalorder %s110, %s111
      %p123 = scmp.eq.s32.totalorder %s19, 3
      %p124 = por %p122, %p123
      %p126 = scmp.ne.s32.totalorder %s111, %s125
      %p127 = scmp.eq.s32.totalorder %s19, 0
      %p128 = por %p126, %p127
      %s130 = sadd.s32 %s129, 1
      %p133 = scmp.eq.s32.totalorder %s13, 3
      %p134 = scmp.ne.s32.totalorder %s129, %s131
      %p135 = scmp.eq.s32.totalorder %s13, 0
      %p136 = por %p134, %p135
      %p137 = scmp.ne.s32.totalorder %s129, %s131
      %p138 = scmp.eq.s32.totalorder %s18, 3
      %p139 = por %p137, %p138
      %p140 = scmp.ne.s32.totalorder %s131, %s132
      %p141 = scmp.eq.s32.totalorder %s18, 0
      %p142 = por %p140, %p141
      %p143 = scmp.ne.s32.totalorder %s131, %s132
      %p144 = scmp.eq.s32.totalorder %s19, 3
      %p145 = por %p143, %p144
      %p147 = scmp.ne.s32.totalorder %s132, %s146
      %p148 = scmp.eq.s32.totalorder %s19, 0
      %p149 = por %p147, %p148
      %s151 = sadd.s32 %s150, 1
      %p154 = scmp.eq.s32.totalorder %s13, 3
      %p155 = scmp.ne.s32.totalorder %s150, %s152
      %p156 = scmp.eq.s32.totalorder %s13, 0
      %p157 = por %p155, %p156
      %p158 = scmp.ne.s32.totalorder %s150, %s152
      %p159 = scmp.eq.s32.totalorder %s18, 3
      %p160 = por %p158, %p159
      %p161 = scmp.ne.s32.totalorder %s152, %s153
      %p162 = scmp.eq.s32.totalorder %s18, 0
      %p163 = por %p161, %p162
      %p164 = scmp.ne.s32.totalorder %s152, %s153
      %p165 = scmp.eq.s32.totalorder %s19, 3
      %p166 = por %p164, %p165
      %p168 = scmp.ne.s32.totalorder %s153, %s167
      %p169 = scmp.eq.s32.totalorder %s19, 0
      %p170 = por %p168, %p169
      %s172 = sadd.s32 %s171, 1
      %p175 = scmp.eq.s32.totalorder %s13, 3
      %p176 = scmp.ne.s32.totalorder %s171, %s173
      %p177 = scmp.eq.s32.totalorder %s13, 0
      %p178 = por %p176, %p177
      %p179 = scmp.ne.s32.totalorder %s171, %s173
      %p180 = scmp.eq.s32.totalorder %s18, 3
      %p181 = por %p179, %p180
      %p182 = scmp.ne.s32.totalorder %s173, %s174
      %p183 = scmp.eq.s32.totalorder %s18, 0
      %p184 = por %p182, %p183
      %p185 = scmp.ne.s32.totalorder %s173, %s174
      %p186 = scmp.eq.s32.totalorder %s19, 3
      %p187 = por %p185, %p186
      %p189 = scmp.ne.s32.totalorder %s174, %s188
      %p190 = scmp.eq.s32.totalorder %s19, 0
      %p191 = por %p189, %p190
      %s192 = ssub.s32 %s20, %s32
      %s193 = ssub.s32 %s21, %s28
      %s194 = sor.u32 %s192, %s193
      %p195 = scmp.eq.s32.totalorder %s194, 0
      %s197 = sadd.s32 %s196, 1
      %s198 = scalar_select %p195, %s196, %s197
      %p201 = pneg %p195
      %p202 = scmp.eq.s32.totalorder %s13, 3
      %p203 = por %p201, %p202
      %p204 = scmp.ne.s32.totalorder %s196, %s199
      %p205 = scmp.eq.s32.totalorder %s13, 0
      %p206 = por %p204, %p205
      %p207 = scmp.ne.s32.totalorder %s196, %s199
      %p208 = scmp.eq.s32.totalorder %s18, 3
      %p209 = por %p207, %p208
      %p210 = scmp.ne.s32.totalorder %s199, %s200
      %p211 = scmp.eq.s32.totalorder %s18, 0
      %p212 = por %p210, %p211
      %p213 = scmp.ne.s32.totalorder %s199, %s200
      %p214 = scmp.eq.s32.totalorder %s19, 3
      %p215 = por %p213, %p214
      %p217 = scmp.ne.s32.totalorder %s200, %s216
      %p218 = scmp.eq.s32.totalorder %s19, 0
      %p219 = por %p217, %p218
      %p220 = scmp.le.s32.totalorder 1, %s13
      %p221 = scmp.lt.s32.totalorder %s13, 5
      %p222 = pnand %p220, %p221
      %p223 = pneg %p222
      // Predicated region
      $region9: #{fcabs_forward.6} parent=5 // pred_check
        _
      $region10: #{fcabs_forward.6} parent=5 // pred_check_branch
        %225 = sbr.rel (%p222) target = $region12
      $region11: #{fcabs_forward.6} parent=5 // pred_region
        %s226 = ssub.s32 %s13, 1
        // Predicated region
        $region13: #{fcabs_forward.6} parent=11 // pred_check
          %p227 = pneg %p100
        $region14: #{fcabs_forward.6} parent=11 // pred_check_branch
          %229 = sbr.rel (%p227) target = $region16
        $region15: #{fcabs_forward.6} parent=11 // pred_region
          _
        $region16: #{fcabs_forward.6} parent=11 // pred_fallthru
          _
        // Predicated region
        $region17: #{fcabs_forward.6} parent=11 // pred_check
          %p230 = pneg %p121
        $region18: #{fcabs_forward.6} parent=11 // pred_check_branch
          %232 = sbr.rel (%p230) target = $region20
        $region19: #{fcabs_forward.6} parent=11 // pred_region
          _
        $region20: #{fcabs_forward.6} parent=11 // pred_fallthru
          _
        // Predicated region
        $region21: #{fcabs_forward.6} parent=11 // pred_check
          %p233 = pneg %p142
        $region22: #{fcabs_forward.6} parent=11 // pred_check_branch
          %235 = sbr.rel (%p233) target = $region24
        $region23: #{fcabs_forward.6} parent=11 // pred_region
          _
        $region24: #{fcabs_forward.6} parent=11 // pred_fallthru
          _
        // Predicated region
        $region25: #{fcabs_forward.6} parent=11 // pred_check
          %p236 = pneg %p163
        $region26: #{fcabs_forward.6} parent=11 // pred_check_branch
          %238 = sbr.rel (%p236) target = $region28
        $region27: #{fcabs_forward.6} parent=11 // pred_region
          _
        $region28: #{fcabs_forward.6} parent=11 // pred_fallthru
          _
        // Predicated region
        $region29: #{fcabs_forward.6} parent=11 // pred_check
          %p239 = pneg %p184
        $region30: #{fcabs_forward.6} parent=11 // pred_check_branch
          %241 = sbr.rel (%p239) target = $region32
        $region31: #{fcabs_forward.6} parent=11 // pred_region
          _
        $region32: #{fcabs_forward.6} parent=11 // pred_fallthru
          _
      $region12: #{fcabs_forward.6} parent=5 // pred_fallthru
        _
      %p242 = scmp.lt.s32.totalorder %s13, 4
      // Predicated region
      $region33: #{fcabs_forward.6} parent=5 // pred_check
        %p243 = pneg %p242
      $region34: #{fcabs_forward.6} parent=5 // pred_check_branch
        %245 = sbr.rel (%p243) target = $region36
      $region35: #{fcabs_forward.6} parent=5 // pred_region
        // Predicated region
        $region37: #{fcabs_forward.6} parent=35 // pred_check
          %p246 = pneg %p47
        $region38: #{fcabs_forward.6} parent=35 // pred_check_branch
          %248 = sbr.rel (%p246) target = $region40
        $region39: #{fcabs_forward.6} parent=35 // pred_region
          %p249 = scmp.lt.s32.totalorder %s20, 1
          %s250 = scalar_select %p249, %s20, 1
          %p251 = scmp.lt.s32.totalorder %s21, 1
          %s252 = scalar_select %p251, %s21, 1
          %s253 = smul.addr %s252, 4
          %s254 = smul.addr %s250, 8
          %s255 = sadd.s32 %s253, %s254
          %s256 = smul.addr %s255, 4
          %s257 = scalar_lea.vmem %s0, %s256
        $region40: #{fcabs_forward.6} parent=35 // pred_fallthru
          _
        // Predicated region
        $region41: #{fcabs_forward.6} parent=35 // pred_check
          %p258 = pneg %p73
        $region42: #{fcabs_forward.6} parent=35 // pred_check_branch
          %260 = sbr.rel (%p258) target = $region44
        $region43: #{fcabs_forward.6} parent=35 // pred_region
          %p261 = scmp.lt.s32.totalorder %s21, 1
          %s262 = scalar_select %p261, %s21, 1
          %s263 = smul.addr %s262, 2
          %s264 = scalar_lea.vmem %s1, %s263
        $region44: #{fcabs_forward.6} parent=35 // pred_fallthru
          _
      $region36: #{fcabs_forward.6} parent=5 // pred_fallthru
        _
      %p265 = scmp.le.s32.totalorder 1, %s13
      %p266 = scmp.lt.s32.totalorder %s13, 5
      %p267 = pnand %p265, %p266
      %p268 = pneg %p267
      // Predicated region
      $region45: #{fcabs_forward.6} parent=5 // pred_check
        _
      $region46: #{fcabs_forward.6} parent=5 // pred_check_branch
        %270 = sbr.rel (%p267) target = $region48
      $region47: #{fcabs_forward.6} parent=5 // pred_region
        %s271 = ssub.s32 %s13, 1
        %p272 = scmp.lt.s32.totalorder %s22, 1
        %s273 = scalar_select %p272, %s22, 1
        %p274 = scmp.lt.s32.totalorder %s23, 1
        %s275 = scalar_select %p274, %s23, 1
        %s276 = smul.addr %s275, 4
        %s277 = smul.addr %s273, 8
        %s278 = sadd.s32 %s276, %s277
        %s279 = smul.addr %s278, 4
        %s280 = scalar_lea.vmem %s0, %s279
        %p281 = pneg %p53
        %p282 = pneg %p50
        %p283 = scmp.lt.s32.totalorder %s23, 1
        %s284 = scalar_select %p283, %s23, 1
        %s285 = smul.addr %s284, 2
        %s286 = scalar_lea.vmem %s1, %s285
        %p287 = pneg %p79
        %p288 = pneg %p76
        %p289 = pneg %p100
        %p290 = pneg %p97
        %p291 = pneg %p121
        %p292 = pneg %p118
        %p293 = pneg %p142
        %p294 = pneg %p139
        %p295 = pneg %p163
        %p296 = pneg %p160
        %p297 = pneg %p184
        %p298 = pneg %p181
        %p299 = pneg %p212
        %p300 = pneg %p209
        %s301 = sand.u32 %s199, 1
        %s302 = sand.u32 %s199, 1
        %s303 = smul.addr %s302, 16
        %s304 = scalar_lea.vmem [#allocation4], %s303
        %p305 = scmp.lt.s32.totalorder %s22, 1
        %s306 = scalar_select %p305, %s22, 1
        %p307 = scmp.lt.s32.totalorder %s23, 1
        %s308 = scalar_select %p307, %s23, 1
        %s309 = smul.addr %s308, 4
        %s310 = smul.addr %s306, 8
        %s311 = sadd.s32 %s309, %s310
        %s312 = smul.addr %s311, 4
        %s313 = scalar_lea.vmem %s0, %s312
        %p314 = scmp.lt.s32.totalorder %s23, 1
        %s315 = scalar_select %p314, %s23, 1
        %s316 = smul.addr %s315, 2
        %s317 = scalar_lea.vmem %s1, %s316
        %v319 = vld [vmem:[%s2] sm:$0x3]
        %s320 = scalar_lea.vmem %s2, 2
        %v321 = vld [vmem:[%s320] sm:$0x3]
        %v322 = vld [vmem:[%s313] sm:$0xff]
        %v323 = vld [vmem:[%s313 + $0x8] sm:$0xff]
        %vm324 = vcmask 1043456
        %vm325 = vcmask 539652
        %vm326 = vmor %vm325, %vm324
        %327 = vst.msk [vmem:[#allocation2] sm:$0xff] %vm326, 0
        %328 = vst.msk [vmem:[#allocation2 + $0x8] sm:$0xff] %vm326, 0
        %331 = vrot.lane.b32.xlu0 %v322, 1
        %v332 = vpop.permute.xlu0 %331
        %333 = vrot.lane.b32.xlu0 %v323, 1
        %v334 = vpop.permute.xlu0 %333
        %v335 = vrot.slane %v332, 4
        %v336 = vrot.slane %v334, 4
        %vm337 = vcmask 7168
        %v338 = vsel %vm337, %v335, %v332
        %v339 = vsel %vm337, %v336, %v334
        %vm342 = vcmask 1043464
        %vm343 = vcmask 531460
        %vm344 = vmor %vm343, %vm342
        %345 = vst.msk [vmem:[#allocation2] sm:$0xff] %vm344, %v338
        %346 = vst.msk [vmem:[#allocation2 + $0x8] sm:$0xff] %vm344, %v339
        %v347 = vld [vmem:[#allocation2] sm:$0xff]
        %v348 = vld [vmem:[#allocation2 + $0x8] sm:$0xff]
        %350 = vst [vmem:[#allocation1] ss:$9 sm:$0xff] %v319
        %v351 = vld [vmem:[#allocation1] sm:$0xff]
        %v352 = vld [vmem:[#allocation1 + $0x9] sm:$0xff]
        %v353 = vpack.i.b16 %v351, %v351
        %v355 = vperm.slane %v353, 0
        %v356 = vpack.i.b16 %v352, %v352
        %v358 = vperm.slane %v356, 0
        %v359 = vunpack.c.l.bf16 %v347
        %v360 = vunpack.c.h.bf16 %v347
        %v361 = vunpack.c.l.bf16 %v348
        %v362 = vunpack.c.h.bf16 %v348
        %v363 = vunpack.c.l.bf16 %v355
        %v364 = vunpack.c.l.bf16 %v358
        %v365 = vmul.f32 %v359, %v363
        %v366 = vmul.f32 %v360, %v364
        %v367 = vmul.f32 %v361, %v363
        %v368 = vmul.f32 %v362, %v364
        %v369 = vpack.c.bf16 %v367, %v365
        %v370 = vpack.c.bf16 %v368, %v366
        %v371 = vld [vmem:[%s3] sm:$0xf]
        %v372 = vld [vmem:[%s3 + $0x4] sm:$0xf]
        %v373 = vld [vmem:[#allocation2] sm:$0xff]
        %v374 = vld [vmem:[#allocation2 + $0x8] sm:$0xff]
        %s375 = scalar_lea.vmem %s3, 8
        %v376 = vld [vmem:[%s375] sm:$0xf]
        %v377 = vld [vmem:[%s375 + $0x4] sm:$0xf]
        %v380 = vunpack.c.l.b16 %v376
        %v381 = vunpack.c.l.b16 %v377
        %v382 = vpack.c.b16 %v381, %v380
        %v385 = vunpack.c.l.b16 %v373
        %v386 = vunpack.c.h.b16 %v373
        %v387 = vunpack.c.l.b16 %v374
        %v388 = vunpack.c.h.b16 %v374
        %v389 = vpack.c.b16 %v387, %v385
        %v390 = vpack.c.b16 %v388, %v386
        %391 = vrot.lane.b32.xlu0 %v389, 127
        %v392 = vpop.permute.xlu0 %391
        %393 = vrot.lane.b32.xlu0 %v390, 127
        %v394 = vpop.permute.xlu0 %393
        %vm395 = vcmask 1039360
        %v396 = vsel %vm395, %v392, %v394
        %vm399 = vcmask 130048
        %v401 = vsel %vm399, %v382, 0
        %403 = vmatpush.bf16.msra.mxu0 0
        %404 = vmatpush.bf16.msra.mxu0 0
        %405 = vmatpush.bf16.msra.mxu0 0
        %406 = vmatpush.bf16.msra.mxu0 0
        %407 = vmatpush.bf16.msra.mxu0 0
        %408 = vmatpush.bf16.msra.mxu0 0
        %409 = vmatpush.bf16.msra.mxu0 0
        %410 = vmatpush.bf16.msra.mxu0 %v396
        %411 = vmatmul.bf16.gmra.mxu0 %v401
        %v412 = vpop.f32.mrf.mxu0
        %v413 = vadd.f32 0.0, %v412
        %v414 = vpop.f32.mrf.mxu0
        %v415 = vadd.f32 0.0, %v414
        %416 = vdwg.mxu0
        %417 = vmatpush.bf16.msra.mxu0 0
        %418 = vmatpush.bf16.msra.mxu0 0
        %419 = vmatpush.bf16.msra.mxu0 0
        %420 = vmatpush.bf16.msra.mxu0 0
        %421 = vmatpush.bf16.msra.mxu0 0
        %422 = vmatpush.bf16.msra.mxu0 0
        %423 = vmatpush.bf16.msra.mxu0 0
        %424 = vmatpush.bf16.msra.mxu0 %v394
        %425 = vmatmul.bf16.gmra.mxu0 %v401
        %v426 = vpop.f32.mrf.mxu0
        %v427 = vadd.f32 0.0, %v426
        %v428 = vpop.f32.mrf.mxu0
        %v429 = vadd.f32 0.0, %v428
        %430 = vdwg.mxu0
        %v433 = vunpack.c.l.b16 %v371
        %v434 = vunpack.c.l.b16 %v372
        %v435 = vpack.c.b16 %v434, %v433
        %v437 = vsel %vm399, %v435, 0
        %439 = vmatpush.bf16.msra.mxu0 0
        %440 = vmatpush.bf16.msra.mxu0 0
        %441 = vmatpush.bf16.msra.mxu0 0
        %442 = vmatpush.bf16.msra.mxu0 0
        %443 = vmatpush.bf16.msra.mxu0 0
        %444 = vmatpush.bf16.msra.mxu0 0
        %445 = vmatpush.bf16.msra.mxu0 0
        %446 = vmatpush.bf16.msra.mxu0 %v369
        %447 = vmatmul.bf16.gmra.mxu0 %v437
        %v448 = vpop.f32.mrf.mxu0
        %v449 = vadd.f32 %v413, %v448
        %v450 = vpop.f32.mrf.mxu0
        %v451 = vadd.f32 %v415, %v450
        %452 = vdwg.mxu0
        %453 = vmatpush.bf16.msra.mxu0 0
        %454 = vmatpush.bf16.msra.mxu0 0
        %455 = vmatpush.bf16.msra.mxu0 0
        %456 = vmatpush.bf16.msra.mxu0 0
        %457 = vmatpush.bf16.msra.mxu0 0
        %458 = vmatpush.bf16.msra.mxu0 0
        %459 = vmatpush.bf16.msra.mxu0 0
        %460 = vmatpush.bf16.msra.mxu0 %v370
        %461 = vmatmul.bf16.gmra.mxu0 %v437
        %v462 = vpop.f32.mrf.mxu0
        %v463 = vadd.f32 %v427, %v462
        %v464 = vpop.f32.mrf.mxu0
        %v465 = vadd.f32 %v429, %v464
        %466 = vdwg.mxu0
        %468 = vst [vmem:[#allocation1] ss:$9 sm:$0xff] %v321
        %v469 = vld [vmem:[#allocation1] sm:$0xff]
        %v470 = vld [vmem:[#allocation1 + $0x9] sm:$0xff]
        %v471 = vpack.i.b16 %v469, %v469
        %v473 = vperm.slane %v471, 0
        %v474 = vpack.i.b16 %v470, %v470
        %v476 = vperm.slane %v474, 0
        %v477 = vunpack.c.l.bf16 %v373
        %v478 = vunpack.c.h.bf16 %v373
        %v479 = vunpack.c.l.bf16 %v374
        %v480 = vunpack.c.h.bf16 %v374
        %v481 = vunpack.c.l.bf16 %v473
        %v482 = vunpack.c.l.bf16 %v476
        %485 = vrot.lane.b32.xlu0 %v481, 2
        %v486 = vpop.permute.xlu0 %485
        %487 = vrot.lane.b32.xlu0 %v482, 2
        %v488 = vpop.permute.xlu0 %487
        %vm489 = vcmask 15360
        %v490 = vsel %vm489, %v486, %v488
        %v493 = vmul.f32 %v477, %v486
        %v494 = vmul.f32 %v478, %v490
        %v495 = vmul.f32 %v479, %v486
        %v496 = vmul.f32 %v480, %v490
        %v497 = vpack.c.bf16 %v495, %v493
        %v498 = vpack.c.bf16 %v496, %v494
        %s499 = scalar_lea.vmem %s3, 16
        %v500 = vld [vmem:[%s499] sm:$0xf]
        %v501 = vld [vmem:[%s499 + $0x4] sm:$0xf]
        %v504 = vunpack.c.l.b16 %v500
        %v505 = vunpack.c.l.b16 %v501
        %v506 = vpack.c.b16 %v505, %v504
        %509 = vrot.lane.b32.xlu0 %v497, 126
        %v510 = vpop.permute.xlu0 %509
        %511 = vrot.lane.b32.xlu0 %v498, 126
        %v512 = vpop.permute.xlu0 %511
        %vm513 = vcmask 1031168
        %v514 = vsel %vm513, %v510, %v512
        %v518 = vsel %vm399, %v506, 0
        %520 = vmatpush.bf16.msra.mxu0 0
        %521 = vmatpush.bf16.msra.mxu0 0
        %522 = vmatpush.bf16.msra.mxu0 0
        %523 = vmatpush.bf16.msra.mxu0 0
        %524 = vmatpush.bf16.msra.mxu0 0
        %525 = vmatpush.bf16.msra.mxu0 0
        %526 = vmatpush.bf16.msra.mxu0 0
        %527 = vmatpush.bf16.msra.mxu0 %v514
        %528 = vmatmul.bf16.gmra.mxu0 %v518
        %v529 = vpop.f32.mrf.mxu0
        %v530 = vadd.f32 0.0, %v529
        %v531 = vpop.f32.mrf.mxu0
        %v532 = vadd.f32 0.0, %v531
        %533 = vdwg.mxu0
        %534 = vmatpush.bf16.msra.mxu0 0
        %535 = vmatpush.bf16.msra.mxu0 0
        %536 = vmatpush.bf16.msra.mxu0 0
        %537 = vmatpush.bf16.msra.mxu0 0
        %538 = vmatpush.bf16.msra.mxu0 0
        %539 = vmatpush.bf16.msra.mxu0 0
        %540 = vmatpush.bf16.msra.mxu0 0
        %541 = vmatpush.bf16.msra.mxu0 %v512
        %542 = vmatmul.bf16.gmra.mxu0 %v518
        %v543 = vpop.f32.mrf.mxu0
        %v544 = vadd.f32 0.0, %v543
        %v545 = vpop.f32.mrf.mxu0
        %v546 = vadd.f32 0.0, %v545
        %547 = vdwg.mxu0
        %v548 = vadd.f32 %v449, %v530
        %v549 = vadd.f32 %v463, %v544
        %v550 = vadd.f32 %v451, %v532
        %v551 = vadd.f32 %v465, %v546
        %v552 = vld [vmem:[#allocation2] sm:$0xff]
        %v553 = vld [vmem:[#allocation2 + $0x8] sm:$0xff]
        %v554 = vunpack.c.l.bf16 %v552
        %v555 = vunpack.c.h.bf16 %v552
        %v556 = vunpack.c.l.bf16 %v553
        %v557 = vunpack.c.h.bf16 %v553
        %560 = vrot.lane.b32.xlu0 %v363, 16
        %v561 = vpop.permute.xlu0 %560
        %562 = vrot.lane.b32.xlu0 %v364, 16
        %v563 = vpop.permute.xlu0 %562
        %v564 = vsel %vm399, %v561, %v563
        %v567 = vmul.f32 %v554, %v561
        %v568 = vmul.f32 %v555, %v564
        %v569 = vmul.f32 %v556, %v561
        %v570 = vmul.f32 %v557, %v564
        %v571 = vpack.c.bf16 %v569, %v567
        %v572 = vpack.c.bf16 %v570, %v568
        %s573 = scalar_lea.vmem %s3, 24
        %v574 = vld [vmem:[%s573] sm:$0xf]
        %v575 = vld [vmem:[%s573 + $0x4] sm:$0xf]
        %v578 = vunpack.c.l.b16 %v574
        %v579 = vunpack.c.l.b16 %v575
        %v580 = vpack.c.b16 %v579, %v578
        %583 = vrot.lane.b32.xlu0 %v571, 112
        %v584 = vpop.permute.xlu0 %583
        %585 = vrot.lane.b32.xlu0 %v572, 112
        %v586 = vpop.permute.xlu0 %585
        %vm587 = vcmask 916480
        %v588 = vsel %vm587, %v584, %v586
        %v592 = vsel %vm399, %v580, 0
        %594 = vmatpush.bf16.msra.mxu0 0
        %595 = vmatpush.bf16.msra.mxu0 0
        %596 = vmatpush.bf16.msra.mxu0 0
        %597 = vmatpush.bf16.msra.mxu0 0
        %598 = vmatpush.bf16.msra.mxu0 0
        %599 = vmatpush.bf16.msra.mxu0 0
        %600 = vmatpush.bf16.msra.mxu0 0
        %601 = vmatpush.bf16.msra.mxu0 %v588
        %602 = vmatmul.bf16.gmra.mxu0 %v592
        %v603 = vpop.f32.mrf.mxu0
        %v604 = vadd.f32 0.0, %v603
        %v605 = vpop.f32.mrf.mxu0
        %v606 = vadd.f32 0.0, %v605
        %607 = vdwg.mxu0
        %608 = vmatpush.bf16.msra.mxu0 0
        %609 = vmatpush.bf16.msra.mxu0 0
        %610 = vmatpush.bf16.msra.mxu0 0
        %611 = vmatpush.bf16.msra.mxu0 0
        %612 = vmatpush.bf16.msra.mxu0 0
        %613 = vmatpush.bf16.msra.mxu0 0
        %614 = vmatpush.bf16.msra.mxu0 0
        %615 = vmatpush.bf16.msra.mxu0 %v586
        %616 = vmatmul.bf16.gmra.mxu0 %v592
        %v617 = vpop.f32.mrf.mxu0
        %v618 = vadd.f32 0.0, %v617
        %v619 = vpop.f32.mrf.mxu0
        %v620 = vadd.f32 0.0, %v619
        %621 = vdwg.mxu0
        %v622 = vadd.f32 %v548, %v604
        %v623 = vadd.f32 %v549, %v618
        %v624 = vadd.f32 %v550, %v606
        %v625 = vadd.f32 %v551, %v620
        %s626 = scalar_lea.vmem %s3, 32
        %v627 = vld [vmem:[%s626] sm:$0xf]
        %v628 = vld [vmem:[%s626 + $0x4] sm:$0xf]
        %v631 = vunpack.c.l.b16 %v627
        %v632 = vunpack.c.l.b16 %v628
        %v633 = vpack.c.b16 %v632, %v631
        %v636 = vunpack.c.l.b16 %v552
        %v637 = vunpack.c.h.b16 %v552
        %v638 = vunpack.c.l.b16 %v553
        %v639 = vunpack.c.h.b16 %v553
        %v640 = vpack.c.b16 %v638, %v636
        %v641 = vpack.c.b16 %v639, %v637
        %642 = vrot.lane.b32.xlu0 %v640, 111
        %v643 = vpop.permute.xlu0 %642
        %644 = vrot.lane.b32.xlu0 %v641, 111
        %v645 = vpop.permute.xlu0 %644
        %vm646 = vcmask 908288
        %v647 = vsel %vm646, %v643, %v645
        %v651 = vsel %vm399, %v633, 0
        %653 = vmatpush.bf16.msra.mxu0 0
        %654 = vmatpush.bf16.msra.mxu0 0
        %655 = vmatpush.bf16.msra.mxu0 0
        %656 = vmatpush.bf16.msra.mxu0 0
        %657 = vmatpush.bf16.msra.mxu0 0
        %658 = vmatpush.bf16.msra.mxu0 0
        %659 = vmatpush.bf16.msra.mxu0 0
        %660 = vmatpush.bf16.msra.mxu0 %v647
        %661 = vmatmul.bf16.gmra.mxu0 %v651
        %v662 = vpop.f32.mrf.mxu0
        %v663 = vadd.f32 0.0, %v662
        %v664 = vpop.f32.mrf.mxu0
        %v665 = vadd.f32 0.0, %v664
        %666 = vdwg.mxu0
        %667 = vmatpush.bf16.msra.mxu0 0
        %668 = vmatpush.bf16.msra.mxu0 0
        %669 = vmatpush.bf16.msra.mxu0 0
        %670 = vmatpush.bf16.msra.mxu0 0
        %671 = vmatpush.bf16.msra.mxu0 0
        %672 = vmatpush.bf16.msra.mxu0 0
        %673 = vmatpush.bf16.msra.mxu0 0
        %674 = vmatpush.bf16.msra.mxu0 %v645
        %675 = vmatmul.bf16.gmra.mxu0 %v651
        %v676 = vpop.f32.mrf.mxu0
        %v677 = vadd.f32 0.0, %v676
        %v678 = vpop.f32.mrf.mxu0
        %v679 = vadd.f32 0.0, %v678
        %680 = vdwg.mxu0
        %v681 = vadd.f32 %v622, %v663
        %v682 = vadd.f32 %v623, %v677
        %v683 = vadd.f32 %v624, %v665
        %v684 = vadd.f32 %v625, %v679
        %685 = vrot.lane.b32.xlu0 %v481, 18
        %v686 = vpop.permute.xlu0 %685
        %687 = vrot.lane.b32.xlu0 %v482, 18
        %v688 = vpop.permute.xlu0 %687
        %vm689 = vcmask 146432
        %v690 = vsel %vm689, %v686, %v688
        %v693 = vmul.f32 %v554, %v686
        %v694 = vmul.f32 %v555, %v690
        %v695 = vmul.f32 %v556, %v686
        %v696 = vmul.f32 %v557, %v690
        %v697 = vpack.c.bf16 %v695, %v693
        %v698 = vpack.c.bf16 %v696, %v694
        %s699 = scalar_lea.vmem %s3, 40
        %v700 = vld [vmem:[%s699] sm:$0xf]
        %v701 = vld [vmem:[%s699 + $0x4] sm:$0xf]
        %v704 = vunpack.c.l.b16 %v700
        %v705 = vunpack.c.l.b16 %v701
        %v706 = vpack.c.b16 %v705, %v704
        %709 = vrot.lane.b32.xlu0 %v697, 110
        %v710 = vpop.permute.xlu0 %709
        %711 = vrot.lane.b32.xlu0 %v698, 110
        %v712 = vpop.permute.xlu0 %711
        %vm713 = vcmask 900096
        %v714 = vsel %vm713, %v710, %v712
        %v718 = vsel %vm399, %v706, 0
        %720 = vmatpush.bf16.msra.mxu0 0
        %721 = vmatpush.bf16.msra.mxu0 0
        %722 = vmatpush.bf16.msra.mxu0 0
        %723 = vmatpush.bf16.msra.mxu0 0
        %724 = vmatpush.bf16.msra.mxu0 0
        %725 = vmatpush.bf16.msra.mxu0 0
        %726 = vmatpush.bf16.msra.mxu0 0
        %727 = vmatpush.bf16.msra.mxu0 %v714
        %728 = vmatmul.bf16.gmra.mxu0 %v718
        %v729 = vpop.f32.mrf.mxu0
        %v730 = vadd.f32 0.0, %v729
        %v731 = vpop.f32.mrf.mxu0
        %v732 = vadd.f32 0.0, %v731
        %733 = vdwg.mxu0
        %734 = vmatpush.bf16.msra.mxu0 0
        %735 = vmatpush.bf16.msra.mxu0 0
        %736 = vmatpush.bf16.msra.mxu0 0
        %737 = vmatpush.bf16.msra.mxu0 0
        %738 = vmatpush.bf16.msra.mxu0 0
        %739 = vmatpush.bf16.msra.mxu0 0
        %740 = vmatpush.bf16.msra.mxu0 0
        %741 = vmatpush.bf16.msra.mxu0 %v712
        %742 = vmatmul.bf16.gmra.mxu0 %v718
        %v743 = vpop.f32.mrf.mxu0
        %v744 = vadd.f32 0.0, %v743
        %v745 = vpop.f32.mrf.mxu0
        %v746 = vadd.f32 0.0, %v745
        %747 = vdwg.mxu0
        %v748 = vadd.f32 %v681, %v730
        %v749 = vadd.f32 %v682, %v744
        %v750 = vadd.f32 %v683, %v732
        %v751 = vadd.f32 %v684, %v746
        %752 = vrot.lane.b32.xlu0 %v363, 32
        %v753 = vpop.permute.xlu0 %752
        %754 = vrot.lane.b32.xlu0 %v364, 32
        %v755 = vpop.permute.xlu0 %754
        %vm756 = vcmask 261120
        %v757 = vsel %vm756, %v753, %v755
        %v760 = vmul.f32 %v554, %v753
        %v761 = vmul.f32 %v555, %v757
        %v762 = vmul.f32 %v556, %v753
        %v763 = vmul.f32 %v557, %v757
        %v764 = vpack.c.bf16 %v762, %v760
        %v765 = vpack.c.bf16 %v763, %v761
        %s766 = scalar_lea.vmem %s3, 48
        %v767 = vld [vmem:[%s766] sm:$0xf]
        %v768 = vld [vmem:[%s766 + $0x4] sm:$0xf]
        %v771 = vunpack.c.l.b16 %v767
        %v772 = vunpack.c.l.b16 %v768
        %v773 = vpack.c.b16 %v772, %v771
        %776 = vrot.lane.b32.xlu0 %v764, 96
        %v777 = vpop.permute.xlu0 %776
        %778 = vrot.lane.b32.xlu0 %v765, 96
        %v779 = vpop.permute.xlu0 %778
        %vm780 = vcmask 785408
        %v781 = vsel %vm780, %v777, %v779
        %v785 = vsel %vm399, %v773, 0
        %787 = vmatpush.bf16.msra.mxu0 0
        %788 = vmatpush.bf16.msra.mxu0 0
        %789 = vmatpush.bf16.msra.mxu0 0
        %790 = vmatpush.bf16.msra.mxu0 0
        %791 = vmatpush.bf16.msra.mxu0 0
        %792 = vmatpush.bf16.msra.mxu0 0
        %793 = vmatpush.bf16.msra.mxu0 0
        %794 = vmatpush.bf16.msra.mxu0 %v781
        %795 = vmatmul.bf16.gmra.mxu0 %v785
        %v796 = vpop.f32.mrf.mxu0
        %v797 = vadd.f32 0.0, %v796
        %v798 = vpop.f32.mrf.mxu0
        %v799 = vadd.f32 0.0, %v798
        %800 = vdwg.mxu0
        %801 = vmatpush.bf16.msra.mxu0 0
        %802 = vmatpush.bf16.msra.mxu0 0
        %803 = vmatpush.bf16.msra.mxu0 0
        %804 = vmatpush.bf16.msra.mxu0 0
        %805 = vmatpush.bf16.msra.mxu0 0
        %806 = vmatpush.bf16.msra.mxu0 0
        %807 = vmatpush.bf16.msra.mxu0 0
        %808 = vmatpush.bf16.msra.mxu0 %v779
        %809 = vmatmul.bf16.gmra.mxu0 %v785
        %v810 = vpop.f32.mrf.mxu0
        %v811 = vadd.f32 0.0, %v810
        %v812 = vpop.f32.mrf.mxu0
        %v813 = vadd.f32 0.0, %v812
        %814 = vdwg.mxu0
        %v815 = vadd.f32 %v748, %v797
        %v816 = vadd.f32 %v749, %v811
        %v817 = vadd.f32 %v750, %v799
        %v818 = vadd.f32 %v751, %v813
        %s819 = scalar_lea.vmem %s3, 56
        %v820 = vld [vmem:[%s819] sm:$0xf]
        %v821 = vld [vmem:[%s819 + $0x4] sm:$0xf]
        %v824 = vunpack.c.l.b16 %v820
        %v825 = vunpack.c.l.b16 %v821
        %v826 = vpack.c.b16 %v825, %v824
        %827 = vrot.lane.b32.xlu0 %v640, 95
        %v828 = vpop.permute.xlu0 %827
        %829 = vrot.lane.b32.xlu0 %v641, 95
        %v830 = vpop.permute.xlu0 %829
        %vm831 = vcmask 777216
        %v832 = vsel %vm831, %v828, %v830
        %v836 = vsel %vm399, %v826, 0
        %838 = vmatpush.bf16.msra.mxu0 0
        %839 = vmatpush.bf16.msra.mxu0 0
        %840 = vmatpush.bf16.msra.mxu0 0
        %841 = vmatpush.bf16.msra.mxu0 0
        %842 = vmatpush.bf16.msra.mxu0 0
        %843 = vmatpush.bf16.msra.mxu0 0
        %844 = vmatpush.bf16.msra.mxu0 0
        %845 = vmatpush.bf16.msra.mxu0 %v832
        %846 = vmatmul.bf16.gmra.mxu0 %v836
        %v847 = vpop.f32.mrf.mxu0
        %v848 = vadd.f32 0.0, %v847
        %v849 = vpop.f32.mrf.mxu0
        %v850 = vadd.f32 0.0, %v849
        %851 = vdwg.mxu0
        %852 = vmatpush.bf16.msra.mxu0 0
        %853 = vmatpush.bf16.msra.mxu0 0
        %854 = vmatpush.bf16.msra.mxu0 0
        %855 = vmatpush.bf16.msra.mxu0 0
        %856 = vmatpush.bf16.msra.mxu0 0
        %857 = vmatpush.bf16.msra.mxu0 0
        %858 = vmatpush.bf16.msra.mxu0 0
        %859 = vmatpush.bf16.msra.mxu0 %v830
        %860 = vmatmul.bf16.gmra.mxu0 %v836
        %v861 = vpop.f32.mrf.mxu0
        %v862 = vadd.f32 0.0, %v861
        %v863 = vpop.f32.mrf.mxu0
        %v864 = vadd.f32 0.0, %v863
        %865 = vdwg.mxu0
        %v866 = vadd.f32 %v815, %v848
        %v867 = vadd.f32 %v816, %v862
        %v868 = vadd.f32 %v817, %v850
        %v869 = vadd.f32 %v818, %v864
        %870 = vrot.lane.b32.xlu0 %v481, 34
        %v871 = vpop.permute.xlu0 %870
        %872 = vrot.lane.b32.xlu0 %v482, 34
        %v873 = vpop.permute.xlu0 %872
        %vm874 = vcmask 277504
        %v875 = vsel %vm874, %v871, %v873
        %v878 = vmul.f32 %v554, %v871
        %v879 = vmul.f32 %v555, %v875
        %v880 = vmul.f32 %v556, %v871
        %v881 = vmul.f32 %v557, %v875
        %v882 = vpack.c.bf16 %v880, %v878
        %v883 = vpack.c.bf16 %v881, %v879
        %s884 = scalar_lea.vmem %s3, 64
        %v885 = vld [vmem:[%s884] sm:$0xf]
        %v886 = vld [vmem:[%s884 + $0x4] sm:$0xf]
        %v889 = vunpack.c.l.b16 %v885
        %v890 = vunpack.c.l.b16 %v886
        %v891 = vpack.c.b16 %v890, %v889
        %894 = vrot.lane.b32.xlu0 %v882, 94
        %v895 = vpop.permute.xlu0 %894
        %896 = vrot.lane.b32.xlu0 %v883, 94
        %v897 = vpop.permute.xlu0 %896
        %vm898 = vcmask 769024
        %v899 = vsel %vm898, %v895, %v897
        %v903 = vsel %vm399, %v891, 0
        %905 = vmatpush.bf16.msra.mxu0 0
        %906 = vmatpush.bf16.msra.mxu0 0
        %907 = vmatpush.bf16.msra.mxu0 0
        %908 = vmatpush.bf16.msra.mxu0 0
        %909 = vmatpush.bf16.msra.mxu0 0
        %910 = vmatpush.bf16.msra.mxu0 0
        %911 = vmatpush.bf16.msra.mxu0 0
        %912 = vmatpush.bf16.msra.mxu0 %v899
        %913 = vmatmul.bf16.gmra.mxu0 %v903
        %v914 = vpop.f32.mrf.mxu0
        %v915 = vadd.f32 0.0, %v914
        %v916 = vpop.f32.mrf.mxu0
        %v917 = vadd.f32 0.0, %v916
        %918 = vdwg.mxu0
        %919 = vmatpush.bf16.msra.mxu0 0
        %920 = vmatpush.bf16.msra.mxu0 0
        %921 = vmatpush.bf16.msra.mxu0 0
        %922 = vmatpush.bf16.msra.mxu0 0
        %923 = vmatpush.bf16.msra.mxu0 0
        %924 = vmatpush.bf16.msra.mxu0 0
        %925 = vmatpush.bf16.msra.mxu0 0
        %926 = vmatpush.bf16.msra.mxu0 %v897
        %927 = vmatmul.bf16.gmra.mxu0 %v903
        %v928 = vpop.f32.mrf.mxu0
        %v929 = vadd.f32 0.0, %v928
        %v930 = vpop.f32.mrf.mxu0
        %v931 = vadd.f32 0.0, %v930
        %932 = vdwg.mxu0
        %v933 = vadd.f32 %v866, %v915
        %v934 = vadd.f32 %v867, %v929
        %v935 = vadd.f32 %v868, %v917
        %v936 = vadd.f32 %v869, %v931
        %v937 = vld [vmem:[%s4] sm:$0xff]
        %v938 = vld [vmem:[%s4 + $0x8] sm:$0xff]
        %940 = vset.pattern.permute.xlu0 0
        %941 = vperm.xlu0 %940, %v937
        %v942 = vpop.permute.xlu0 %941
        %945 = vset.pattern.permute.xlu0 0
        %946 = vperm.xlu0 %945, %v938
        %v947 = vpop.permute.xlu0 %946
        %v949 = vadd.f32 %v933, %v942
        %v950 = vadd.f32 %v934, %v942
        %v951 = vadd.f32 %v935, %v947
        %v952 = vadd.f32 %v936, %v947
        %v953 = vmul.f32 %v949, 0.5
        %v954 = vmul.f32 %v950, 0.5
        %v955 = vmul.f32 %v951, 0.5
        %v956 = vmul.f32 %v952, 0.5
        %v957 = vmul.f32 %v949, 0.70710677
        %v958 = vmul.f32 %v950, 0.70710677
        %v959 = vmul.f32 %v951, 0.70710677
        %v960 = vmul.f32 %v952, 0.70710677
        %v961 = vand.u32 2147483647, %v957
        %v962 = vand.u32 2147483647, %v958
        %v963 = vand.u32 2147483647, %v959
        %v964 = vand.u32 2147483647, %v960
        %v965 = vmul.f32 %v961, 0.3275911
        %v966 = vmul.f32 %v962, 0.3275911
        %v967 = vmul.f32 %v963, 0.3275911
        %v968 = vmul.f32 %v964, 0.3275911
        %v969 = vadd.f32 %v965, 1.0
        %v970 = vadd.f32 %v966, 1.0
        %v971 = vadd.f32 %v967, 1.0
        %v972 = vadd.f32 %v968, 1.0
        %v973 = vrcp.pop %v969
        %v974 = vmul.f32 %v969, %v973
        %v975 = vsub.f32 1.0, %v974
        %v976 = vmul.f32 %v973, %v975
        %v977 = vadd.f32 %v973, %v976
        %vm978 = vweird.f32 %v969
        %vm979 = vweird.f32 %v973
        %vm980 = vmor %vm978, %vm979
        %v981 = vsel %vm980, %v973, %v977
        %v982 = vand.u32 2147483647, %v969
        %vm983 = vcmp.eq.f32.partialorder %v982, 8.507059e+37
        %v984 = vand.u32 %v969, 2147483648
        %v985 = vor.u32 1.1754944e-38, %v984
        %v986 = vsel %vm983, %v985, %v981
        %v987 = vmul.f32 1.0, %v986
        %v988 = vrcp.pop %v970
        %v989 = vmul.f32 %v970, %v988
        %v990 = vsub.f32 1.0, %v989
        %v991 = vmul.f32 %v988, %v990
        %v992 = vadd.f32 %v988, %v991
        %vm993 = vweird.f32 %v970
        %vm994 = vweird.f32 %v988
        %vm995 = vmor %vm993, %vm994
        %v996 = vsel %vm995, %v988, %v992
        %v997 = vand.u32 2147483647, %v970
        %vm998 = vcmp.eq.f32.partialorder %v997, 8.507059e+37
        %v999 = vand.u32 %v970, 2147483648
        %v1000 = vor.u32 1.1754944e-38, %v999
        %v1001 = vsel %vm998, %v1000, %v996
        %v1002 = vmul.f32 1.0, %v1001
        %v1003 = vrcp.pop %v971
        %v1004 = vmul.f32 %v971, %v1003
        %v1005 = vsub.f32 1.0, %v1004
        %v1006 = vmul.f32 %v1003, %v1005
        %v1007 = vadd.f32 %v1003, %v1006
        %vm1008 = vweird.f32 %v971
        %vm1009 = vweird.f32 %v1003
        %vm1010 = vmor %vm1008, %vm1009
        %v1011 = vsel %vm1010, %v1003, %v1007
        %v1012 = vand.u32 2147483647, %v971
        %vm1013 = vcmp.eq.f32.partialorder %v1012, 8.507059e+37
        %v1014 = vand.u32 %v971, 2147483648
        %v1015 = vor.u32 1.1754944e-38, %v1014
        %v1016 = vsel %vm1013, %v1015, %v1011
        %v1017 = vmul.f32 1.0, %v1016
        %v1018 = vrcp.pop %v972
        %v1019 = vmul.f32 %v972, %v1018
        %v1020 = vsub.f32 1.0, %v1019
        %v1021 = vmul.f32 %v1018, %v1020
        %v1022 = vadd.f32 %v1018, %v1021
        %vm1023 = vweird.f32 %v972
        %vm1024 = vweird.f32 %v1018
        %vm1025 = vmor %vm1023, %vm1024
        %v1026 = vsel %vm1025, %v1018, %v1022
        %v1027 = vand.u32 2147483647, %v972
        %vm1028 = vcmp.eq.f32.partialorder %v1027, 8.507059e+37
        %v1029 = vand.u32 %v972, 2147483648
        %v1030 = vor.u32 1.1754944e-38, %v1029
        %v1031 = vsel %vm1028, %v1030, %v1026
        %v1032 = vmul.f32 1.0, %v1031
        %v1033 = vmul.f32 %v987, 1.0614054
        %v1034 = vmul.f32 %v1002, 1.0614054
        %v1035 = vmul.f32 %v1017, 1.0614054
        %v1036 = vmul.f32 %v1032, 1.0614054
        %v1037 = vadd.f32 %v1033, -1.4531521
        %v1038 = vadd.f32 %v1034, -1.4531521
        %v1039 = vadd.f32 %v1035, -1.4531521
        %v1040 = vadd.f32 %v1036, -1.4531521
        %v1041 = vmul.f32 %v1037, %v987
        %v1042 = vmul.f32 %v1038, %v1002
        %v1043 = vmul.f32 %v1039, %v1017
        %v1044 = vmul.f32 %v1040, %v1032
        %v1045 = vadd.f32 %v1041, 1.4214138
        %v1046 = vadd.f32 %v1042, 1.4214138
        %v1047 = vadd.f32 %v1043, 1.4214138
        %v1048 = vadd.f32 %v1044, 1.4214138
        %v1049 = vmul.f32 %v1045, %v987
        %v1050 = vmul.f32 %v1046, %v1002
        %v1051 = vmul.f32 %v1047, %v1017
        %v1052 = vmul.f32 %v1048, %v1032
        %v1053 = vadd.f32 %v1049, -0.28449672
        %v1054 = vadd.f32 %v1050, -0.28449672
        %v1055 = vadd.f32 %v1051, -0.28449672
        %v1056 = vadd.f32 %v1052, -0.28449672
        %v1057 = vmul.f32 %v1053, %v987
        %v1058 = vmul.f32 %v1054, %v1002
        %v1059 = vmul.f32 %v1055, %v1017
        %v1060 = vmul.f32 %v1056, %v1032
        %v1061 = vadd.f32 %v1057, 0.2548296
        %v1062 = vadd.f32 %v1058, 0.2548296
        %v1063 = vadd.f32 %v1059, 0.2548296
        %v1064 = vadd.f32 %v1060, 0.2548296
        %v1065 = vmul.f32 %v1061, %v987
        %v1066 = vmul.f32 %v1062, %v1002
        %v1067 = vmul.f32 %v1063, %v1017
        %v1068 = vmul.f32 %v1064, %v1032
        %v1069 = vsub.f32 0.0, %v961
        %v1070 = vsub.f32 0.0, %v962
        %v1071 = vsub.f32 0.0, %v963
        %v1072 = vsub.f32 0.0, %v964
        %v1073 = vmul.f32 %v1069, %v961
        %v1074 = vmul.f32 %v1070, %v962
        %v1075 = vmul.f32 %v1071, %v963
        %v1076 = vmul.f32 %v1072, %v964
        %v1077 = vmul.f32 %v1073, 1.442695
        %v1078 = vpow.pop %v1077
        %v1079 = vmul.f32 %v1074, 1.442695
        %v1080 = vpow.pop %v1079
        %v1081 = vmul.f32 %v1075, 1.442695
        %v1082 = vpow.pop %v1081
        %v1083 = vmul.f32 %v1076, 1.442695
        %v1084 = vpow.pop %v1083
        %v1085 = vmul.f32 %v1065, %v1078
        %v1086 = vmul.f32 %v1066, %v1080
        %v1087 = vmul.f32 %v1067, %v1082
        %v1088 = vmul.f32 %v1068, %v1084
        %v1089 = vsub.f32 1.0, %v1085
        %v1090 = vsub.f32 1.0, %v1086
        %v1091 = vsub.f32 1.0, %v1087
        %v1092 = vsub.f32 1.0, %v1088
        %vm1093 = vcmp.lt.f32.partialorder %v957, 0.0
        %vm1094 = vcmp.lt.f32.partialorder %v958, 0.0
        %vm1095 = vcmp.lt.f32.partialorder %v959, 0.0
        %vm1096 = vcmp.lt.f32.partialorder %v960, 0.0
        %v1097 = vsub.f32 0.0, %v1089
        %v1098 = vsub.f32 0.0, %v1090
        %v1099 = vsub.f32 0.0, %v1091
        %v1100 = vsub.f32 0.0, %v1092
        %v1101 = vsel %vm1093, %v1097, %v1089
        %v1102 = vsel %vm1094, %v1098, %v1090
        %v1103 = vsel %vm1095, %v1099, %v1091
        %v1104 = vsel %vm1096, %v1100, %v1092
        %v1105 = vadd.f32 %v1101, 1.0
        %v1106 = vadd.f32 %v1102, 1.0
        %v1107 = vadd.f32 %v1103, 1.0
        %v1108 = vadd.f32 %v1104, 1.0
        %v1109 = vmul.f32 %v953, %v1105
        %v1110 = vmul.f32 %v954, %v1106
        %v1111 = vmul.f32 %v955, %v1107
        %v1112 = vmul.f32 %v956, %v1108
        %v1113 = vld [vmem:[%s317] sm:$0x3]
        %v1115 = vperm.slane %v1113, 0
        %v1116 = vperm.slane %v1113, 1
        %v1119 = vmul.f32 %v1109, %v1115
        %v1120 = vmul.f32 %v1110, %v1116
        %v1121 = vmul.f32 %v1111, %v1115
        %v1122 = vmul.f32 %v1112, %v1116
        %vm1123 = vcmask 277508
        %vm1124 = vmor %vm1123, %vm324
        %1125 = vst.msk [vmem:[#allocation3] sm:$0xff] %vm1124, 0
        %1126 = vst.msk [vmem:[#allocation3 + $0x8] sm:$0xff] %vm1124, 0
        %v1127 = vpack.c.bf16 %v1120, %v1119
        %v1128 = vpack.c.bf16 %v1122, %v1121
        %1131 = vrot.lane.b32.xlu0 %v1127, 1
        %v1132 = vpop.permute.xlu0 %1131
        %1133 = vrot.lane.b32.xlu0 %v1128, 1
        %v1134 = vpop.permute.xlu0 %1133
        %v1135 = vrot.slane %v1132, 4
        %v1136 = vrot.slane %v1134, 4
        %v1137 = vsel %vm337, %v1135, %v1132
        %v1138 = vsel %vm337, %v1136, %v1134
        %vm1141 = vcmask 269316
        %vm1142 = vmor %vm1141, %vm342
        %1143 = vst.msk [vmem:[#allocation3] sm:$0xff] %vm1142, %v1137
        %1144 = vst.msk [vmem:[#allocation3 + $0x8] sm:$0xff] %vm1142, %v1138
        %v1145 = vld [vmem:[#allocation3] sm:$0xf]
        %v1146 = vld [vmem:[#allocation3 + $0x8] sm:$0xf]
        %v1147 = vpack.i.b16 %v319, %v319
        %v1149 = vperm.slane %v1147, 0
        %v1150 = vunpack.c.l.bf16 %v1145
        %v1151 = vunpack.c.l.bf16 %v1146
        %v1152 = vunpack.c.l.bf16 %v1149
        %v1153 = vmul.f32 %v1150, %v1152
        %v1154 = vmul.f32 %v1151, %v1152
        %v1155 = vpack.c.bf16 %v1154, %v1153
        %v1156 = vld [vmem:[%s5] sm:$0xf]
        %v1157 = vld [vmem:[%s5 + $0x4] sm:$0xf]
        %v1158 = vld [vmem:[#allocation3] sm:$0xff]
        %v1159 = vld [vmem:[#allocation3 + $0x8] sm:$0xff]
        %s1160 = scalar_lea.vmem %s5, 8
        %v1161 = vld [vmem:[%s1160] sm:$0xf]
        %v1162 = vld [vmem:[%s1160 + $0x4] sm:$0xf]
        %v1165 = vunpack.c.l.b16 %v1161
        %v1166 = vunpack.c.l.b16 %v1162
        %v1167 = vpack.c.b16 %v1166, %v1165
        %v1170 = vunpack.c.l.b16 %v1158
        %v1171 = vunpack.c.h.b16 %v1158
        %v1172 = vunpack.c.l.b16 %v1159
        %v1173 = vunpack.c.h.b16 %v1159
        %v1174 = vpack.c.b16 %v1172, %v1170
        %v1175 = vpack.c.b16 %v1173, %v1171
        %1176 = vrot.lane.b32.xlu0 %v1174, 127
        %v1177 = vpop.permute.xlu0 %1176
        %1178 = vrot.lane.b32.xlu0 %v1175, 127
        %v1179 = vpop.permute.xlu0 %1178
        %v1180 = vsel %vm395, %v1177, %v1179
        %v1183 = vsel %vm399, %v1167, 0
        %1185 = vmatpush.bf16.msra.mxu0 0
        %1186 = vmatpush.bf16.msra.mxu0 0
        %1187 = vmatpush.bf16.msra.mxu0 0
        %1188 = vmatpush.bf16.msra.mxu0 0
        %1189 = vmatpush.bf16.msra.mxu0 0
        %1190 = vmatpush.bf16.msra.mxu0 0
        %1191 = vmatpush.bf16.msra.mxu0 0
        %1192 = vmatpush.bf16.msra.mxu0 %v1180
        %1193 = vmatmul.bf16.gmra.mxu0 %v1183
        %v1194 = vpop.f32.mrf.mxu0
        %v1195 = vadd.f32 0.0, %v1194
        %v1196 = vpop.f32.mrf.mxu0
        %v1197 = vadd.f32 0.0, %v1196
        %1198 = vdwg.mxu0
        %v1201 = vunpack.c.l.b16 %v1156
        %v1202 = vunpack.c.l.b16 %v1157
        %v1203 = vpack.c.b16 %v1202, %v1201
        %v1205 = vsel %vm399, %v1203, 0
        %1207 = vmatpush.bf16.msra.mxu0 0
        %1208 = vmatpush.bf16.msra.mxu0 0
        %1209 = vmatpush.bf16.msra.mxu0 0
        %1210 = vmatpush.bf16.msra.mxu0 0
        %1211 = vmatpush.bf16.msra.mxu0 0
        %1212 = vmatpush.bf16.msra.mxu0 0
        %1213 = vmatpush.bf16.msra.mxu0 0
        %1214 = vmatpush.bf16.msra.mxu0 %v1155
        %1215 = vmatmul.bf16.gmra.mxu0 %v1205
        %v1216 = vpop.f32.mrf.mxu0
        %v1217 = vadd.f32 %v1195, %v1216
        %v1218 = vpop.f32.mrf.mxu0
        %v1219 = vadd.f32 %v1197, %v1218
        %1220 = vdwg.mxu0
        %v1221 = vpack.i.b16 %v321, %v321
        %v1223 = vperm.slane %v1221, 0
        %v1224 = vunpack.c.l.bf16 %v1158
        %v1225 = vunpack.c.h.bf16 %v1158
        %v1226 = vunpack.c.l.bf16 %v1159
        %v1227 = vunpack.c.h.bf16 %v1159
        %v1228 = vunpack.c.l.bf16 %v1223
        %1230 = vrot.lane.b32.xlu0 %v1228, 2
        %v1231 = vpop.permute.xlu0 %1230
        %v1233 = vmul.f32 %v1224, %v1231
        %v1234 = vmul.f32 %v1225, %v1231
        %v1235 = vmul.f32 %v1226, %v1231
        %v1236 = vmul.f32 %v1227, %v1231
        %v1237 = vpack.c.bf16 %v1235, %v1233
        %v1238 = vpack.c.bf16 %v1236, %v1234
        %s1239 = scalar_lea.vmem %s5, 16
        %v1240 = vld [vmem:[%s1239] sm:$0xf]
        %v1241 = vld [vmem:[%s1239 + $0x4] sm:$0xf]
        %v1244 = vunpack.c.l.b16 %v1240
        %v1245 = vunpack.c.l.b16 %v1241
        %v1246 = vpack.c.b16 %v1245, %v1244
        %1249 = vrot.lane.b32.xlu0 %v1237, 126
        %v1250 = vpop.permute.xlu0 %1249
        %1251 = vrot.lane.b32.xlu0 %v1238, 126
        %v1252 = vpop.permute.xlu0 %1251
        %v1253 = vsel %vm513, %v1250, %v1252
        %v1256 = vsel %vm399, %v1246, 0
        %1258 = vmatpush.bf16.msra.mxu0 0
        %1259 = vmatpush.bf16.msra.mxu0 0
        %1260 = vmatpush.bf16.msra.mxu0 0
        %1261 = vmatpush.bf16.msra.mxu0 0
        %1262 = vmatpush.bf16.msra.mxu0 0
        %1263 = vmatpush.bf16.msra.mxu0 0
        %1264 = vmatpush.bf16.msra.mxu0 0
        %1265 = vmatpush.bf16.msra.mxu0 %v1253
        %1266 = vmatmul.bf16.gmra.mxu0 %v1256
        %v1267 = vpop.f32.mrf.mxu0
        %v1268 = vadd.f32 0.0, %v1267
        %v1269 = vpop.f32.mrf.mxu0
        %v1270 = vadd.f32 0.0, %v1269
        %1271 = vdwg.mxu0
        %v1272 = vadd.f32 %v1217, %v1268
        %v1273 = vadd.f32 %v1219, %v1270
        %1275 = vrot.lane.b32.xlu0 %v1152, 16
        %v1276 = vpop.permute.xlu0 %1275
        %v1278 = vmul.f32 %v1224, %v1276
        %v1279 = vmul.f32 %v1225, %v1276
        %v1280 = vmul.f32 %v1226, %v1276
        %v1281 = vmul.f32 %v1227, %v1276
        %v1282 = vpack.c.bf16 %v1280, %v1278
        %v1283 = vpack.c.bf16 %v1281, %v1279
        %s1284 = scalar_lea.vmem %s5, 24
        %v1285 = vld [vmem:[%s1284] sm:$0xf]
        %v1286 = vld [vmem:[%s1284 + $0x4] sm:$0xf]
        %v1289 = vunpack.c.l.b16 %v1285
        %v1290 = vunpack.c.l.b16 %v1286
        %v1291 = vpack.c.b16 %v1290, %v1289
        %1294 = vrot.lane.b32.xlu0 %v1282, 112
        %v1295 = vpop.permute.xlu0 %1294
        %1296 = vrot.lane.b32.xlu0 %v1283, 112
        %v1297 = vpop.permute.xlu0 %1296
        %v1298 = vsel %vm587, %v1295, %v1297
        %v1301 = vsel %vm399, %v1291, 0
        %1303 = vmatpush.bf16.msra.mxu0 0
        %1304 = vmatpush.bf16.msra.mxu0 0
        %1305 = vmatpush.bf16.msra.mxu0 0
        %1306 = vmatpush.bf16.msra.mxu0 0
        %1307 = vmatpush.bf16.msra.mxu0 0
        %1308 = vmatpush.bf16.msra.mxu0 0
        %1309 = vmatpush.bf16.msra.mxu0 0
        %1310 = vmatpush.bf16.msra.mxu0 %v1298
        %1311 = vmatmul.bf16.gmra.mxu0 %v1301
        %v1312 = vpop.f32.mrf.mxu0
        %v1313 = vadd.f32 0.0, %v1312
        %v1314 = vpop.f32.mrf.mxu0
        %v1315 = vadd.f32 0.0, %v1314
        %1316 = vdwg.mxu0
        %v1317 = vadd.f32 %v1272, %v1313
        %v1318 = vadd.f32 %v1273, %v1315
        %s1319 = scalar_lea.vmem %s5, 32
        %v1320 = vld [vmem:[%s1319] sm:$0xf]
        %v1321 = vld [vmem:[%s1319 + $0x4] sm:$0xf]
        %v1324 = vunpack.c.l.b16 %v1320
        %v1325 = vunpack.c.l.b16 %v1321
        %v1326 = vpack.c.b16 %v1325, %v1324
        %1327 = vrot.lane.b32.xlu0 %v1174, 111
        %v1328 = vpop.permute.xlu0 %1327
        %1329 = vrot.lane.b32.xlu0 %v1175, 111
        %v1330 = vpop.permute.xlu0 %1329
        %v1331 = vsel %vm646, %v1328, %v1330
        %v1334 = vsel %vm399, %v1326, 0
        %1336 = vmatpush.bf16.msra.mxu0 0
        %1337 = vmatpush.bf16.msra.mxu0 0
        %1338 = vmatpush.bf16.msra.mxu0 0
        %1339 = vmatpush.bf16.msra.mxu0 0
        %1340 = vmatpush.bf16.msra.mxu0 0
        %1341 = vmatpush.bf16.msra.mxu0 0
        %1342 = vmatpush.bf16.msra.mxu0 0
        %1343 = vmatpush.bf16.msra.mxu0 %v1331
        %1344 = vmatmul.bf16.gmra.mxu0 %v1334
        %v1345 = vpop.f32.mrf.mxu0
        %v1346 = vadd.f32 0.0, %v1345
        %v1347 = vpop.f32.mrf.mxu0
        %v1348 = vadd.f32 0.0, %v1347
        %1349 = vdwg.mxu0
        %v1350 = vadd.f32 %v1317, %v1346
        %v1351 = vadd.f32 %v1318, %v1348
        %1352 = vrot.lane.b32.xlu0 %v1228, 18
        %v1353 = vpop.permute.xlu0 %1352
        %v1355 = vmul.f32 %v1224, %v1353
        %v1356 = vmul.f32 %v1225, %v1353
        %v1357 = vmul.f32 %v1226, %v1353
        %v1358 = vmul.f32 %v1227, %v1353
        %v1359 = vpack.c.bf16 %v1357, %v1355
        %v1360 = vpack.c.bf16 %v1358, %v1356
        %s1361 = scalar_lea.vmem %s5, 40
        %v1362 = vld [vmem:[%s1361] sm:$0xf]
        %v1363 = vld [vmem:[%s1361 + $0x4] sm:$0xf]
        %v1366 = vunpack.c.l.b16 %v1362
        %v1367 = vunpack.c.l.b16 %v1363
        %v1368 = vpack.c.b16 %v1367, %v1366
        %1371 = vrot.lane.b32.xlu0 %v1359, 110
        %v1372 = vpop.permute.xlu0 %1371
        %1373 = vrot.lane.b32.xlu0 %v1360, 110
        %v1374 = vpop.permute.xlu0 %1373
        %v1375 = vsel %vm713, %v1372, %v1374
        %v1378 = vsel %vm399, %v1368, 0
        %1380 = vmatpush.bf16.msra.mxu0 0
        %1381 = vmatpush.bf16.msra.mxu0 0
        %1382 = vmatpush.bf16.msra.mxu0 0
        %1383 = vmatpush.bf16.msra.mxu0 0
        %1384 = vmatpush.bf16.msra.mxu0 0
        %1385 = vmatpush.bf16.msra.mxu0 0
        %1386 = vmatpush.bf16.msra.mxu0 0
        %1387 = vmatpush.bf16.msra.mxu0 %v1375
        %1388 = vmatmul.bf16.gmra.mxu0 %v1378
        %v1389 = vpop.f32.mrf.mxu0
        %v1390 = vadd.f32 0.0, %v1389
        %v1391 = vpop.f32.mrf.mxu0
        %v1392 = vadd.f32 0.0, %v1391
        %1393 = vdwg.mxu0
        %v1394 = vadd.f32 %v1350, %v1390
        %v1395 = vadd.f32 %v1351, %v1392
        %1396 = vrot.lane.b32.xlu0 %v1152, 32
        %v1397 = vpop.permute.xlu0 %1396
        %v1399 = vmul.f32 %v1224, %v1397
        %v1400 = vmul.f32 %v1225, %v1397
        %v1401 = vmul.f32 %v1226, %v1397
        %v1402 = vmul.f32 %v1227, %v1397
        %v1403 = vpack.c.bf16 %v1401, %v1399
        %v1404 = vpack.c.bf16 %v1402, %v1400
        %s1405 = scalar_lea.vmem %s5, 48
        %v1406 = vld [vmem:[%s1405] sm:$0xf]
        %v1407 = vld [vmem:[%s1405 + $0x4] sm:$0xf]
        %v1410 = vunpack.c.l.b16 %v1406
        %v1411 = vunpack.c.l.b16 %v1407
        %v1412 = vpack.c.b16 %v1411, %v1410
        %1415 = vrot.lane.b32.xlu0 %v1403, 96
        %v1416 = vpop.permute.xlu0 %1415
        %1417 = vrot.lane.b32.xlu0 %v1404, 96
        %v1418 = vpop.permute.xlu0 %1417
        %v1419 = vsel %vm780, %v1416, %v1418
        %v1422 = vsel %vm399, %v1412, 0
        %1424 = vmatpush.bf16.msra.mxu0 0
        %1425 = vmatpush.bf16.msra.mxu0 0
        %1426 = vmatpush.bf16.msra.mxu0 0
        %1427 = vmatpush.bf16.msra.mxu0 0
        %1428 = vmatpush.bf16.msra.mxu0 0
        %1429 = vmatpush.bf16.msra.mxu0 0
        %1430 = vmatpush.bf16.msra.mxu0 0
        %1431 = vmatpush.bf16.msra.mxu0 %v1419
        %1432 = vmatmul.bf16.gmra.mxu0 %v1422
        %v1433 = vpop.f32.mrf.mxu0
        %v1434 = vadd.f32 0.0, %v1433
        %v1435 = vpop.f32.mrf.mxu0
        %v1436 = vadd.f32 0.0, %v1435
        %1437 = vdwg.mxu0
        %v1438 = vadd.f32 %v1394, %v1434
        %v1439 = vadd.f32 %v1395, %v1436
        %s1440 = scalar_lea.vmem %s5, 56
        %v1441 = vld [vmem:[%s1440] sm:$0xf]
        %v1442 = vld [vmem:[%s1440 + $0x4] sm:$0xf]
        %v1445 = vunpack.c.l.b16 %v1441
        %v1446 = vunpack.c.l.b16 %v1442
        %v1447 = vpack.c.b16 %v1446, %v1445
        %1448 = vrot.lane.b32.xlu0 %v1174, 95
        %v1449 = vpop.permute.xlu0 %1448
        %1450 = vrot.lane.b32.xlu0 %v1175, 95
        %v1451 = vpop.permute.xlu0 %1450
        %v1452 = vsel %vm831, %v1449, %v1451
        %v1455 = vsel %vm399, %v1447, 0
        %1457 = vmatpush.bf16.msra.mxu0 0
        %1458 = vmatpush.bf16.msra.mxu0 0
        %1459 = vmatpush.bf16.msra.mxu0 0
        %1460 = vmatpush.bf16.msra.mxu0 0
        %1461 = vmatpush.bf16.msra.mxu0 0
        %1462 = vmatpush.bf16.msra.mxu0 0
        %1463 = vmatpush.bf16.msra.mxu0 0
        %1464 = vmatpush.bf16.msra.mxu0 %v1452
        %1465 = vmatmul.bf16.gmra.mxu0 %v1455
        %v1466 = vpop.f32.mrf.mxu0
        %v1467 = vadd.f32 0.0, %v1466
        %v1468 = vpop.f32.mrf.mxu0
        %v1469 = vadd.f32 0.0, %v1468
        %1470 = vdwg.mxu0
        %v1471 = vadd.f32 %v1438, %v1467
        %v1472 = vadd.f32 %v1439, %v1469
        %1473 = vrot.lane.b32.xlu0 %v1228, 34
        %v1474 = vpop.permute.xlu0 %1473
        %v1476 = vmul.f32 %v1224, %v1474
        %v1477 = vmul.f32 %v1225, %v1474
        %v1478 = vmul.f32 %v1226, %v1474
        %v1479 = vmul.f32 %v1227, %v1474
        %v1480 = vpack.c.bf16 %v1478, %v1476
        %v1481 = vpack.c.bf16 %v1479, %v1477
        %s1482 = scalar_lea.vmem %s5, 64
        %v1483 = vld [vmem:[%s1482] sm:$0xf]
        %v1484 = vld [vmem:[%s1482 + $0x4] sm:$0xf]
        %v1487 = vunpack.c.l.b16 %v1483
        %v1488 = vunpack.c.l.b16 %v1484
        %v1489 = vpack.c.b16 %v1488, %v1487
        %1492 = vrot.lane.b32.xlu0 %v1480, 94
        %v1493 = vpop.permute.xlu0 %1492
        %1494 = vrot.lane.b32.xlu0 %v1481, 94
        %v1495 = vpop.permute.xlu0 %1494
        %v1496 = vsel %vm898, %v1493, %v1495
        %v1499 = vsel %vm399, %v1489, 0
        %1501 = vmatpush.bf16.msra.mxu0 0
        %1502 = vmatpush.bf16.msra.mxu0 0
        %1503 = vmatpush.bf16.msra.mxu0 0
        %1504 = vmatpush.bf16.msra.mxu0 0
        %1505 = vmatpush.bf16.msra.mxu0 0
        %1506 = vmatpush.bf16.msra.mxu0 0
        %1507 = vmatpush.bf16.msra.mxu0 0
        %1508 = vmatpush.bf16.msra.mxu0 %v1496
        %1509 = vmatmul.bf16.gmra.mxu0 %v1499
        %v1510 = vpop.f32.mrf.mxu0
        %v1511 = vadd.f32 0.0, %v1510
        %v1512 = vpop.f32.mrf.mxu0
        %v1513 = vadd.f32 0.0, %v1512
        %1514 = vdwg.mxu0
        %v1515 = vadd.f32 %v1471, %v1511
        %v1516 = vadd.f32 %v1472, %v1513
        %v1517 = vld [vmem:[%s6] sm:$0xff]
        %v1518 = vld [vmem:[%s6 + $0x8] sm:$0xff]
        %1520 = vset.pattern.permute.xlu0 0
        %1521 = vperm.xlu0 %1520, %v1517
        %v1522 = vpop.permute.xlu0 %1521
        %1525 = vset.pattern.permute.xlu0 0
        %1526 = vperm.xlu0 %1525, %v1518
        %v1527 = vpop.permute.xlu0 %1526
        %v1529 = vadd.f32 %v1515, %v1522
        %v1530 = vadd.f32 %v1516, %v1527
        %v1531 = vmul.f32 %v1529, 0.5
        %v1532 = vmul.f32 %v1530, 0.5
        %v1533 = vmul.f32 %v1529, 0.70710677
        %v1534 = vmul.f32 %v1530, 0.70710677
        %v1535 = vand.u32 2147483647, %v1533
        %v1536 = vand.u32 2147483647, %v1534
        %v1537 = vmul.f32 %v1535, 0.3275911
        %v1538 = vmul.f32 %v1536, 0.3275911
        %v1539 = vadd.f32 %v1537, 1.0
        %v1540 = vadd.f32 %v1538, 1.0
        %v1541 = vrcp.pop %v1539
        %v1542 = vmul.f32 %v1539, %v1541
        %v1543 = vsub.f32 1.0, %v1542
        %v1544 = vmul.f32 %v1541, %v1543
        %v1545 = vadd.f32 %v1541, %v1544
        %vm1546 = vweird.f32 %v1539
        %vm1547 = vweird.f32 %v1541
        %vm1548 = vmor %vm1546, %vm1547
        %v1549 = vsel %vm1548, %v1541, %v1545
        %v1550 = vand.u32 2147483647, %v1539
        %vm1551 = vcmp.eq.f32.partialorder %v1550, 8.507059e+37
        %v1552 = vand.u32 %v1539, 2147483648
        %v1553 = vor.u32 1.1754944e-38, %v1552
        %v1554 = vsel %vm1551, %v1553, %v1549
        %v1555 = vmul.f32 1.0, %v1554
        %v1556 = vrcp.pop %v1540
        %v1557 = vmul.f32 %v1540, %v1556
        %v1558 = vsub.f32 1.0, %v1557
        %v1559 = vmul.f32 %v1556, %v1558
        %v1560 = vadd.f32 %v1556, %v1559
        %vm1561 = vweird.f32 %v1540
        %vm1562 = vweird.f32 %v1556
        %vm1563 = vmor %vm1561, %vm1562
        %v1564 = vsel %vm1563, %v1556, %v1560
        %v1565 = vand.u32 2147483647, %v1540
        %vm1566 = vcmp.eq.f32.partialorder %v1565, 8.507059e+37
        %v1567 = vand.u32 %v1540, 2147483648
        %v1568 = vor.u32 1.1754944e-38, %v1567
        %v1569 = vsel %vm1566, %v1568, %v1564
        %v1570 = vmul.f32 1.0, %v1569
        %v1571 = vmul.f32 %v1555, 1.0614054
        %v1572 = vmul.f32 %v1570, 1.0614054
        %v1573 = vadd.f32 %v1571, -1.4531521
        %v1574 = vadd.f32 %v1572, -1.4531521
        %v1575 = vmul.f32 %v1573, %v1555
        %v1576 = vmul.f32 %v1574, %v1570
        %v1577 = vadd.f32 %v1575, 1.4214138
        %v1578 = vadd.f32 %v1576, 1.4214138
        %v1579 = vmul.f32 %v1577, %v1555
        %v1580 = vmul.f32 %v1578, %v1570
        %v1581 = vadd.f32 %v1579, -0.28449672
        %v1582 = vadd.f32 %v1580, -0.28449672
        %v1583 = vmul.f32 %v1581, %v1555
        %v1584 = vmul.f32 %v1582, %v1570
        %v1585 = vadd.f32 %v1583, 0.2548296
        %v1586 = vadd.f32 %v1584, 0.2548296
        %v1587 = vmul.f32 %v1585, %v1555
        %v1588 = vmul.f32 %v1586, %v1570
        %v1589 = vsub.f32 0.0, %v1535
        %v1590 = vsub.f32 0.0, %v1536
        %v1591 = vmul.f32 %v1589, %v1535
        %v1592 = vmul.f32 %v1590, %v1536
        %v1593 = vmul.f32 %v1591, 1.442695
        %v1594 = vpow.pop %v1593
        %v1595 = vmul.f32 %v1592, 1.442695
        %v1596 = vpow.pop %v1595
        %v1597 = vmul.f32 %v1587, %v1594
        %v1598 = vmul.f32 %v1588, %v1596
        %v1599 = vsub.f32 1.0, %v1597
        %v1600 = vsub.f32 1.0, %v1598
        %vm1601 = vcmp.lt.f32.partialorder %v1533, 0.0
        %vm1602 = vcmp.lt.f32.partialorder %v1534, 0.0
        %v1603 = vsub.f32 0.0, %v1599
        %v1604 = vsub.f32 0.0, %v1600
        %v1605 = vsel %vm1601, %v1603, %v1599
        %v1606 = vsel %vm1602, %v1604, %v1600
        %v1607 = vadd.f32 %v1605, 1.0
        %v1608 = vadd.f32 %v1606, 1.0
        %v1609 = vmul.f32 %v1531, %v1607
        %v1610 = vmul.f32 %v1532, %v1608
        %1611 = vst [vmem:[%s304] sm:$0xff] %v1609
        %1612 = vst [vmem:[%s304 + $0x8] sm:$0xff] %v1610
        %s1613 = sand.u32 %s199, 1
        %s1614 = sand.u32 %s199, 1
        %s1615 = smul.addr %s1614, 16
        %s1616 = scalar_lea.vmem [#allocation4], %s1615
        // Predicated region
        $region49: #{fcabs_forward.6} parent=47 // pred_check
          %p1617 = pneg %p209
        $region50: #{fcabs_forward.6} parent=47 // pred_check_branch
          %1619 = sbr.rel (%p1617) target = $region52
        $region51: #{fcabs_forward.6} parent=47 // pred_region
          %s1620 = smul.addr %s22, 4
          %s1621 = sadd.s32 %s23, %s1620
          %s1622 = smul.addr %s1621, 8
          %s1623 = scalar_lea.vmem %s7, %s1622
          // Predicated region
          $region53: #{fcabs_forward.6} parent=51 // pred_check
            _
          $region54: #{fcabs_forward.6} parent=51 // pred_check_branch
            %1625 = sbr.rel (0) target = $region56
          $region55: #{fcabs_forward.6} parent=51 // pred_region
            // Predicated region
            $region57: #{fcabs_forward.6} parent=55 // pred_check
              _
            $region58: #{fcabs_forward.6} parent=55 // pred_check_branch
              %1627 = sbr.rel (0) target = $region60
            $region59: #{fcabs_forward.6} parent=55 // pred_region
              // Predicated region
              $region72: #{fcabs_forward.6} parent=59 // pred_check
                _
              $region73: #{fcabs_forward.6} parent=59 // pred_check_branch
                %1645 = sbr.rel (0) target = $region75
              $region74: #{fcabs_forward.6} parent=59 // pred_region
                loop: start=0, step=1, limit=1
                $region76: #{fcabs_forward.6} parent=74 // loop_pre_header
                  _
                $region77: #{fcabs_forward.6} parent=74 // loop_header
                  %s1647 = sphi 0, %s1651
                  %p1648 = scmp.ge.s32.totalorder %s1647, 1
                  %s1652 = sphi %s1616, %s1616
                  %s1653 = sphi %s1623, %s1623
                $region78: #{fcabs_forward.6} parent=74 // loop_header_branch
                  %1650 = sbr.rel (%p1648) target = $region82
                $region79: #{fcabs_forward.6} parent=74 // loop_body
                  %v1654 = vld [vmem:[%s1652] sm:$0xff]
                  %1655 = vst [vmem:[%s1653] sm:$0xff] %v1654
                  %v1656 = vld [vmem:[%s1652 + $0x8] sm:$0xff]
                  %1657 = vst [vmem:[%s1653 + $0x10] sm:$0xff] %v1656
                $region80: #{fcabs_forward.6} parent=74 // loop_footer
                  %s1651 = sadd.s32 1, %s1647
                $region81: #{fcabs_forward.6} parent=74 // loop_footer_branch
                  %1646 = sbr.rel target = $region77
                $region82: #{fcabs_forward.6} parent=74 // loop_exit
                  _
              $region75: #{fcabs_forward.6} parent=59 // pred_fallthru
                _
              // Predicated region
              $region83: #{fcabs_forward.6} parent=59 // pred_check
                _
              $region84: #{fcabs_forward.6} parent=59 // pred_check_branch
                %1659 = sbr.rel target = $region86
              $region85: #{fcabs_forward.6} parent=59 // pred_region
                _
              $region86: #{fcabs_forward.6} parent=59 // pred_fallthru
                _
            $region60: #{fcabs_forward.6} parent=55 // pred_fallthru
              _
            // Predicated region
            $region61: #{fcabs_forward.6} parent=55 // pred_check
              _
            $region62: #{fcabs_forward.6} parent=55 // pred_check_branch
              %1629 = sbr.rel target = $region64
            $region63: #{fcabs_forward.6} parent=55 // pred_region
              %s1631 = ssub.s32 256, 1
              loop: start=0, step=1, limit=1
              $region65: #{fcabs_forward.6} parent=63 // loop_pre_header
                _
              $region66: #{fcabs_forward.6} parent=63 // loop_header
                %s1633 = sphi 0, %s1637
                %p1634 = scmp.ge.s32.totalorder %s1633, 1
                %s1638 = sphi %s1616, %s1616
                %s1639 = sphi %s1623, %s1623
              $region67: #{fcabs_forward.6} parent=63 // loop_header_branch
                %1636 = sbr.rel (%p1634) target = $region71
              $region68: #{fcabs_forward.6} parent=63 // loop_body
                %v1640 = vld [vmem:[%s1638] sm:%s1631]
                %1641 = vst [vmem:[%s1639] sm:%s1631] %v1640
                %v1642 = vld [vmem:[%s1638 + $0x8] sm:%s1631]
                %1643 = vst [vmem:[%s1639 + $0x10] sm:%s1631] %v1642
              $region69: #{fcabs_forward.6} parent=63 // loop_footer
                %s1637 = sadd.s32 1, %s1633
              $region70: #{fcabs_forward.6} parent=63 // loop_footer_branch
                %1632 = sbr.rel target = $region66
              $region71: #{fcabs_forward.6} parent=63 // loop_exit
                _
            $region64: #{fcabs_forward.6} parent=55 // pred_fallthru
              _
          $region56: #{fcabs_forward.6} parent=51 // pred_fallthru
            _
          %1660 = vnop
        $region52: #{fcabs_forward.6} parent=47 // pred_fallthru
          _
      $region48: #{fcabs_forward.6} parent=5 // pred_fallthru
        _
      %p1661 = scmp.le.s32.totalorder 2, %s13
      // Predicated region
      $region87: #{fcabs_forward.6} parent=5 // pred_check
        %p1662 = pneg %p1661
      $region88: #{fcabs_forward.6} parent=5 // pred_check_branch
        %1664 = sbr.rel (%p1662) target = $region90
      $region89: #{fcabs_forward.6} parent=5 // pred_region
        %s1665 = ssub.s32 %s13, 2
        // Predicated region
        $region91: #{fcabs_forward.6} parent=89 // pred_check
          %p1666 = pneg %p215
        $region92: #{fcabs_forward.6} parent=89 // pred_check_branch
          %1668 = sbr.rel (%p1666) target = $region94
        $region93: #{fcabs_forward.6} parent=89 // pred_region
          %s1669 = sand.u32 %s200, 1
          %s1670 = sand.u32 %s200, 1
          %s1671 = smul.addr %s1670, 16
          %s1672 = scalar_lea.vmem [#allocation4], %s1671
        $region94: #{fcabs_forward.6} parent=89 // pred_fallthru
          _
      $region90: #{fcabs_forward.6} parent=5 // pred_fallthru
        _
    $region6: #{fcabs_forward.6} parent=1 // loop_footer
      %s17 = sadd.s32 1, %s13
    $region7: #{fcabs_forward.6} parent=1 // loop_footer_branch
      %12 = sbr.rel target = $region3
    $region8: #{fcabs_forward.6} parent=1 // loop_exit
      _

// kernel: fcabs_forward.7
$region0: #{fcabs_forward.7}
  #allocation0 [shape = 'u32[]', space=smem, size = 0x4, offset = 0x4, fixed_abs, tag = 'smem constant byte address 0x4 - core index']
  #allocation1 [shape = 'u32[72,128]{1,0:T(1,128)}', space=vmem, size = 0x9000, scoped, tag = 'internal scratch']
  #allocation2 [shape = 'bf16[16,290]{1,0:T(8,128)(2,1)}', space=vmem, size = 0x3000, scoped, tag = 'scratch operand']
  %s0 = inlined_call_operand.vmem [shape: bf16[2,16,288], index: 0, kind: input, shape index: {}]
  %s1 = inlined_call_operand.vmem [shape: bf16[2,1,256], index: 1, kind: input, shape index: {}]
  %s2 = inlined_call_operand.vmem [shape: bf16[9,16,16], index: 2, kind: input, shape index: {}]
  %s3 = inlined_call_operand.vmem [shape: f32[16,1], index: 3, kind: input, shape index: {}]
  %s4 = inlined_call_operand.vmem [shape: f32[2,16,1], index: 4, kind: output, shape index: {}]
  %s5 = sld [smem:[#allocation0]]
  $region49: #{fcabs_forward.7} parent=0
    _
  %s7 = ssub.s32 1, %s5
  %s8 = scalar_select 0, %s7, %s5
  loop: start=0, step=1, limit=4
  $region2: #{fcabs_forward.7} parent=0 // loop_pre_header
    _
  $region3: #{fcabs_forward.7} parent=0 // loop_header
    %s10 = sphi 0, %s14
    %p11 = scmp.ge.s32.totalorder %s10, 4
    %s20 = sphi 0, %s22
    %s23 = sphi 0, %s20
    %s24 = sphi 0, %s23
    %s40 = sphi 0, %s24
    %s44 = sphi 0, %s44
    %s46 = sphi 0, %s44
    %s47 = sphi 0, %s46
    %s61 = sphi 0, %s47
    %s65 = sphi 0, %s65
    %s67 = sphi 0, %s65
    %s68 = sphi 0, %s67
    %s82 = sphi 0, %s68
    %s86 = sphi 0, %s86
    %s88 = sphi 0, %s86
    %s89 = sphi 0, %s88
    %s103 = sphi 0, %s89
    %s109 = sphi 0, %s111
    %s112 = sphi 0, %s109
    %s113 = sphi 0, %s112
    %s129 = sphi 0, %s113
  $region4: #{fcabs_forward.7} parent=0 // loop_header_branch
    %13 = sbr.rel (%p11) target = $region8
  $region5: #{fcabs_forward.7} parent=0 // loop_body
    %s15 = ssub.s32 %s10, 1
    %s16 = ssub.s32 %s10, 2
    %s17 = sadd.s32 %s10, 1
    %s18 = ssub.s32 %s10, %s17
    %p19 = scmp.eq.s32.totalorder %s18, 0
    %s21 = sadd.s32 %s20, 1
    %s22 = scalar_select %p19, %s20, %s21
    %p25 = pneg %p19
    %p26 = scmp.eq.s32.totalorder %s10, 1
    %p27 = por %p25, %p26
    %p28 = scmp.ne.s32.totalorder %s20, %s23
    %p29 = scmp.eq.s32.totalorder %s10, 0
    %p30 = por %p28, %p29
    %p31 = scmp.ne.s32.totalorder %s20, %s23
    %p32 = scmp.eq.s32.totalorder %s15, 1
    %p33 = por %p31, %p32
    %p34 = scmp.ne.s32.totalorder %s23, %s24
    %p35 = scmp.eq.s32.totalorder %s15, 0
    %p36 = por %p34, %p35
    %p37 = scmp.ne.s32.totalorder %s23, %s24
    %p38 = scmp.eq.s32.totalorder %s16, 1
    %p39 = por %p37, %p38
    %p41 = scmp.ne.s32.totalorder %s24, %s40
    %p42 = scmp.eq.s32.totalorder %s16, 0
    %p43 = por %p41, %p42
    %s45 = sadd.s32 %s44, 1
    %p48 = scmp.eq.s32.totalorder %s10, 1
    %p49 = scmp.ne.s32.totalorder %s44, %s46
    %p50 = scmp.eq.s32.totalorder %s10, 0
    %p51 = por %p49, %p50
    %p52 = scmp.ne.s32.totalorder %s44, %s46
    %p53 = scmp.eq.s32.totalorder %s15, 1
    %p54 = por %p52, %p53
    %p55 = scmp.ne.s32.totalorder %s46, %s47
    %p56 = scmp.eq.s32.totalorder %s15, 0
    %p57 = por %p55, %p56
    %p58 = scmp.ne.s32.totalorder %s46, %s47
    %p59 = scmp.eq.s32.totalorder %s16, 1
    %p60 = por %p58, %p59
    %p62 = scmp.ne.s32.totalorder %s47, %s61
    %p63 = scmp.eq.s32.totalorder %s16, 0
    %p64 = por %p62, %p63
    %s66 = sadd.s32 %s65, 1
    %p69 = scmp.eq.s32.totalorder %s10, 1
    %p70 = scmp.ne.s32.totalorder %s65, %s67
    %p71 = scmp.eq.s32.totalorder %s10, 0
    %p72 = por %p70, %p71
    %p73 = scmp.ne.s32.totalorder %s65, %s67
    %p74 = scmp.eq.s32.totalorder %s15, 1
    %p75 = por %p73, %p74
    %p76 = scmp.ne.s32.totalorder %s67, %s68
    %p77 = scmp.eq.s32.totalorder %s15, 0
    %p78 = por %p76, %p77
    %p79 = scmp.ne.s32.totalorder %s67, %s68
    %p80 = scmp.eq.s32.totalorder %s16, 1
    %p81 = por %p79, %p80
    %p83 = scmp.ne.s32.totalorder %s68, %s82
    %p84 = scmp.eq.s32.totalorder %s16, 0
    %p85 = por %p83, %p84
    %s87 = sadd.s32 %s86, 1
    %p90 = scmp.eq.s32.totalorder %s10, 1
    %p91 = scmp.ne.s32.totalorder %s86, %s88
    %p92 = scmp.eq.s32.totalorder %s10, 0
    %p93 = por %p91, %p92
    %p94 = scmp.ne.s32.totalorder %s86, %s88
    %p95 = scmp.eq.s32.totalorder %s15, 1
    %p96 = por %p94, %p95
    %p97 = scmp.ne.s32.totalorder %s88, %s89
    %p98 = scmp.eq.s32.totalorder %s15, 0
    %p99 = por %p97, %p98
    %p100 = scmp.ne.s32.totalorder %s88, %s89
    %p101 = scmp.eq.s32.totalorder %s16, 1
    %p102 = por %p100, %p101
    %p104 = scmp.ne.s32.totalorder %s89, %s103
    %p105 = scmp.eq.s32.totalorder %s16, 0
    %p106 = por %p104, %p105
    %s107 = ssub.s32 %s10, %s17
    %p108 = scmp.eq.s32.totalorder %s107, 0
    %s110 = sadd.s32 %s109, 1
    %s111 = scalar_select %p108, %s109, %s110
    %p114 = pneg %p108
    %p115 = scmp.eq.s32.totalorder %s10, 1
    %p116 = por %p114, %p115
    %p117 = scmp.ne.s32.totalorder %s109, %s112
    %p118 = scmp.eq.s32.totalorder %s10, 0
    %p119 = por %p117, %p118
    %p120 = scmp.ne.s32.totalorder %s109, %s112
    %p121 = scmp.eq.s32.totalorder %s15, 1
    %p122 = por %p120, %p121
    %p123 = scmp.ne.s32.totalorder %s112, %s113
    %p124 = scmp.eq.s32.totalorder %s15, 0
    %p125 = por %p123, %p124
    %p126 = scmp.ne.s32.totalorder %s112, %s113
    %p127 = scmp.eq.s32.totalorder %s16, 1
    %p128 = por %p126, %p127
    %p130 = scmp.ne.s32.totalorder %s113, %s129
    %p131 = scmp.eq.s32.totalorder %s16, 0
    %p132 = por %p130, %p131
    %p133 = scmp.le.s32.totalorder 1, %s10
    %p134 = scmp.lt.s32.totalorder %s10, 3
    %p135 = pnand %p133, %p134
    %p136 = pneg %p135
    // Predicated region
    $region9: #{fcabs_forward.7} parent=5 // pred_check
      _
    $region10: #{fcabs_forward.7} parent=5 // pred_check_branch
      %138 = sbr.rel (%p135) target = $region12
    $region11: #{fcabs_forward.7} parent=5 // pred_region
      %s139 = ssub.s32 %s10, 1
      // Predicated region
      $region13: #{fcabs_forward.7} parent=11 // pred_check
        %p140 = pneg %p57
      $region14: #{fcabs_forward.7} parent=11 // pred_check_branch
        %142 = sbr.rel (%p140) target = $region16
      $region15: #{fcabs_forward.7} parent=11 // pred_region
        _
      $region16: #{fcabs_forward.7} parent=11 // pred_fallthru
        _
      // Predicated region
      $region17: #{fcabs_forward.7} parent=11 // pred_check
        %p143 = pneg %p78
      $region18: #{fcabs_forward.7} parent=11 // pred_check_branch
        %145 = sbr.rel (%p143) target = $region20
      $region19: #{fcabs_forward.7} parent=11 // pred_region
        _
      $region20: #{fcabs_forward.7} parent=11 // pred_fallthru
        _
      // Predicated region
      $region21: #{fcabs_forward.7} parent=11 // pred_check
        %p146 = pneg %p99
      $region22: #{fcabs_forward.7} parent=11 // pred_check_branch
        %148 = sbr.rel (%p146) target = $region24
      $region23: #{fcabs_forward.7} parent=11 // pred_region
        _
      $region24: #{fcabs_forward.7} parent=11 // pred_fallthru
        _
    $region12: #{fcabs_forward.7} parent=5 // pred_fallthru
      _
    %p149 = scmp.lt.s32.totalorder %s10, 2
    // Predicated region
    $region25: #{fcabs_forward.7} parent=5 // pred_check
      %p150 = pneg %p149
    $region26: #{fcabs_forward.7} parent=5 // pred_check_branch
      %152 = sbr.rel (%p150) target = $region28
    $region27: #{fcabs_forward.7} parent=5 // pred_region
      // Predicated region
      $region29: #{fcabs_forward.7} parent=27 // pred_check
        %p153 = pneg %p30
      $region30: #{fcabs_forward.7} parent=27 // pred_check_branch
        %155 = sbr.rel (%p153) target = $region32
      $region31: #{fcabs_forward.7} parent=27 // pred_region
        %p156 = scmp.lt.s32.totalorder %s10, 1
        %s157 = scalar_select %p156, %s10, 1
        %s158 = smul.addr %s157, 6
        %s159 = smul.addr %s158, 4
        %s160 = scalar_lea.vmem %s0, %s159
      $region32: #{fcabs_forward.7} parent=27 // pred_fallthru
        _
    $region28: #{fcabs_forward.7} parent=5 // pred_fallthru
      _
    %p161 = scmp.le.s32.totalorder 1, %s10
    %p162 = scmp.lt.s32.totalorder %s10, 3
    %p163 = pnand %p161, %p162
    %p164 = pneg %p163
    // Predicated region
    $region33: #{fcabs_forward.7} parent=5 // pred_check
      _
    $region34: #{fcabs_forward.7} parent=5 // pred_check_branch
      %166 = sbr.rel (%p163) target = $region36
    $region35: #{fcabs_forward.7} parent=5 // pred_region
      %s167 = ssub.s32 %s10, 1
      %p168 = scmp.lt.s32.totalorder %s15, 1
      %s169 = scalar_select %p168, %s15, 1
      %s170 = smul.addr %s169, 6
      %s171 = smul.addr %s170, 4
      %s172 = scalar_lea.vmem %s0, %s171
      %p173 = pneg %p36
      %p174 = pneg %p33
      %p175 = pneg %p57
      %p176 = pneg %p54
      %p177 = pneg %p78
      %p178 = pneg %p75
      %p179 = pneg %p99
      %p180 = pneg %p96
      %p181 = pneg %p125
      %p182 = pneg %p122
      %p183 = scmp.lt.s32.totalorder %s15, 1
      %s184 = scalar_select %p183, %s15, 1
      %s185 = smul.addr %s184, 2
      %s186 = smul.addr %s185, 8
      %s187 = scalar_lea.vmem %s4, %s186
      %p188 = scmp.lt.s32.totalorder %s15, 1
      %s189 = scalar_select %p188, %s15, 1
      %s190 = smul.addr %s189, 6
      %s191 = smul.addr %s190, 4
      %s192 = scalar_lea.vmem %s0, %s191
      %p193 = scmp.lt.s32.totalorder %s15, 1
      %s194 = scalar_select %p193, %s15, 1
      %s195 = smul.addr %s194, 2
      %s196 = smul.addr %s195, 8
      %s197 = scalar_lea.vmem %s4, %s196
      %v199 = vld [vmem:[%s1] sm:$0x3]
      %s200 = scalar_lea.vmem %s1, 2
      %v201 = vld [vmem:[%s200] sm:$0x3]
      %v202 = vld [vmem:[%s192] sm:$0xff]
      %v203 = vld [vmem:[%s192 + $0x8] sm:$0xf]
      %v204 = vld [vmem:[%s192 + $0xc] sm:$0xff]
      %v205 = vld [vmem:[%s192 + $0x14] sm:$0xf]
      %206 = vst [vmem:[#allocation2] sm:$0xff] 0
      %vm207 = vcmask 273408
      %208 = vst.msk [vmem:[#allocation2 + $0x8] sm:$0xf] %vm207, 0
      %209 = vst [vmem:[#allocation2 + $0xc] sm:$0xff] 0
      %210 = vst.msk [vmem:[#allocation2 + $0x14] sm:$0xf] %vm207, 0
      %215 = vrot.lane.b32.xlu0 %v202, 1
      %v216 = vpop.permute.xlu0 %215
      %217 = vrot.lane.b32.xlu0 %v203, 1
      %v218 = vpop.permute.xlu0 %217
      %219 = vrot.lane.b32.xlu0 %v204, 1
      %v220 = vpop.permute.xlu0 %219
      %221 = vrot.lane.b32.xlu0 %v205, 1
      %v222 = vpop.permute.xlu0 %221
      %v223 = vrot.slane %v216, 4
      %v224 = vrot.slane %v220, 4
      %vm225 = vcmask 7168
      %v226 = vsel %vm225, %v223, %v216
      %v227 = vsel %vm225, %v223, %v218
      %v228 = vsel %vm225, %v224, %v220
      %v229 = vsel %vm225, %v224, %v222
      %vm234 = vcmask 1043464
      %vm235 = vcmask 1047556
      %vm236 = vmor %vm235, %vm234
      %237 = vst.msk [vmem:[#allocation2] sm:$0xff] %vm236, %v226
      %vm238 = vcmask 265216
      %239 = vst.msk [vmem:[#allocation2 + $0x8] sm:$0xf] %vm238, %v227
      %240 = vst.msk [vmem:[#allocation2 + $0xc] sm:$0xff] %vm236, %v228
      %241 = vst.msk [vmem:[#allocation2 + $0x14] sm:$0xf] %vm238, %v229
      %v242 = vld [vmem:[#allocation2] sm:$0xff]
      %v243 = vld [vmem:[#allocation2 + $0xc] sm:$0xff]
      %245 = vst [vmem:[#allocation1] ss:$9 sm:$0xff] %v199
      %v246 = vld [vmem:[#allocation1] sm:$0xff]
      %v247 = vld [vmem:[#allocation1 + $0x9] sm:$0xff]
      %v248 = vpack.i.b16 %v246, %v246
      %v250 = vperm.slane %v248, 0
      %v251 = vpack.i.b16 %v247, %v247
      %v253 = vperm.slane %v251, 0
      %v254 = vunpack.c.l.bf16 %v242
      %v255 = vunpack.c.h.bf16 %v242
      %v256 = vunpack.c.l.bf16 %v243
      %v257 = vunpack.c.h.bf16 %v243
      %v258 = vunpack.c.l.bf16 %v250
      %v259 = vunpack.c.l.bf16 %v253
      %v260 = vmul.f32 %v254, %v258
      %v261 = vmul.f32 %v255, %v259
      %v262 = vmul.f32 %v256, %v258
      %v263 = vmul.f32 %v257, %v259
      %v264 = vpack.c.bf16 %v262, %v260
      %v265 = vpack.c.bf16 %v263, %v261
      %v266 = vld [vmem:[%s2] sm:$0xf]
      %v267 = vld [vmem:[%s2 + $0x4] sm:$0xf]
      %v268 = vld [vmem:[#allocation2] sm:$0xff]
      %v269 = vld [vmem:[#allocation2 + $0x8] sm:$0xf]
      %v270 = vld [vmem:[#allocation2 + $0xc] sm:$0xff]
      %v271 = vld [vmem:[#allocation2 + $0x14] sm:$0xf]
      %s272 = scalar_lea.vmem %s2, 8
      %v273 = vld [vmem:[%s272] sm:$0xf]
      %v274 = vld [vmem:[%s272 + $0x4] sm:$0xf]
      %v277 = vunpack.c.l.b16 %v273
      %v278 = vunpack.c.l.b16 %v274
      %v279 = vpack.c.b16 %v278, %v277
      %v284 = vunpack.c.l.b16 %v268
      %v285 = vunpack.c.h.b16 %v268
      %v286 = vunpack.c.l.b16 %v269
      %v287 = vunpack.c.l.b16 %v270
      %v288 = vunpack.c.h.b16 %v270
      %v289 = vunpack.c.l.b16 %v271
      %v290 = vpack.c.b16 %v287, %v284
      %v291 = vpack.c.b16 %v288, %v285
      %v292 = vpack.c.b16 %v289, %v286
      %293 = vrot.lane.b32.xlu0 %v290, 127
      %v294 = vpop.permute.xlu0 %293
      %295 = vrot.lane.b32.xlu0 %v291, 127
      %v296 = vpop.permute.xlu0 %295
      %297 = vrot.lane.b32.xlu0 %v292, 127
      %v298 = vpop.permute.xlu0 %297
      %vm299 = vcmask 1039360
      %v300 = vsel %vm299, %v294, %v296
      %v301 = vsel %vm299, %v296, %v298
      %vm304 = vcmask 130048
      %v306 = vsel %vm304, %v279, 0
      %308 = vmatpush.bf16.msra.mxu0 0
      %309 = vmatpush.bf16.msra.mxu0 0
      %310 = vmatpush.bf16.msra.mxu0 0
      %311 = vmatpush.bf16.msra.mxu0 0
      %312 = vmatpush.bf16.msra.mxu0 0
      %313 = vmatpush.bf16.msra.mxu0 0
      %314 = vmatpush.bf16.msra.mxu0 0
      %315 = vmatpush.bf16.msra.mxu0 %v300
      %316 = vmatmul.bf16.gmra.mxu0 %v306
      %v317 = vpop.f32.mrf.mxu0
      %v318 = vadd.f32 0.0, %v317
      %v319 = vpop.f32.mrf.mxu0
      %v320 = vadd.f32 0.0, %v319
      %321 = vdwg.mxu0
      %322 = vmatpush.bf16.msra.mxu0 0
      %323 = vmatpush.bf16.msra.mxu0 0
      %324 = vmatpush.bf16.msra.mxu0 0
      %325 = vmatpush.bf16.msra.mxu0 0
      %326 = vmatpush.bf16.msra.mxu0 0
      %327 = vmatpush.bf16.msra.mxu0 0
      %328 = vmatpush.bf16.msra.mxu0 0
      %329 = vmatpush.bf16.msra.mxu0 %v301
      %330 = vmatmul.bf16.gmra.mxu0 %v306
      %v331 = vpop.f32.mrf.mxu0
      %v332 = vadd.f32 0.0, %v331
      %v333 = vpop.f32.mrf.mxu0
      %v334 = vadd.f32 0.0, %v333
      %335 = vdwg.mxu0
      %v338 = vunpack.c.l.b16 %v266
      %v339 = vunpack.c.l.b16 %v267
      %v340 = vpack.c.b16 %v339, %v338
      %v342 = vsel %vm304, %v340, 0
      %344 = vmatpush.bf16.msra.mxu0 0
      %345 = vmatpush.bf16.msra.mxu0 0
      %346 = vmatpush.bf16.msra.mxu0 0
      %347 = vmatpush.bf16.msra.mxu0 0
      %348 = vmatpush.bf16.msra.mxu0 0
      %349 = vmatpush.bf16.msra.mxu0 0
      %350 = vmatpush.bf16.msra.mxu0 0
      %351 = vmatpush.bf16.msra.mxu0 %v264
      %352 = vmatmul.bf16.gmra.mxu0 %v342
      %v353 = vpop.f32.mrf.mxu0
      %v354 = vadd.f32 %v318, %v353
      %v355 = vpop.f32.mrf.mxu0
      %v356 = vadd.f32 %v320, %v355
      %357 = vdwg.mxu0
      %358 = vmatpush.bf16.msra.mxu0 0
      %359 = vmatpush.bf16.msra.mxu0 0
      %360 = vmatpush.bf16.msra.mxu0 0
      %361 = vmatpush.bf16.msra.mxu0 0
      %362 = vmatpush.bf16.msra.mxu0 0
      %363 = vmatpush.bf16.msra.mxu0 0
      %364 = vmatpush.bf16.msra.mxu0 0
      %365 = vmatpush.bf16.msra.mxu0 %v265
      %366 = vmatmul.bf16.gmra.mxu0 %v342
      %v367 = vpop.f32.mrf.mxu0
      %v368 = vadd.f32 %v332, %v367
      %v369 = vpop.f32.mrf.mxu0
      %v370 = vadd.f32 %v334, %v369
      %371 = vdwg.mxu0
      %373 = vst [vmem:[#allocation1] ss:$9 sm:$0xff] %v201
      %v374 = vld [vmem:[#allocation1] sm:$0xff]
      %v375 = vld [vmem:[#allocation1 + $0x9] sm:$0xff]
      %v376 = vpack.i.b16 %v374, %v374
      %v378 = vperm.slane %v376, 0
      %v379 = vpack.i.b16 %v375, %v375
      %v381 = vperm.slane %v379, 0
      %v382 = vunpack.c.l.bf16 %v268
      %v383 = vunpack.c.h.bf16 %v268
      %v384 = vunpack.c.l.bf16 %v269
      %v385 = vunpack.c.l.bf16 %v270
      %v386 = vunpack.c.h.bf16 %v270
      %v387 = vunpack.c.l.bf16 %v271
      %v388 = vunpack.c.l.bf16 %v378
      %v389 = vunpack.c.l.bf16 %v381
      %392 = vrot.lane.b32.xlu0 %v388, 2
      %v393 = vpop.permute.xlu0 %392
      %394 = vrot.lane.b32.xlu0 %v389, 2
      %v395 = vpop.permute.xlu0 %394
      %vm396 = vcmask 15360
      %v397 = vsel %vm396, %v393, %v395
      %v401 = vmul.f32 %v382, %v393
      %v402 = vmul.f32 %v383, %v397
      %v403 = vmul.f32 %v384, %v395
      %v404 = vmul.f32 %v385, %v393
      %v405 = vmul.f32 %v386, %v397
      %v406 = vmul.f32 %v387, %v395
      %v407 = vpack.c.bf16 %v404, %v401
      %v408 = vpack.c.bf16 %v405, %v402
      %v409 = vpack.c.bf16 %v406, %v403
      %s410 = scalar_lea.vmem %s2, 16
      %v411 = vld [vmem:[%s410] sm:$0xf]
      %v412 = vld [vmem:[%s410 + $0x4] sm:$0xf]
      %v415 = vunpack.c.l.b16 %v411
      %v416 = vunpack.c.l.b16 %v412
      %v417 = vpack.c.b16 %v416, %v415
      %421 = vrot.lane.b32.xlu0 %v407, 126
      %v422 = vpop.permute.xlu0 %421
      %423 = vrot.lane.b32.xlu0 %v408, 126
      %v424 = vpop.permute.xlu0 %423
      %425 = vrot.lane.b32.xlu0 %v409, 126
      %v426 = vpop.permute.xlu0 %425
      %vm427 = vcmask 1031168
      %v428 = vsel %vm427, %v422, %v424
      %v429 = vsel %vm427, %v424, %v426
      %v433 = vsel %vm304, %v417, 0
      %435 = vmatpush.bf16.msra.mxu0 0
      %436 = vmatpush.bf16.msra.mxu0 0
      %437 = vmatpush.bf16.msra.mxu0 0
      %438 = vmatpush.bf16.msra.mxu0 0
      %439 = vmatpush.bf16.msra.mxu0 0
      %440 = vmatpush.bf16.msra.mxu0 0
      %441 = vmatpush.bf16.msra.mxu0 0
      %442 = vmatpush.bf16.msra.mxu0 %v428
      %443 = vmatmul.bf16.gmra.mxu0 %v433
      %v444 = vpop.f32.mrf.mxu0
      %v445 = vadd.f32 0.0, %v444
      %v446 = vpop.f32.mrf.mxu0
      %v447 = vadd.f32 0.0, %v446
      %448 = vdwg.mxu0
      %449 = vmatpush.bf16.msra.mxu0 0
      %450 = vmatpush.bf16.msra.mxu0 0
      %451 = vmatpush.bf16.msra.mxu0 0
      %452 = vmatpush.bf16.msra.mxu0 0
      %453 = vmatpush.bf16.msra.mxu0 0
      %454 = vmatpush.bf16.msra.mxu0 0
      %455 = vmatpush.bf16.msra.mxu0 0
      %456 = vmatpush.bf16.msra.mxu0 %v429
      %457 = vmatmul.bf16.gmra.mxu0 %v433
      %v458 = vpop.f32.mrf.mxu0
      %v459 = vadd.f32 0.0, %v458
      %v460 = vpop.f32.mrf.mxu0
      %v461 = vadd.f32 0.0, %v460
      %462 = vdwg.mxu0
      %v463 = vadd.f32 %v354, %v445
      %v464 = vadd.f32 %v368, %v459
      %v465 = vadd.f32 %v356, %v447
      %v466 = vadd.f32 %v370, %v461
      %v467 = vld [vmem:[#allocation2] sm:$0xff]
      %v468 = vld [vmem:[#allocation2 + $0x8] sm:$0xf]
      %v469 = vld [vmem:[#allocation2 + $0xc] sm:$0xff]
      %v470 = vld [vmem:[#allocation2 + $0x14] sm:$0xf]
      %v471 = vunpack.c.l.bf16 %v467
      %v472 = vunpack.c.h.bf16 %v467
      %v473 = vunpack.c.l.bf16 %v468
      %v474 = vunpack.c.l.bf16 %v469
      %v475 = vunpack.c.h.bf16 %v469
      %v476 = vunpack.c.l.bf16 %v470
      %479 = vrot.lane.b32.xlu0 %v258, 16
      %v480 = vpop.permute.xlu0 %479
      %481 = vrot.lane.b32.xlu0 %v259, 16
      %v482 = vpop.permute.xlu0 %481
      %v483 = vsel %vm304, %v480, %v482
      %v487 = vmul.f32 %v471, %v480
      %v488 = vmul.f32 %v472, %v483
      %v489 = vmul.f32 %v473, %v482
      %v490 = vmul.f32 %v474, %v480
      %v491 = vmul.f32 %v475, %v483
      %v492 = vmul.f32 %v476, %v482
      %v493 = vpack.c.bf16 %v490, %v487
      %v494 = vpack.c.bf16 %v491, %v488
      %v495 = vpack.c.bf16 %v492, %v489
      %s496 = scalar_lea.vmem %s2, 24
      %v497 = vld [vmem:[%s496] sm:$0xf]
      %v498 = vld [vmem:[%s496 + $0x4] sm:$0xf]
      %v501 = vunpack.c.l.b16 %v497
      %v502 = vunpack.c.l.b16 %v498
      %v503 = vpack.c.b16 %v502, %v501
      %507 = vrot.lane.b32.xlu0 %v493, 112
      %v508 = vpop.permute.xlu0 %507
      %509 = vrot.lane.b32.xlu0 %v494, 112
      %v510 = vpop.permute.xlu0 %509
      %511 = vrot.lane.b32.xlu0 %v495, 112
      %v512 = vpop.permute.xlu0 %511
      %vm513 = vcmask 916480
      %v514 = vsel %vm513, %v508, %v510
      %v515 = vsel %vm513, %v510, %v512
      %v519 = vsel %vm304, %v503, 0
      %521 = vmatpush.bf16.msra.mxu0 0
      %522 = vmatpush.bf16.msra.mxu0 0
      %523 = vmatpush.bf16.msra.mxu0 0
      %524 = vmatpush.bf16.msra.mxu0 0
      %525 = vmatpush.bf16.msra.mxu0 0
      %526 = vmatpush.bf16.msra.mxu0 0
      %527 = vmatpush.bf16.msra.mxu0 0
      %528 = vmatpush.bf16.msra.mxu0 %v514
      %529 = vmatmul.bf16.gmra.mxu0 %v519
      %v530 = vpop.f32.mrf.mxu0
      %v531 = vadd.f32 0.0, %v530
      %v532 = vpop.f32.mrf.mxu0
      %v533 = vadd.f32 0.0, %v532
      %534 = vdwg.mxu0
      %535 = vmatpush.bf16.msra.mxu0 0
      %536 = vmatpush.bf16.msra.mxu0 0
      %537 = vmatpush.bf16.msra.mxu0 0
      %538 = vmatpush.bf16.msra.mxu0 0
      %539 = vmatpush.bf16.msra.mxu0 0
      %540 = vmatpush.bf16.msra.mxu0 0
      %541 = vmatpush.bf16.msra.mxu0 0
      %542 = vmatpush.bf16.msra.mxu0 %v515
      %543 = vmatmul.bf16.gmra.mxu0 %v519
      %v544 = vpop.f32.mrf.mxu0
      %v545 = vadd.f32 0.0, %v544
      %v546 = vpop.f32.mrf.mxu0
      %v547 = vadd.f32 0.0, %v546
      %548 = vdwg.mxu0
      %v549 = vadd.f32 %v463, %v531
      %v550 = vadd.f32 %v464, %v545
      %v551 = vadd.f32 %v465, %v533
      %v552 = vadd.f32 %v466, %v547
      %s553 = scalar_lea.vmem %s2, 32
      %v554 = vld [vmem:[%s553] sm:$0xf]
      %v555 = vld [vmem:[%s553 + $0x4] sm:$0xf]
      %v558 = vunpack.c.l.b16 %v554
      %v559 = vunpack.c.l.b16 %v555
      %v560 = vpack.c.b16 %v559, %v558
      %v565 = vunpack.c.l.b16 %v467
      %v566 = vunpack.c.h.b16 %v467
      %v567 = vunpack.c.l.b16 %v468
      %v568 = vunpack.c.l.b16 %v469
      %v569 = vunpack.c.h.b16 %v469
      %v570 = vunpack.c.l.b16 %v470
      %v571 = vpack.c.b16 %v568, %v565
      %v572 = vpack.c.b16 %v569, %v566
      %v573 = vpack.c.b16 %v570, %v567
      %574 = vrot.lane.b32.xlu0 %v571, 111
      %v575 = vpop.permute.xlu0 %574
      %576 = vrot.lane.b32.xlu0 %v572, 111
      %v577 = vpop.permute.xlu0 %576
      %578 = vrot.lane.b32.xlu0 %v573, 111
      %v579 = vpop.permute.xlu0 %578
      %vm580 = vcmask 908288
      %v581 = vsel %vm580, %v575, %v577
      %v582 = vsel %vm580, %v577, %v579
      %v586 = vsel %vm304, %v560, 0
      %588 = vmatpush.bf16.msra.mxu0 0
      %589 = vmatpush.bf16.msra.mxu0 0
      %590 = vmatpush.bf16.msra.mxu0 0
      %591 = vmatpush.bf16.msra.mxu0 0
      %592 = vmatpush.bf16.msra.mxu0 0
      %593 = vmatpush.bf16.msra.mxu0 0
      %594 = vmatpush.bf16.msra.mxu0 0
      %595 = vmatpush.bf16.msra.mxu0 %v581
      %596 = vmatmul.bf16.gmra.mxu0 %v586
      %v597 = vpop.f32.mrf.mxu0
      %v598 = vadd.f32 0.0, %v597
      %v599 = vpop.f32.mrf.mxu0
      %v600 = vadd.f32 0.0, %v599
      %601 = vdwg.mxu0
      %602 = vmatpush.bf16.msra.mxu0 0
      %603 = vmatpush.bf16.msra.mxu0 0
      %604 = vmatpush.bf16.msra.mxu0 0
      %605 = vmatpush.bf16.msra.mxu0 0
      %606 = vmatpush.bf16.msra.mxu0 0
      %607 = vmatpush.bf16.msra.mxu0 0
      %608 = vmatpush.bf16.msra.mxu0 0
      %609 = vmatpush.bf16.msra.mxu0 %v582
      %610 = vmatmul.bf16.gmra.mxu0 %v586
      %v611 = vpop.f32.mrf.mxu0
      %v612 = vadd.f32 0.0, %v611
      %v613 = vpop.f32.mrf.mxu0
      %v614 = vadd.f32 0.0, %v613
      %615 = vdwg.mxu0
      %v616 = vadd.f32 %v549, %v598
      %v617 = vadd.f32 %v550, %v612
      %v618 = vadd.f32 %v551, %v600
      %v619 = vadd.f32 %v552, %v614
      %620 = vrot.lane.b32.xlu0 %v388, 18
      %v621 = vpop.permute.xlu0 %620
      %622 = vrot.lane.b32.xlu0 %v389, 18
      %v623 = vpop.permute.xlu0 %622
      %vm624 = vcmask 146432
      %v625 = vsel %vm624, %v621, %v623
      %v629 = vmul.f32 %v471, %v621
      %v630 = vmul.f32 %v472, %v625
      %v631 = vmul.f32 %v473, %v623
      %v632 = vmul.f32 %v474, %v621
      %v633 = vmul.f32 %v475, %v625
      %v634 = vmul.f32 %v476, %v623
      %v635 = vpack.c.bf16 %v632, %v629
      %v636 = vpack.c.bf16 %v633, %v630
      %v637 = vpack.c.bf16 %v634, %v631
      %s638 = scalar_lea.vmem %s2, 40
      %v639 = vld [vmem:[%s638] sm:$0xf]
      %v640 = vld [vmem:[%s638 + $0x4] sm:$0xf]
      %v643 = vunpack.c.l.b16 %v639
      %v644 = vunpack.c.l.b16 %v640
      %v645 = vpack.c.b16 %v644, %v643
      %649 = vrot.lane.b32.xlu0 %v635, 110
      %v650 = vpop.permute.xlu0 %649
      %651 = vrot.lane.b32.xlu0 %v636, 110
      %v652 = vpop.permute.xlu0 %651
      %653 = vrot.lane.b32.xlu0 %v637, 110
      %v654 = vpop.permute.xlu0 %653
      %vm655 = vcmask 900096
      %v656 = vsel %vm655, %v650, %v652
      %v657 = vsel %vm655, %v652, %v654
      %v661 = vsel %vm304, %v645, 0
      %663 = vmatpush.bf16.msra.mxu0 0
      %664 = vmatpush.bf16.msra.mxu0 0
      %665 = vmatpush.bf16.msra.mxu0 0
      %666 = vmatpush.bf16.msra.mxu0 0
      %667 = vmatpush.bf16.msra.mxu0 0
      %668 = vmatpush.bf16.msra.mxu0 0
      %669 = vmatpush.bf16.msra.mxu0 0
      %670 = vmatpush.bf16.msra.mxu0 %v656
      %671 = vmatmul.bf16.gmra.mxu0 %v661
      %v672 = vpop.f32.mrf.mxu0
      %v673 = vadd.f32 0.0, %v672
      %v674 = vpop.f32.mrf.mxu0
      %v675 = vadd.f32 0.0, %v674
      %676 = vdwg.mxu0
      %677 = vmatpush.bf16.msra.mxu0 0
      %678 = vmatpush.bf16.msra.mxu0 0
      %679 = vmatpush.bf16.msra.mxu0 0
      %680 = vmatpush.bf16.msra.mxu0 0
      %681 = vmatpush.bf16.msra.mxu0 0
      %682 = vmatpush.bf16.msra.mxu0 0
      %683 = vmatpush.bf16.msra.mxu0 0
      %684 = vmatpush.bf16.msra.mxu0 %v657
      %685 = vmatmul.bf16.gmra.mxu0 %v661
      %v686 = vpop.f32.mrf.mxu0
      %v687 = vadd.f32 0.0, %v686
      %v688 = vpop.f32.mrf.mxu0
      %v689 = vadd.f32 0.0, %v688
      %690 = vdwg.mxu0
      %v691 = vadd.f32 %v616, %v673
      %v692 = vadd.f32 %v617, %v687
      %v693 = vadd.f32 %v618, %v675
      %v694 = vadd.f32 %v619, %v689
      %695 = vrot.lane.b32.xlu0 %v258, 32
      %v696 = vpop.permute.xlu0 %695
      %697 = vrot.lane.b32.xlu0 %v259, 32
      %v698 = vpop.permute.xlu0 %697
      %vm699 = vcmask 261120
      %v700 = vsel %vm699, %v696, %v698
      %v704 = vmul.f32 %v471, %v696
      %v705 = vmul.f32 %v472, %v700
      %v706 = vmul.f32 %v473, %v698
      %v707 = vmul.f32 %v474, %v696
      %v708 = vmul.f32 %v475, %v700
      %v709 = vmul.f32 %v476, %v698
      %v710 = vpack.c.bf16 %v707, %v704
      %v711 = vpack.c.bf16 %v708, %v705
      %v712 = vpack.c.bf16 %v709, %v706
      %s713 = scalar_lea.vmem %s2, 48
      %v714 = vld [vmem:[%s713] sm:$0xf]
      %v715 = vld [vmem:[%s713 + $0x4] sm:$0xf]
      %v718 = vunpack.c.l.b16 %v714
      %v719 = vunpack.c.l.b16 %v715
      %v720 = vpack.c.b16 %v719, %v718
      %724 = vrot.lane.b32.xlu0 %v710, 96
      %v725 = vpop.permute.xlu0 %724
      %726 = vrot.lane.b32.xlu0 %v711, 96
      %v727 = vpop.permute.xlu0 %726
      %728 = vrot.lane.b32.xlu0 %v712, 96
      %v729 = vpop.permute.xlu0 %728
      %vm730 = vcmask 785408
      %v731 = vsel %vm730, %v725, %v727
      %v732 = vsel %vm730, %v727, %v729
      %v736 = vsel %vm304, %v720, 0
      %738 = vmatpush.bf16.msra.mxu0 0
      %739 = vmatpush.bf16.msra.mxu0 0
      %740 = vmatpush.bf16.msra.mxu0 0
      %741 = vmatpush.bf16.msra.mxu0 0
      %742 = vmatpush.bf16.msra.mxu0 0
      %743 = vmatpush.bf16.msra.mxu0 0
      %744 = vmatpush.bf16.msra.mxu0 0
      %745 = vmatpush.bf16.msra.mxu0 %v731
      %746 = vmatmul.bf16.gmra.mxu0 %v736
      %v747 = vpop.f32.mrf.mxu0
      %v748 = vadd.f32 0.0, %v747
      %v749 = vpop.f32.mrf.mxu0
      %v750 = vadd.f32 0.0, %v749
      %751 = vdwg.mxu0
      %752 = vmatpush.bf16.msra.mxu0 0
      %753 = vmatpush.bf16.msra.mxu0 0
      %754 = vmatpush.bf16.msra.mxu0 0
      %755 = vmatpush.bf16.msra.mxu0 0
      %756 = vmatpush.bf16.msra.mxu0 0
      %757 = vmatpush.bf16.msra.mxu0 0
      %758 = vmatpush.bf16.msra.mxu0 0
      %759 = vmatpush.bf16.msra.mxu0 %v732
      %760 = vmatmul.bf16.gmra.mxu0 %v736
      %v761 = vpop.f32.mrf.mxu0
      %v762 = vadd.f32 0.0, %v761
      %v763 = vpop.f32.mrf.mxu0
      %v764 = vadd.f32 0.0, %v763
      %765 = vdwg.mxu0
      %v766 = vadd.f32 %v691, %v748
      %v767 = vadd.f32 %v692, %v762
      %v768 = vadd.f32 %v693, %v750
      %v769 = vadd.f32 %v694, %v764
      %s770 = scalar_lea.vmem %s2, 56
      %v771 = vld [vmem:[%s770] sm:$0xf]
      %v772 = vld [vmem:[%s770 + $0x4] sm:$0xf]
      %v775 = vunpack.c.l.b16 %v771
      %v776 = vunpack.c.l.b16 %v772
      %v777 = vpack.c.b16 %v776, %v775
      %778 = vrot.lane.b32.xlu0 %v571, 95
      %v779 = vpop.permute.xlu0 %778
      %780 = vrot.lane.b32.xlu0 %v572, 95
      %v781 = vpop.permute.xlu0 %780
      %782 = vrot.lane.b32.xlu0 %v573, 95
      %v783 = vpop.permute.xlu0 %782
      %vm784 = vcmask 777216
      %v785 = vsel %vm784, %v779, %v781
      %v786 = vsel %vm784, %v781, %v783
      %v790 = vsel %vm304, %v777, 0
      %792 = vmatpush.bf16.msra.mxu0 0
      %793 = vmatpush.bf16.msra.mxu0 0
      %794 = vmatpush.bf16.msra.mxu0 0
      %795 = vmatpush.bf16.msra.mxu0 0
      %796 = vmatpush.bf16.msra.mxu0 0
      %797 = vmatpush.bf16.msra.mxu0 0
      %798 = vmatpush.bf16.msra.mxu0 0
      %799 = vmatpush.bf16.msra.mxu0 %v785
      %800 = vmatmul.bf16.gmra.mxu0 %v790
      %v801 = vpop.f32.mrf.mxu0
      %v802 = vadd.f32 0.0, %v801
      %v803 = vpop.f32.mrf.mxu0
      %v804 = vadd.f32 0.0, %v803
      %805 = vdwg.mxu0
      %806 = vmatpush.bf16.msra.mxu0 0
      %807 = vmatpush.bf16.msra.mxu0 0
      %808 = vmatpush.bf16.msra.mxu0 0
      %809 = vmatpush.bf16.msra.mxu0 0
      %810 = vmatpush.bf16.msra.mxu0 0
      %811 = vmatpush.bf16.msra.mxu0 0
      %812 = vmatpush.bf16.msra.mxu0 0
      %813 = vmatpush.bf16.msra.mxu0 %v786
      %814 = vmatmul.bf16.gmra.mxu0 %v790
      %v815 = vpop.f32.mrf.mxu0
      %v816 = vadd.f32 0.0, %v815
      %v817 = vpop.f32.mrf.mxu0
      %v818 = vadd.f32 0.0, %v817
      %819 = vdwg.mxu0
      %v820 = vadd.f32 %v766, %v802
      %v821 = vadd.f32 %v767, %v816
      %v822 = vadd.f32 %v768, %v804
      %v823 = vadd.f32 %v769, %v818
      %824 = vrot.lane.b32.xlu0 %v388, 34
      %v825 = vpop.permute.xlu0 %824
      %826 = vrot.lane.b32.xlu0 %v389, 34
      %v827 = vpop.permute.xlu0 %826
      %vm828 = vcmask 277504
      %v829 = vsel %vm828, %v825, %v827
      %v833 = vmul.f32 %v471, %v825
      %v834 = vmul.f32 %v472, %v829
      %v835 = vmul.f32 %v473, %v827
      %v836 = vmul.f32 %v474, %v825
      %v837 = vmul.f32 %v475, %v829
      %v838 = vmul.f32 %v476, %v827
      %v839 = vpack.c.bf16 %v836, %v833
      %v840 = vpack.c.bf16 %v837, %v834
      %v841 = vpack.c.bf16 %v838, %v835
      %s842 = scalar_lea.vmem %s2, 64
      %v843 = vld [vmem:[%s842] sm:$0xf]
      %v844 = vld [vmem:[%s842 + $0x4] sm:$0xf]
      %v847 = vunpack.c.l.b16 %v843
      %v848 = vunpack.c.l.b16 %v844
      %v849 = vpack.c.b16 %v848, %v847
      %853 = vrot.lane.b32.xlu0 %v839, 94
      %v854 = vpop.permute.xlu0 %853
      %855 = vrot.lane.b32.xlu0 %v840, 94
      %v856 = vpop.permute.xlu0 %855
      %857 = vrot.lane.b32.xlu0 %v841, 94
      %v858 = vpop.permute.xlu0 %857
      %vm859 = vcmask 769024
      %v860 = vsel %vm859, %v854, %v856
      %v861 = vsel %vm859, %v856, %v858
      %v865 = vsel %vm304, %v849, 0
      %867 = vmatpush.bf16.msra.mxu0 0
      %868 = vmatpush.bf16.msra.mxu0 0
      %869 = vmatpush.bf16.msra.mxu0 0
      %870 = vmatpush.bf16.msra.mxu0 0
      %871 = vmatpush.bf16.msra.mxu0 0
      %872 = vmatpush.bf16.msra.mxu0 0
      %873 = vmatpush.bf16.msra.mxu0 0
      %874 = vmatpush.bf16.msra.mxu0 %v860
      %875 = vmatmul.bf16.gmra.mxu0 %v865
      %v876 = vpop.f32.mrf.mxu0
      %v877 = vadd.f32 0.0, %v876
      %v878 = vpop.f32.mrf.mxu0
      %v879 = vadd.f32 0.0, %v878
      %880 = vdwg.mxu0
      %881 = vmatpush.bf16.msra.mxu0 0
      %882 = vmatpush.bf16.msra.mxu0 0
      %883 = vmatpush.bf16.msra.mxu0 0
      %884 = vmatpush.bf16.msra.mxu0 0
      %885 = vmatpush.bf16.msra.mxu0 0
      %886 = vmatpush.bf16.msra.mxu0 0
      %887 = vmatpush.bf16.msra.mxu0 0
      %888 = vmatpush.bf16.msra.mxu0 %v861
      %889 = vmatmul.bf16.gmra.mxu0 %v865
      %v890 = vpop.f32.mrf.mxu0
      %v891 = vadd.f32 0.0, %v890
      %v892 = vpop.f32.mrf.mxu0
      %v893 = vadd.f32 0.0, %v892
      %894 = vdwg.mxu0
      %v895 = vadd.f32 %v820, %v877
      %v896 = vadd.f32 %v821, %v891
      %v897 = vadd.f32 %v822, %v879
      %v898 = vadd.f32 %v823, %v893
      %v899 = vld [vmem:[%s3] sm:$0xff]
      %v900 = vld [vmem:[%s3 + $0x8] sm:$0xff]
      %902 = vset.pattern.permute.xlu0 0
      %903 = vperm.xlu0 %902, %v899
      %v904 = vpop.permute.xlu0 %903
      %907 = vset.pattern.permute.xlu0 0
      %908 = vperm.xlu0 %907, %v900
      %v909 = vpop.permute.xlu0 %908
      %v911 = vadd.f32 %v895, %v904
      %v912 = vadd.f32 %v896, %v904
      %v913 = vadd.f32 %v897, %v909
      %v914 = vadd.f32 %v898, %v909
      %v915 = vmax.f32 %v911, 0.0
      %v916 = vmax.f32 %v912, 0.0
      %v917 = vmax.f32 %v913, 0.0
      %v918 = vmax.f32 %v914, 0.0
      %v919 = vadd.f32 %v915, %v916
      %920 = vadd.xlane.f32.xlu0 %v919
      %v921 = vpop.xlane.xlu0 %920
      %v922 = vadd.f32 %v917, %v918
      %923 = vadd.xlane.f32.xlu0 %v922
      %v924 = vpop.xlane.xlu0 %923
      %v925 = vrcp.pop 256.0
      %v926 = vmul.f32 256.0, %v925
      %v927 = vsub.f32 1.0, %v926
      %v928 = vmul.f32 %v925, %v927
      %v929 = vadd.f32 %v925, %v928
      %vm930 = vweird.f32 %v925
      %v931 = vsel %vm930, %v925, %v929
      %v932 = vmul.f32 %v921, %v931
      %v933 = vmul.f32 %v924, %v931
      %vm934 = vcmask 7168
      %935 = vst.msk [vmem:[%s197] sm:$0xff] %vm934, %v932
      %936 = vst.msk [vmem:[%s197 + $0x8] sm:$0xff] %vm934, %v933
      %p937 = scmp.lt.s32.totalorder %s15, 1
      %s938 = scalar_select %p937, %s15, 1
      %s939 = smul.addr %s938, 2
      %s940 = smul.addr %s939, 8
      %s941 = scalar_lea.vmem %s4, %s940
      // Predicated region
      $region37: #{fcabs_forward.7} parent=35 // pred_check
        %p942 = pneg %p122
      $region38: #{fcabs_forward.7} parent=35 // pred_check_branch
        %944 = sbr.rel (%p942) target = $region40
      $region39: #{fcabs_forward.7} parent=35 // pred_region
        _
      $region40: #{fcabs_forward.7} parent=35 // pred_fallthru
        _
    $region36: #{fcabs_forward.7} parent=5 // pred_fallthru
      _
    %p945 = scmp.le.s32.totalorder 2, %s10
    // Predicated region
    $region41: #{fcabs_forward.7} parent=5 // pred_check
      %p946 = pneg %p945
    $region42: #{fcabs_forward.7} parent=5 // pred_check_branch
      %948 = sbr.rel (%p946) target = $region44
    $region43: #{fcabs_forward.7} parent=5 // pred_region
      %s949 = ssub.s32 %s10, 2
      // Predicated region
      $region45: #{fcabs_forward.7} parent=43 // pred_check
        %p950 = pneg %p128
      $region46: #{fcabs_forward.7} parent=43 // pred_check_branch
        %952 = sbr.rel (%p950) target = $region48
      $region47: #{fcabs_forward.7} parent=43 // pred_region
        %p953 = scmp.lt.s32.totalorder %s16, 1
        %s954 = scalar_select %p953, %s16, 1
        %s955 = smul.addr %s954, 2
        %s956 = smul.addr %s955, 8
        %s957 = scalar_lea.vmem %s4, %s956
      $region48: #{fcabs_forward.7} parent=43 // pred_fallthru
        _
    $region44: #{fcabs_forward.7} parent=5 // pred_fallthru
      _
  $region6: #{fcabs_forward.7} parent=0 // loop_footer
    %s14 = sadd.s32 1, %s10
  $region7: #{fcabs_forward.7} parent=0 // loop_footer_branch
    %9 = sbr.rel target = $region3
  $region8: #{fcabs_forward.7} parent=0 // loop_exit
    _

// kernel: fcabs_forward.8
$region0: #{fcabs_forward.8}
  #allocation0 [shape = 'u32[]', space=smem, size = 0x4, offset = 0x4, fixed_abs, tag = 'smem constant byte address 0x4 - core index']
  #allocation1 [shape = 'u32[72,128]{1,0:T(1,128)}', space=vmem, size = 0x9000, scoped, tag = 'internal scratch']
  %s0 = inlined_call_operand.vmem [shape: f32[2,16,256], index: 0, kind: input, shape index: {}]
  %s1 = inlined_call_operand.vmem [shape: f32[2,16,1], index: 1, kind: input, shape index: {}]
  %s2 = inlined_call_operand.vmem [shape: f32[2,16,256], index: 2, kind: input, shape index: {}]
  %s3 = inlined_call_operand.vmem [shape: f32[2,16,256], index: 3, kind: output, shape index: {}]
  %s4 = sld [smem:[#allocation0]]
  $region155: #{fcabs_forward.8} parent=0
    _
  %s6 = ssub.s32 1, %s4
  %s7 = scalar_select 0, %s6, %s4
  $region1: #{fcabs_forward.8} parent=0
    #allocation2 [shape = 'u8[16384]{0}', space=vmem, size = 0x4000, scoped, tag = 'input window, operand 0']
    #allocation3 [shape = 'u8[16384]{0}', space=vmem, size = 0x4000, scoped, tag = 'input window, operand 2']
    #allocation4 [shape = 'u8[16384]{0}', space=vmem, size = 0x4000, scoped, tag = 'output window, operand 0']
    loop: start=0, step=1, limit=6
    $region2: #{fcabs_forward.8} parent=1 // loop_pre_header
      _
    $region3: #{fcabs_forward.8} parent=1 // loop_header
      %s9 = sphi 0, %s13
      %p10 = scmp.ge.s32.totalorder %s9, 6
      %s16 = sphi 0, %s28
      %s17 = sphi 0, %s24
      %s18 = sphi 0, %s16
      %s19 = sphi 0, %s17
      %s20 = sphi 0, %s18
      %s21 = sphi 0, %s19
      %s33 = sphi 0, %s35
      %s36 = sphi 0, %s33
      %s37 = sphi 0, %s36
      %s53 = sphi 0, %s37
      %s59 = sphi 0, %s61
      %s62 = sphi 0, %s59
      %s63 = sphi 0, %s62
      %s79 = sphi 0, %s63
      %s87 = sphi 0, %s89
      %s90 = sphi 0, %s87
      %s91 = sphi 0, %s90
      %s107 = sphi 0, %s91
      %s115 = sphi 0, %s117
      %s118 = sphi 0, %s115
      %s119 = sphi 0, %s118
      %s135 = sphi 0, %s119
    $region4: #{fcabs_forward.8} parent=1 // loop_header_branch
      %12 = sbr.rel (%p10) target = $region8
    $region5: #{fcabs_forward.8} parent=1 // loop_body
      %s14 = ssub.s32 %s9, 1
      %s15 = ssub.s32 %s9, 2
      %s22 = sadd.s32 1, %s17
      %p23 = scmp.ge.s32.totalorder %s22, 2
      %s24 = scalar_select %p23, 0, %s22
      %s25 = sadd.s32 1, %s16
      %s26 = scalar_select %p23, %s25, %s16
      %p27 = scmp.ge.s32.totalorder %s26, 2
      %s28 = scalar_select %p27, 0, %s26
      %s29 = ssub.s32 %s16, %s28
      %s30 = ssub.s32 %s17, %s24
      %s31 = sor.u32 %s29, %s30
      %p32 = scmp.eq.s32.totalorder %s31, 0
      %s34 = sadd.s32 %s33, 1
      %s35 = scalar_select %p32, %s33, %s34
      %p38 = pneg %p32
      %p39 = scmp.eq.s32.totalorder %s9, 3
      %p40 = por %p38, %p39
      %p41 = scmp.ne.s32.totalorder %s33, %s36
      %p42 = scmp.eq.s32.totalorder %s9, 0
      %p43 = por %p41, %p42
      %p44 = scmp.ne.s32.totalorder %s33, %s36
      %p45 = scmp.eq.s32.totalorder %s14, 3
      %p46 = por %p44, %p45
      %p47 = scmp.ne.s32.totalorder %s36, %s37
      %p48 = scmp.eq.s32.totalorder %s14, 0
      %p49 = por %p47, %p48
      %p50 = scmp.ne.s32.totalorder %s36, %s37
      %p51 = scmp.eq.s32.totalorder %s15, 3
      %p52 = por %p50, %p51
      %p54 = scmp.ne.s32.totalorder %s37, %s53
      %p55 = scmp.eq.s32.totalorder %s15, 0
      %p56 = por %p54, %p55
      %s57 = ssub.s32 %s16, %s28
      %p58 = scmp.eq.s32.totalorder %s57, 0
      %s60 = sadd.s32 %s59, 1
      %s61 = scalar_select %p58, %s59, %s60
      %p64 = pneg %p58
      %p65 = scmp.eq.s32.totalorder %s9, 3
      %p66 = por %p64, %p65
      %p67 = scmp.ne.s32.totalorder %s59, %s62
      %p68 = scmp.eq.s32.totalorder %s9, 0
      %p69 = por %p67, %p68
      %p70 = scmp.ne.s32.totalorder %s59, %s62
      %p71 = scmp.eq.s32.totalorder %s14, 3
      %p72 = por %p70, %p71
      %p73 = scmp.ne.s32.totalorder %s62, %s63
      %p74 = scmp.eq.s32.totalorder %s14, 0
      %p75 = por %p73, %p74
      %p76 = scmp.ne.s32.totalorder %s62, %s63
      %p77 = scmp.eq.s32.totalorder %s15, 3
      %p78 = por %p76, %p77
      %p80 = scmp.ne.s32.totalorder %s63, %s79
      %p81 = scmp.eq.s32.totalorder %s15, 0
      %p82 = por %p80, %p81
      %s83 = ssub.s32 %s16, %s28
      %s84 = ssub.s32 %s17, %s24
      %s85 = sor.u32 %s83, %s84
      %p86 = scmp.eq.s32.totalorder %s85, 0
      %s88 = sadd.s32 %s87, 1
      %s89 = scalar_select %p86, %s87, %s88
      %p92 = pneg %p86
      %p93 = scmp.eq.s32.totalorder %s9, 3
      %p94 = por %p92, %p93
      %p95 = scmp.ne.s32.totalorder %s87, %s90
      %p96 = scmp.eq.s32.totalorder %s9, 0
      %p97 = por %p95, %p96
      %p98 = scmp.ne.s32.totalorder %s87, %s90
      %p99 = scmp.eq.s32.totalorder %s14, 3
      %p100 = por %p98, %p99
      %p101 = scmp.ne.s32.totalorder %s90, %s91
      %p102 = scmp.eq.s32.totalorder %s14, 0
      %p103 = por %p101, %p102
      %p104 = scmp.ne.s32.totalorder %s90, %s91
      %p105 = scmp.eq.s32.totalorder %s15, 3
      %p106 = por %p104, %p105
      %p108 = scmp.ne.s32.totalorder %s91, %s107
      %p109 = scmp.eq.s32.totalorder %s15, 0
      %p110 = por %p108, %p109
      %s111 = ssub.s32 %s16, %s28
      %s112 = ssub.s32 %s17, %s24
      %s113 = sor.u32 %s111, %s112
      %p114 = scmp.eq.s32.totalorder %s113, 0
      %s116 = sadd.s32 %s115, 1
      %s117 = scalar_select %p114, %s115, %s116
      %p120 = pneg %p114
      %p121 = scmp.eq.s32.totalorder %s9, 3
      %p122 = por %p120, %p121
      %p123 = scmp.ne.s32.totalorder %s115, %s118
      %p124 = scmp.eq.s32.totalorder %s9, 0
      %p125 = por %p123, %p124
      %p126 = scmp.ne.s32.totalorder %s115, %s118
      %p127 = scmp.eq.s32.totalorder %s14, 3
      %p128 = por %p126, %p127
      %p129 = scmp.ne.s32.totalorder %s118, %s119
      %p130 = scmp.eq.s32.totalorder %s14, 0
      %p131 = por %p129, %p130
      %p132 = scmp.ne.s32.totalorder %s118, %s119
      %p133 = scmp.eq.s32.totalorder %s15, 3
      %p134 = por %p132, %p133
      %p136 = scmp.ne.s32.totalorder %s119, %s135
      %p137 = scmp.eq.s32.totalorder %s15, 0
      %p138 = por %p136, %p137
      %p139 = scmp.le.s32.totalorder 1, %s9
      %p140 = scmp.lt.s32.totalorder %s9, 5
      %p141 = pnand %p139, %p140
      %p142 = pneg %p141
      // Predicated region
      $region9: #{fcabs_forward.8} parent=5 // pred_check
        _
      $region10: #{fcabs_forward.8} parent=5 // pred_check_branch
        %144 = sbr.rel (%p141) target = $region12
      $region11: #{fcabs_forward.8} parent=5 // pred_region
        %s145 = ssub.s32 %s9, 1
      $region12: #{fcabs_forward.8} parent=5 // pred_fallthru
        _
      %p146 = scmp.lt.s32.totalorder %s9, 4
      // Predicated region
      $region13: #{fcabs_forward.8} parent=5 // pred_check
        %p147 = pneg %p146
      $region14: #{fcabs_forward.8} parent=5 // pred_check_branch
        %149 = sbr.rel (%p147) target = $region16
      $region15: #{fcabs_forward.8} parent=5 // pred_region
        // Predicated region
        $region17: #{fcabs_forward.8} parent=15 // pred_check
          %p150 = pneg %p43
        $region18: #{fcabs_forward.8} parent=15 // pred_check_branch
          %152 = sbr.rel (%p150) target = $region20
        $region19: #{fcabs_forward.8} parent=15 // pred_region
          %s153 = sand.u32 %s33, 1
          %s154 = sand.u32 %s33, 1
          %s155 = smul.addr %s154, 16
          %s156 = scalar_lea.vmem [#allocation2], %s155
          %s157 = smul.addr %s16, 4
          %s158 = sadd.s32 %s17, %s157
          %s159 = smul.addr %s158, 8
          %s160 = scalar_lea.vmem %s0, %s159
          // Predicated region
          $region21: #{fcabs_forward.8} parent=19 // pred_check
            _
          $region22: #{fcabs_forward.8} parent=19 // pred_check_branch
            %162 = sbr.rel (0) target = $region24
          $region23: #{fcabs_forward.8} parent=19 // pred_region
            // Predicated region
            $region25: #{fcabs_forward.8} parent=23 // pred_check
              _
            $region26: #{fcabs_forward.8} parent=23 // pred_check_branch
              %164 = sbr.rel (0) target = $region28
            $region27: #{fcabs_forward.8} parent=23 // pred_region
              // Predicated region
              $region40: #{fcabs_forward.8} parent=27 // pred_check
                _
              $region41: #{fcabs_forward.8} parent=27 // pred_check_branch
                %182 = sbr.rel (0) target = $region43
              $region42: #{fcabs_forward.8} parent=27 // pred_region
                loop: start=0, step=1, limit=1
                $region44: #{fcabs_forward.8} parent=42 // loop_pre_header
                  _
                $region45: #{fcabs_forward.8} parent=42 // loop_header
                  %s184 = sphi 0, %s188
                  %p185 = scmp.ge.s32.totalorder %s184, 1
                  %s189 = sphi %s160, %s160
                  %s190 = sphi %s156, %s156
                $region46: #{fcabs_forward.8} parent=42 // loop_header_branch
                  %187 = sbr.rel (%p185) target = $region50
                $region47: #{fcabs_forward.8} parent=42 // loop_body
                  %v191 = vld [vmem:[%s189] sm:$0xff]
                  %192 = vst [vmem:[%s190] sm:$0xff] %v191
                  %v193 = vld [vmem:[%s189 + $0x10] sm:$0xff]
                  %194 = vst [vmem:[%s190 + $0x8] sm:$0xff] %v193
                $region48: #{fcabs_forward.8} parent=42 // loop_footer
                  %s188 = sadd.s32 1, %s184
                $region49: #{fcabs_forward.8} parent=42 // loop_footer_branch
                  %183 = sbr.rel target = $region45
                $region50: #{fcabs_forward.8} parent=42 // loop_exit
                  _
              $region43: #{fcabs_forward.8} parent=27 // pred_fallthru
                _
              // Predicated region
              $region51: #{fcabs_forward.8} parent=27 // pred_check
                _
              $region52: #{fcabs_forward.8} parent=27 // pred_check_branch
                %196 = sbr.rel target = $region54
              $region53: #{fcabs_forward.8} parent=27 // pred_region
                _
              $region54: #{fcabs_forward.8} parent=27 // pred_fallthru
                _
            $region28: #{fcabs_forward.8} parent=23 // pred_fallthru
              _
            // Predicated region
            $region29: #{fcabs_forward.8} parent=23 // pred_check
              _
            $region30: #{fcabs_forward.8} parent=23 // pred_check_branch
              %166 = sbr.rel target = $region32
            $region31: #{fcabs_forward.8} parent=23 // pred_region
              %s168 = ssub.s32 256, 1
              loop: start=0, step=1, limit=1
              $region33: #{fcabs_forward.8} parent=31 // loop_pre_header
                _
              $region34: #{fcabs_forward.8} parent=31 // loop_header
                %s170 = sphi 0, %s174
                %p171 = scmp.ge.s32.totalorder %s170, 1
                %s175 = sphi %s160, %s160
                %s176 = sphi %s156, %s156
              $region35: #{fcabs_forward.8} parent=31 // loop_header_branch
                %173 = sbr.rel (%p171) target = $region39
              $region36: #{fcabs_forward.8} parent=31 // loop_body
                %v177 = vld [vmem:[%s175] sm:%s168]
                %178 = vst [vmem:[%s176] sm:%s168] %v177
                %v179 = vld [vmem:[%s175 + $0x10] sm:%s168]
                %180 = vst [vmem:[%s176 + $0x8] sm:%s168] %v179
              $region37: #{fcabs_forward.8} parent=31 // loop_footer
                %s174 = sadd.s32 1, %s170
              $region38: #{fcabs_forward.8} parent=31 // loop_footer_branch
                %169 = sbr.rel target = $region34
              $region39: #{fcabs_forward.8} parent=31 // loop_exit
                _
            $region32: #{fcabs_forward.8} parent=23 // pred_fallthru
              _
          $region24: #{fcabs_forward.8} parent=19 // pred_fallthru
            _
          %197 = vnop
        $region20: #{fcabs_forward.8} parent=15 // pred_fallthru
          _
        // Predicated region
        $region55: #{fcabs_forward.8} parent=15 // pred_check
          %p198 = pneg %p69
        $region56: #{fcabs_forward.8} parent=15 // pred_check_branch
          %200 = sbr.rel (%p198) target = $region58
        $region57: #{fcabs_forward.8} parent=15 // pred_region
          %p201 = scmp.lt.s32.totalorder %s16, 1
          %s202 = scalar_select %p201, %s16, 1
          %s203 = smul.addr %s202, 2
          %s204 = smul.addr %s203, 8
          %s205 = scalar_lea.vmem %s1, %s204
        $region58: #{fcabs_forward.8} parent=15 // pred_fallthru
          _
        // Predicated region
        $region59: #{fcabs_forward.8} parent=15 // pred_check
          %p206 = pneg %p97
        $region60: #{fcabs_forward.8} parent=15 // pred_check_branch
          %208 = sbr.rel (%p206) target = $region62
        $region61: #{fcabs_forward.8} parent=15 // pred_region
          %s209 = sand.u32 %s87, 1
          %s210 = sand.u32 %s87, 1
          %s211 = smul.addr %s210, 16
          %s212 = scalar_lea.vmem [#allocation3], %s211
          %s213 = smul.addr %s16, 4
          %s214 = sadd.s32 %s17, %s213
          %s215 = smul.addr %s214, 8
          %s216 = scalar_lea.vmem %s2, %s215
          // Predicated region
          $region63: #{fcabs_forward.8} parent=61 // pred_check
            _
          $region64: #{fcabs_forward.8} parent=61 // pred_check_branch
            %218 = sbr.rel (0) target = $region66
          $region65: #{fcabs_forward.8} parent=61 // pred_region
            // Predicated region
            $region67: #{fcabs_forward.8} parent=65 // pred_check
              _
            $region68: #{fcabs_forward.8} parent=65 // pred_check_branch
              %220 = sbr.rel (0) target = $region70
            $region69: #{fcabs_forward.8} parent=65 // pred_region
              // Predicated region
              $region82: #{fcabs_forward.8} parent=69 // pred_check
                _
              $region83: #{fcabs_forward.8} parent=69 // pred_check_branch
                %238 = sbr.rel (0) target = $region85
              $region84: #{fcabs_forward.8} parent=69 // pred_region
                loop: start=0, step=1, limit=1
                $region86: #{fcabs_forward.8} parent=84 // loop_pre_header
                  _
                $region87: #{fcabs_forward.8} parent=84 // loop_header
                  %s240 = sphi 0, %s244
                  %p241 = scmp.ge.s32.totalorder %s240, 1
                  %s245 = sphi %s216, %s216
                  %s246 = sphi %s212, %s212
                $region88: #{fcabs_forward.8} parent=84 // loop_header_branch
                  %243 = sbr.rel (%p241) target = $region92
                $region89: #{fcabs_forward.8} parent=84 // loop_body
                  %v247 = vld [vmem:[%s245] sm:$0xff]
                  %248 = vst [vmem:[%s246] sm:$0xff] %v247
                  %v249 = vld [vmem:[%s245 + $0x10] sm:$0xff]
                  %250 = vst [vmem:[%s246 + $0x8] sm:$0xff] %v249
                $region90: #{fcabs_forward.8} parent=84 // loop_footer
                  %s244 = sadd.s32 1, %s240
                $region91: #{fcabs_forward.8} parent=84 // loop_footer_branch
                  %239 = sbr.rel target = $region87
                $region92: #{fcabs_forward.8} parent=84 // loop_exit
                  _
              $region85: #{fcabs_forward.8} parent=69 // pred_fallthru
                _
              // Predicated region
              $region93: #{fcabs_forward.8} parent=69 // pred_check
                _
              $region94: #{fcabs_forward.8} parent=69 // pred_check_branch
                %252 = sbr.rel target = $region96
              $region95: #{fcabs_forward.8} parent=69 // pred_region
                _
              $region96: #{fcabs_forward.8} parent=69 // pred_fallthru
                _
            $region70: #{fcabs_forward.8} parent=65 // pred_fallthru
              _
            // Predicated region
            $region71: #{fcabs_forward.8} parent=65 // pred_check
              _
            $region72: #{fcabs_forward.8} parent=65 // pred_check_branch
              %222 = sbr.rel target = $region74
            $region73: #{fcabs_forward.8} parent=65 // pred_region
              %s224 = ssub.s32 256, 1
              loop: start=0, step=1, limit=1
              $region75: #{fcabs_forward.8} parent=73 // loop_pre_header
                _
              $region76: #{fcabs_forward.8} parent=73 // loop_header
                %s226 = sphi 0, %s230
                %p227 = scmp.ge.s32.totalorder %s226, 1
                %s231 = sphi %s216, %s216
                %s232 = sphi %s212, %s212
              $region77: #{fcabs_forward.8} parent=73 // loop_header_branch
                %229 = sbr.rel (%p227) target = $region81
              $region78: #{fcabs_forward.8} parent=73 // loop_body
                %v233 = vld [vmem:[%s231] sm:%s224]
                %234 = vst [vmem:[%s232] sm:%s224] %v233
                %v235 = vld [vmem:[%s231 + $0x10] sm:%s224]
                %236 = vst [vmem:[%s232 + $0x8] sm:%s224] %v235
              $region79: #{fcabs_forward.8} parent=73 // loop_footer
                %s230 = sadd.s32 1, %s226
              $region80: #{fcabs_forward.8} parent=73 // loop_footer_branch
                %225 = sbr.rel target = $region76
              $region81: #{fcabs_forward.8} parent=73 // loop_exit
                _
            $region74: #{fcabs_forward.8} parent=65 // pred_fallthru
              _
          $region66: #{fcabs_forward.8} parent=61 // pred_fallthru
            _
          %253 = vnop
        $region62: #{fcabs_forward.8} parent=15 // pred_fallthru
          _
      $region16: #{fcabs_forward.8} parent=5 // pred_fallthru
        _
      %p254 = scmp.le.s32.totalorder 1, %s9
      %p255 = scmp.lt.s32.totalorder %s9, 5
      %p256 = pnand %p254, %p255
      %p257 = pneg %p256
      // Predicated region
      $region97: #{fcabs_forward.8} parent=5 // pred_check
        _
      $region98: #{fcabs_forward.8} parent=5 // pred_check_branch
        %259 = sbr.rel (%p256) target = $region100
      $region99: #{fcabs_forward.8} parent=5 // pred_region
        %s260 = ssub.s32 %s9, 1
        %s261 = sand.u32 %s36, 1
        %s262 = sand.u32 %s36, 1
        %s263 = smul.addr %s262, 16
        %s264 = scalar_lea.vmem [#allocation2], %s263
        // Predicated region
        $region101: #{fcabs_forward.8} parent=99 // pred_check
          %p265 = pneg %p49
        $region102: #{fcabs_forward.8} parent=99 // pred_check_branch
          %267 = sbr.rel (%p265) target = $region104
        $region103: #{fcabs_forward.8} parent=99 // pred_region
          _
        $region104: #{fcabs_forward.8} parent=99 // pred_fallthru
          _
        %s268 = sand.u32 %s90, 1
        %s269 = sand.u32 %s90, 1
        %s270 = smul.addr %s269, 16
        %s271 = scalar_lea.vmem [#allocation3], %s270
        // Predicated region
        $region105: #{fcabs_forward.8} parent=99 // pred_check
          %p272 = pneg %p103
        $region106: #{fcabs_forward.8} parent=99 // pred_check_branch
          %274 = sbr.rel (%p272) target = $region108
        $region107: #{fcabs_forward.8} parent=99 // pred_region
          _
        $region108: #{fcabs_forward.8} parent=99 // pred_fallthru
          _
        %s275 = sand.u32 %s36, 1
        %s276 = sand.u32 %s36, 1
        %s277 = smul.addr %s276, 16
        %s278 = scalar_lea.vmem [#allocation2], %s277
        %p279 = pneg %p49
        %p280 = pneg %p46
        %p281 = scmp.lt.s32.totalorder %s18, 1
        %s282 = scalar_select %p281, %s18, 1
        %s283 = smul.addr %s282, 2
        %s284 = smul.addr %s283, 8
        %s285 = scalar_lea.vmem %s1, %s284
        %p286 = pneg %p75
        %p287 = pneg %p72
        %s288 = sand.u32 %s90, 1
        %s289 = sand.u32 %s90, 1
        %s290 = smul.addr %s289, 16
        %s291 = scalar_lea.vmem [#allocation3], %s290
        %p292 = pneg %p103
        %p293 = pneg %p100
        %p294 = pneg %p131
        %p295 = pneg %p128
        %s296 = sand.u32 %s118, 1
        %s297 = sand.u32 %s118, 1
        %s298 = smul.addr %s297, 16
        %s299 = scalar_lea.vmem [#allocation4], %s298
        %p300 = scmp.lt.s32.totalorder %s18, 1
        %s301 = scalar_select %p300, %s18, 1
        %s302 = smul.addr %s301, 2
        %s303 = smul.addr %s302, 8
        %s304 = scalar_lea.vmem %s1, %s303
        %v305 = vld [vmem:[%s264] sm:$0xff]
        %v306 = vld [vmem:[%s264 + $0x8] sm:$0xff]
        %v307 = vld [vmem:[%s304] sm:$0xff]
        %v308 = vld [vmem:[%s304 + $0x8] sm:$0xff]
        %310 = vset.pattern.permute.xlu0 0
        %311 = vperm.xlu0 %310, %v307
        %v312 = vpop.permute.xlu0 %311
        %315 = vset.pattern.permute.xlu0 0
        %316 = vperm.xlu0 %315, %v308
        %v317 = vpop.permute.xlu0 %316
        %v319 = vmul.f32 %v305, %v312
        %v320 = vmul.f32 %v306, %v317
        %v321 = vld [vmem:[%s271] sm:$0xff]
        %v322 = vld [vmem:[%s271 + $0x8] sm:$0xff]
        %v323 = vadd.f32 %v319, %v321
        %v324 = vadd.f32 %v320, %v322
        %325 = vst [vmem:[%s299] sm:$0xff] %v323
        %326 = vst [vmem:[%s299 + $0x8] sm:$0xff] %v324
        %s327 = sand.u32 %s118, 1
        %s328 = sand.u32 %s118, 1
        %s329 = smul.addr %s328, 16
        %s330 = scalar_lea.vmem [#allocation4], %s329
        // Predicated region
        $region109: #{fcabs_forward.8} parent=99 // pred_check
          %p331 = pneg %p128
        $region110: #{fcabs_forward.8} parent=99 // pred_check_branch
          %333 = sbr.rel (%p331) target = $region112
        $region111: #{fcabs_forward.8} parent=99 // pred_region
          %s334 = smul.addr %s18, 4
          %s335 = sadd.s32 %s19, %s334
          %s336 = smul.addr %s335, 8
          %s337 = scalar_lea.vmem %s3, %s336
          // Predicated region
          $region113: #{fcabs_forward.8} parent=111 // pred_check
            _
          $region114: #{fcabs_forward.8} parent=111 // pred_check_branch
            %339 = sbr.rel (0) target = $region116
          $region115: #{fcabs_forward.8} parent=111 // pred_region
            // Predicated region
            $region117: #{fcabs_forward.8} parent=115 // pred_check
              _
            $region118: #{fcabs_forward.8} parent=115 // pred_check_branch
              %341 = sbr.rel (0) target = $region120
            $region119: #{fcabs_forward.8} parent=115 // pred_region
              // Predicated region
              $region132: #{fcabs_forward.8} parent=119 // pred_check
                _
              $region133: #{fcabs_forward.8} parent=119 // pred_check_branch
                %359 = sbr.rel (0) target = $region135
              $region134: #{fcabs_forward.8} parent=119 // pred_region
                loop: start=0, step=1, limit=1
                $region136: #{fcabs_forward.8} parent=134 // loop_pre_header
                  _
                $region137: #{fcabs_forward.8} parent=134 // loop_header
                  %s361 = sphi 0, %s365
                  %p362 = scmp.ge.s32.totalorder %s361, 1
                  %s366 = sphi %s330, %s330
                  %s367 = sphi %s337, %s337
                $region138: #{fcabs_forward.8} parent=134 // loop_header_branch
                  %364 = sbr.rel (%p362) target = $region142
                $region139: #{fcabs_forward.8} parent=134 // loop_body
                  %v368 = vld [vmem:[%s366] sm:$0xff]
                  %369 = vst [vmem:[%s367] sm:$0xff] %v368
                  %v370 = vld [vmem:[%s366 + $0x8] sm:$0xff]
                  %371 = vst [vmem:[%s367 + $0x10] sm:$0xff] %v370
                $region140: #{fcabs_forward.8} parent=134 // loop_footer
                  %s365 = sadd.s32 1, %s361
                $region141: #{fcabs_forward.8} parent=134 // loop_footer_branch
                  %360 = sbr.rel target = $region137
                $region142: #{fcabs_forward.8} parent=134 // loop_exit
                  _
              $region135: #{fcabs_forward.8} parent=119 // pred_fallthru
                _
              // Predicated region
              $region143: #{fcabs_forward.8} parent=119 // pred_check
                _
              $region144: #{fcabs_forward.8} parent=119 // pred_check_branch
                %373 = sbr.rel target = $region146
              $region145: #{fcabs_forward.8} parent=119 // pred_region
                _
              $region146: #{fcabs_forward.8} parent=119 // pred_fallthru
                _
            $region120: #{fcabs_forward.8} parent=115 // pred_fallthru
              _
            // Predicated region
            $region121: #{fcabs_forward.8} parent=115 // pred_check
              _
            $region122: #{fcabs_forward.8} parent=115 // pred_check_branch
              %343 = sbr.rel target = $region124
            $region123: #{fcabs_forward.8} parent=115 // pred_region
              %s345 = ssub.s32 256, 1
              loop: start=0, step=1, limit=1
              $region125: #{fcabs_forward.8} parent=123 // loop_pre_header
                _
              $region126: #{fcabs_forward.8} parent=123 // loop_header
                %s347 = sphi 0, %s351
                %p348 = scmp.ge.s32.totalorder %s347, 1
                %s352 = sphi %s330, %s330
                %s353 = sphi %s337, %s337
              $region127: #{fcabs_forward.8} parent=123 // loop_header_branch
                %350 = sbr.rel (%p348) target = $region131
              $region128: #{fcabs_forward.8} parent=123 // loop_body
                %v354 = vld [vmem:[%s352] sm:%s345]
                %355 = vst [vmem:[%s353] sm:%s345] %v354
                %v356 = vld [vmem:[%s352 + $0x8] sm:%s345]
                %357 = vst [vmem:[%s353 + $0x10] sm:%s345] %v356
              $region129: #{fcabs_forward.8} parent=123 // loop_footer
                %s351 = sadd.s32 1, %s347
              $region130: #{fcabs_forward.8} parent=123 // loop_footer_branch
                %346 = sbr.rel target = $region126
              $region131: #{fcabs_forward.8} parent=123 // loop_exit
                _
            $region124: #{fcabs_forward.8} parent=115 // pred_fallthru
              _
          $region116: #{fcabs_forward.8} parent=111 // pred_fallthru
            _
          %374 = vnop
        $region112: #{fcabs_forward.8} parent=99 // pred_fallthru
          _
      $region100: #{fcabs_forward.8} parent=5 // pred_fallthru
        _
      %p375 = scmp.le.s32.totalorder 2, %s9
      // Predicated region
      $region147: #{fcabs_forward.8} parent=5 // pred_check
        %p376 = pneg %p375
      $region148: #{fcabs_forward.8} parent=5 // pred_check_branch
        %378 = sbr.rel (%p376) target = $region150
      $region149: #{fcabs_forward.8} parent=5 // pred_region
        %s379 = ssub.s32 %s9, 2
        // Predicated region
        $region151: #{fcabs_forward.8} parent=149 // pred_check
          %p380 = pneg %p134
        $region152: #{fcabs_forward.8} parent=149 // pred_check_branch
          %382 = sbr.rel (%p380) target = $region154
        $region153: #{fcabs_forward.8} parent=149 // pred_region
          %s383 = sand.u32 %s119, 1
          %s384 = sand.u32 %s119, 1
          %s385 = smul.addr %s384, 16
          %s386 = scalar_lea.vmem [#allocation4], %s385
        $region154: #{fcabs_forward.8} parent=149 // pred_fallthru
          _
      $region150: #{fcabs_forward.8} parent=5 // pred_fallthru
        _
    $region6: #{fcabs_forward.8} parent=1 // loop_footer
      %s13 = sadd.s32 1, %s9
    $region7: #{fcabs_forward.8} parent=1 // loop_footer_branch
      %8 = sbr.rel target = $region3
    $region8: #{fcabs_forward.8} parent=1 // loop_exit
      _

// kernel: fcabs_forward.11
$region0: #{fcabs_forward.11}
  #allocation0 [shape = 'u32[]', space=smem, size = 0x4, offset = 0x4, fixed_abs, tag = 'smem constant byte address 0x4 - core index']
  #allocation1 [shape = 'u32[72,128]{1,0:T(1,128)}', space=vmem, size = 0x9000, scoped, tag = 'internal scratch']
  %s0 = inlined_call_operand.vmem [shape: f32[2,16,256], index: 0, kind: input, shape index: {}]
  %s1 = inlined_call_operand.vmem [shape: f32[2,16,1], index: 1, kind: input, shape index: {}]
  %s2 = inlined_call_operand.vmem [shape: f32[2,16,256], index: 2, kind: input, shape index: {}]
  %s3 = inlined_call_operand.vmem [shape: f32[2,16,256], index: 3, kind: input, shape index: {}]
  %s4 = inlined_call_operand.vmem [shape: f32[2,16,256], index: 4, kind: output, shape index: {}]
  %s5 = sld [smem:[#allocation0]]
  $region197: #{fcabs_forward.11} parent=0
    _
  %s7 = ssub.s32 1, %s5
  %s8 = scalar_select 0, %s7, %s5
  $region1: #{fcabs_forward.11} parent=0
    #allocation2 [shape = 'u8[16384]{0}', space=vmem, size = 0x4000, scoped, tag = 'input window, operand 0']
    #allocation3 [shape = 'u8[16384]{0}', space=vmem, size = 0x4000, scoped, tag = 'input window, operand 2']
    #allocation4 [shape = 'u8[16384]{0}', space=vmem, size = 0x4000, scoped, tag = 'input window, operand 3']
    #allocation5 [shape = 'u8[16384]{0}', space=vmem, size = 0x4000, scoped, tag = 'output window, operand 0']
    loop: start=0, step=1, limit=6
    $region2: #{fcabs_forward.11} parent=1 // loop_pre_header
      _
    $region3: #{fcabs_forward.11} parent=1 // loop_header
      %s10 = sphi 0, %s14
      %p11 = scmp.ge.s32.totalorder %s10, 6
      %s17 = sphi 0, %s29
      %s18 = sphi 0, %s25
      %s19 = sphi 0, %s17
      %s20 = sphi 0, %s18
      %s21 = sphi 0, %s19
      %s22 = sphi 0, %s20
      %s34 = sphi 0, %s36
      %s37 = sphi 0, %s34
      %s38 = sphi 0, %s37
      %s54 = sphi 0, %s38
      %s60 = sphi 0, %s62
      %s63 = sphi 0, %s60
      %s64 = sphi 0, %s63
      %s80 = sphi 0, %s64
      %s88 = sphi 0, %s90
      %s91 = sphi 0, %s88
      %s92 = sphi 0, %s91
      %s108 = sphi 0, %s92
      %s116 = sphi 0, %s118
      %s119 = sphi 0, %s116
      %s120 = sphi 0, %s119
      %s136 = sphi 0, %s120
      %s144 = sphi 0, %s146
      %s147 = sphi 0, %s144
      %s148 = sphi 0, %s147
      %s164 = sphi 0, %s148
    $region4: #{fcabs_forward.11} parent=1 // loop_header_branch
      %13 = sbr.rel (%p11) target = $region8
    $region5: #{fcabs_forward.11} parent=1 // loop_body
      %s15 = ssub.s32 %s10, 1
      %s16 = ssub.s32 %s10, 2
      %s23 = sadd.s32 1, %s18
      %p24 = scmp.ge.s32.totalorder %s23, 2
      %s25 = scalar_select %p24, 0, %s23
      %s26 = sadd.s32 1, %s17
      %s27 = scalar_select %p24, %s26, %s17
      %p28 = scmp.ge.s32.totalorder %s27, 2
      %s29 = scalar_select %p28, 0, %s27
      %s30 = ssub.s32 %s17, %s29
      %s31 = ssub.s32 %s18, %s25
      %s32 = sor.u32 %s30, %s31
      %p33 = scmp.eq.s32.totalorder %s32, 0
      %s35 = sadd.s32 %s34, 1
      %s36 = scalar_select %p33, %s34, %s35
      %p39 = pneg %p33
      %p40 = scmp.eq.s32.totalorder %s10, 3
      %p41 = por %p39, %p40
      %p42 = scmp.ne.s32.totalorder %s34, %s37
      %p43 = scmp.eq.s32.totalorder %s10, 0
      %p44 = por %p42, %p43
      %p45 = scmp.ne.s32.totalorder %s34, %s37
      %p46 = scmp.eq.s32.totalorder %s15, 3
      %p47 = por %p45, %p46
      %p48 = scmp.ne.s32.totalorder %s37, %s38
      %p49 = scmp.eq.s32.totalorder %s15, 0
      %p50 = por %p48, %p49
      %p51 = scmp.ne.s32.totalorder %s37, %s38
      %p52 = scmp.eq.s32.totalorder %s16, 3
      %p53 = por %p51, %p52
      %p55 = scmp.ne.s32.totalorder %s38, %s54
      %p56 = scmp.eq.s32.totalorder %s16, 0
      %p57 = por %p55, %p56
      %s58 = ssub.s32 %s17, %s29
      %p59 = scmp.eq.s32.totalorder %s58, 0
      %s61 = sadd.s32 %s60, 1
      %s62 = scalar_select %p59, %s60, %s61
      %p65 = pneg %p59
      %p66 = scmp.eq.s32.totalorder %s10, 3
      %p67 = por %p65, %p66
      %p68 = scmp.ne.s32.totalorder %s60, %s63
      %p69 = scmp.eq.s32.totalorder %s10, 0
      %p70 = por %p68, %p69
      %p71 = scmp.ne.s32.totalorder %s60, %s63
      %p72 = scmp.eq.s32.totalorder %s15, 3
      %p73 = por %p71, %p72
      %p74 = scmp.ne.s32.totalorder %s63, %s64
      %p75 = scmp.eq.s32.totalorder %s15, 0
      %p76 = por %p74, %p75
      %p77 = scmp.ne.s32.totalorder %s63, %s64
      %p78 = scmp.eq.s32.totalorder %s16, 3
      %p79 = por %p77, %p78
      %p81 = scmp.ne.s32.totalorder %s64, %s80
      %p82 = scmp.eq.s32.totalorder %s16, 0
      %p83 = por %p81, %p82
      %s84 = ssub.s32 %s17, %s29
      %s85 = ssub.s32 %s18, %s25
      %s86 = sor.u32 %s84, %s85
      %p87 = scmp.eq.s32.totalorder %s86, 0
      %s89 = sadd.s32 %s88, 1
      %s90 = scalar_select %p87, %s88, %s89
      %p93 = pneg %p87
      %p94 = scmp.eq.s32.totalorder %s10, 3
      %p95 = por %p93, %p94
      %p96 = scmp.ne.s32.totalorder %s88, %s91
      %p97 = scmp.eq.s32.totalorder %s10, 0
      %p98 = por %p96, %p97
      %p99 = scmp.ne.s32.totalorder %s88, %s91
      %p100 = scmp.eq.s32.totalorder %s15, 3
      %p101 = por %p99, %p100
      %p102 = scmp.ne.s32.totalorder %s91, %s92
      %p103 = scmp.eq.s32.totalorder %s15, 0
      %p104 = por %p102, %p103
      %p105 = scmp.ne.s32.totalorder %s91, %s92
      %p106 = scmp.eq.s32.totalorder %s16, 3
      %p107 = por %p105, %p106
      %p109 = scmp.ne.s32.totalorder %s92, %s108
      %p110 = scmp.eq.s32.totalorder %s16, 0
      %p111 = por %p109, %p110
      %s112 = ssub.s32 %s17, %s29
      %s113 = ssub.s32 %s18, %s25
      %s114 = sor.u32 %s112, %s113
      %p115 = scmp.eq.s32.totalorder %s114, 0
      %s117 = sadd.s32 %s116, 1
      %s118 = scalar_select %p115, %s116, %s117
      %p121 = pneg %p115
      %p122 = scmp.eq.s32.totalorder %s10, 3
      %p123 = por %p121, %p122
      %p124 = scmp.ne.s32.totalorder %s116, %s119
      %p125 = scmp.eq.s32.totalorder %s10, 0
      %p126 = por %p124, %p125
      %p127 = scmp.ne.s32.totalorder %s116, %s119
      %p128 = scmp.eq.s32.totalorder %s15, 3
      %p129 = por %p127, %p128
      %p130 = scmp.ne.s32.totalorder %s119, %s120
      %p131 = scmp.eq.s32.totalorder %s15, 0
      %p132 = por %p130, %p131
      %p133 = scmp.ne.s32.totalorder %s119, %s120
      %p134 = scmp.eq.s32.totalorder %s16, 3
      %p135 = por %p133, %p134
      %p137 = scmp.ne.s32.totalorder %s120, %s136
      %p138 = scmp.eq.s32.totalorder %s16, 0
      %p139 = por %p137, %p138
      %s140 = ssub.s32 %s17, %s29
      %s141 = ssub.s32 %s18, %s25
      %s142 = sor.u32 %s140, %s141
      %p143 = scmp.eq.s32.totalorder %s142, 0
      %s145 = sadd.s32 %s144, 1
      %s146 = scalar_select %p143, %s144, %s145
      %p149 = pneg %p143
      %p150 = scmp.eq.s32.totalorder %s10, 3
      %p151 = por %p149, %p150
      %p152 = scmp.ne.s32.totalorder %s144, %s147
      %p153 = scmp.eq.s32.totalorder %s10, 0
      %p154 = por %p152, %p153
      %p155 = scmp.ne.s32.totalorder %s144, %s147
      %p156 = scmp.eq.s32.totalorder %s15, 3
      %p157 = por %p155, %p156
      %p158 = scmp.ne.s32.totalorder %s147, %s148
      %p159 = scmp.eq.s32.totalorder %s15, 0
      %p160 = por %p158, %p159
      %p161 = scmp.ne.s32.totalorder %s147, %s148
      %p162 = scmp.eq.s32.totalorder %s16, 3
      %p163 = por %p161, %p162
      %p165 = scmp.ne.s32.totalorder %s148, %s164
      %p166 = scmp.eq.s32.totalorder %s16, 0
      %p167 = por %p165, %p166
      %p168 = scmp.le.s32.totalorder 1, %s10
      %p169 = scmp.lt.s32.totalorder %s10, 5
      %p170 = pnand %p168, %p169
      %p171 = pneg %p170
      // Predicated region
      $region9: #{fcabs_forward.11} parent=5 // pred_check
        _
      $region10: #{fcabs_forward.11} parent=5 // pred_check_branch
        %173 = sbr.rel (%p170) target = $region12
      $region11: #{fcabs_forward.11} parent=5 // pred_region
        %s174 = ssub.s32 %s10, 1
      $region12: #{fcabs_forward.11} parent=5 // pred_fallthru
        _
      %p175 = scmp.lt.s32.totalorder %s10, 4
      // Predicated region
      $region13: #{fcabs_forward.11} parent=5 // pred_check
        %p176 = pneg %p175
      $region14: #{fcabs_forward.11} parent=5 // pred_check_branch
        %178 = sbr.rel (%p176) target = $region16
      $region15: #{fcabs_forward.11} parent=5 // pred_region
        // Predicated region
        $region17: #{fcabs_forward.11} parent=15 // pred_check
          %p179 = pneg %p44
        $region18: #{fcabs_forward.11} parent=15 // pred_check_branch
          %181 = sbr.rel (%p179) target = $region20
        $region19: #{fcabs_forward.11} parent=15 // pred_region
          %s182 = sand.u32 %s34, 1
          %s183 = sand.u32 %s34, 1
          %s184 = smul.addr %s183, 16
          %s185 = scalar_lea.vmem [#allocation2], %s184
          %s186 = smul.addr %s17, 4
          %s187 = sadd.s32 %s18, %s186
          %s188 = smul.addr %s187, 8
          %s189 = scalar_lea.vmem %s0, %s188
          // Predicated region
          $region21: #{fcabs_forward.11} parent=19 // pred_check
            _
          $region22: #{fcabs_forward.11} parent=19 // pred_check_branch
            %191 = sbr.rel (0) target = $region24
          $region23: #{fcabs_forward.11} parent=19 // pred_region
            // Predicated region
            $region25: #{fcabs_forward.11} parent=23 // pred_check
              _
            $region26: #{fcabs_forward.11} parent=23 // pred_check_branch
              %193 = sbr.rel (0) target = $region28
            $region27: #{fcabs_forward.11} parent=23 // pred_region
              // Predicated region
              $region40: #{fcabs_forward.11} parent=27 // pred_check
                _
              $region41: #{fcabs_forward.11} parent=27 // pred_check_branch
                %211 = sbr.rel (0) target = $region43
              $region42: #{fcabs_forward.11} parent=27 // pred_region
                loop: start=0, step=1, limit=1
                $region44: #{fcabs_forward.11} parent=42 // loop_pre_header
                  _
                $region45: #{fcabs_forward.11} parent=42 // loop_header
                  %s213 = sphi 0, %s217
                  %p214 = scmp.ge.s32.totalorder %s213, 1
                  %s218 = sphi %s189, %s189
                  %s219 = sphi %s185, %s185
                $region46: #{fcabs_forward.11} parent=42 // loop_header_branch
                  %216 = sbr.rel (%p214) target = $region50
                $region47: #{fcabs_forward.11} parent=42 // loop_body
                  %v220 = vld [vmem:[%s218] sm:$0xff]
                  %221 = vst [vmem:[%s219] sm:$0xff] %v220
                  %v222 = vld [vmem:[%s218 + $0x10] sm:$0xff]
                  %223 = vst [vmem:[%s219 + $0x8] sm:$0xff] %v222
                $region48: #{fcabs_forward.11} parent=42 // loop_footer
                  %s217 = sadd.s32 1, %s213
                $region49: #{fcabs_forward.11} parent=42 // loop_footer_branch
                  %212 = sbr.rel target = $region45
                $region50: #{fcabs_forward.11} parent=42 // loop_exit
                  _
              $region43: #{fcabs_forward.11} parent=27 // pred_fallthru
                _
              // Predicated region
              $region51: #{fcabs_forward.11} parent=27 // pred_check
                _
              $region52: #{fcabs_forward.11} parent=27 // pred_check_branch
                %225 = sbr.rel target = $region54
              $region53: #{fcabs_forward.11} parent=27 // pred_region
                _
              $region54: #{fcabs_forward.11} parent=27 // pred_fallthru
                _
            $region28: #{fcabs_forward.11} parent=23 // pred_fallthru
              _
            // Predicated region
            $region29: #{fcabs_forward.11} parent=23 // pred_check
              _
            $region30: #{fcabs_forward.11} parent=23 // pred_check_branch
              %195 = sbr.rel target = $region32
            $region31: #{fcabs_forward.11} parent=23 // pred_region
              %s197 = ssub.s32 256, 1
              loop: start=0, step=1, limit=1
              $region33: #{fcabs_forward.11} parent=31 // loop_pre_header
                _
              $region34: #{fcabs_forward.11} parent=31 // loop_header
                %s199 = sphi 0, %s203
                %p200 = scmp.ge.s32.totalorder %s199, 1
                %s204 = sphi %s189, %s189
                %s205 = sphi %s185, %s185
              $region35: #{fcabs_forward.11} parent=31 // loop_header_branch
                %202 = sbr.rel (%p200) target = $region39
              $region36: #{fcabs_forward.11} parent=31 // loop_body
                %v206 = vld [vmem:[%s204] sm:%s197]
                %207 = vst [vmem:[%s205] sm:%s197] %v206
                %v208 = vld [vmem:[%s204 + $0x10] sm:%s197]
                %209 = vst [vmem:[%s205 + $0x8] sm:%s197] %v208
              $region37: #{fcabs_forward.11} parent=31 // loop_footer
                %s203 = sadd.s32 1, %s199
              $region38: #{fcabs_forward.11} parent=31 // loop_footer_branch
                %198 = sbr.rel target = $region34
              $region39: #{fcabs_forward.11} parent=31 // loop_exit
                _
            $region32: #{fcabs_forward.11} parent=23 // pred_fallthru
              _
          $region24: #{fcabs_forward.11} parent=19 // pred_fallthru
            _
          %226 = vnop
        $region20: #{fcabs_forward.11} parent=15 // pred_fallthru
          _
        // Predicated region
        $region55: #{fcabs_forward.11} parent=15 // pred_check
          %p227 = pneg %p70
        $region56: #{fcabs_forward.11} parent=15 // pred_check_branch
          %229 = sbr.rel (%p227) target = $region58
        $region57: #{fcabs_forward.11} parent=15 // pred_region
          %p230 = scmp.lt.s32.totalorder %s17, 1
          %s231 = scalar_select %p230, %s17, 1
          %s232 = smul.addr %s231, 2
          %s233 = smul.addr %s232, 8
          %s234 = scalar_lea.vmem %s1, %s233
        $region58: #{fcabs_forward.11} parent=15 // pred_fallthru
          _
        // Predicated region
        $region59: #{fcabs_forward.11} parent=15 // pred_check
          %p235 = pneg %p98
        $region60: #{fcabs_forward.11} parent=15 // pred_check_branch
          %237 = sbr.rel (%p235) target = $region62
        $region61: #{fcabs_forward.11} parent=15 // pred_region
          %s238 = sand.u32 %s88, 1
          %s239 = sand.u32 %s88, 1
          %s240 = smul.addr %s239, 16
          %s241 = scalar_lea.vmem [#allocation3], %s240
          %s242 = smul.addr %s17, 4
          %s243 = sadd.s32 %s18, %s242
          %s244 = smul.addr %s243, 8
          %s245 = scalar_lea.vmem %s2, %s244
          // Predicated region
          $region63: #{fcabs_forward.11} parent=61 // pred_check
            _
          $region64: #{fcabs_forward.11} parent=61 // pred_check_branch
            %247 = sbr.rel (0) target = $region66
          $region65: #{fcabs_forward.11} parent=61 // pred_region
            // Predicated region
            $region67: #{fcabs_forward.11} parent=65 // pred_check
              _
            $region68: #{fcabs_forward.11} parent=65 // pred_check_branch
              %249 = sbr.rel (0) target = $region70
            $region69: #{fcabs_forward.11} parent=65 // pred_region
              // Predicated region
              $region82: #{fcabs_forward.11} parent=69 // pred_check
                _
              $region83: #{fcabs_forward.11} parent=69 // pred_check_branch
                %267 = sbr.rel (0) target = $region85
              $region84: #{fcabs_forward.11} parent=69 // pred_region
                loop: start=0, step=1, limit=1
                $region86: #{fcabs_forward.11} parent=84 // loop_pre_header
                  _
                $region87: #{fcabs_forward.11} parent=84 // loop_header
                  %s269 = sphi 0, %s273
                  %p270 = scmp.ge.s32.totalorder %s269, 1
                  %s274 = sphi %s245, %s245
                  %s275 = sphi %s241, %s241
                $region88: #{fcabs_forward.11} parent=84 // loop_header_branch
                  %272 = sbr.rel (%p270) target = $region92
                $region89: #{fcabs_forward.11} parent=84 // loop_body
                  %v276 = vld [vmem:[%s274] sm:$0xff]
                  %277 = vst [vmem:[%s275] sm:$0xff] %v276
                  %v278 = vld [vmem:[%s274 + $0x10] sm:$0xff]
                  %279 = vst [vmem:[%s275 + $0x8] sm:$0xff] %v278
                $region90: #{fcabs_forward.11} parent=84 // loop_footer
                  %s273 = sadd.s32 1, %s269
                $region91: #{fcabs_forward.11} parent=84 // loop_footer_branch
                  %268 = sbr.rel target = $region87
                $region92: #{fcabs_forward.11} parent=84 // loop_exit
                  _
              $region85: #{fcabs_forward.11} parent=69 // pred_fallthru
                _
              // Predicated region
              $region93: #{fcabs_forward.11} parent=69 // pred_check
                _
              $region94: #{fcabs_forward.11} parent=69 // pred_check_branch
                %281 = sbr.rel target = $region96
              $region95: #{fcabs_forward.11} parent=69 // pred_region
                _
              $region96: #{fcabs_forward.11} parent=69 // pred_fallthru
                _
            $region70: #{fcabs_forward.11} parent=65 // pred_fallthru
              _
            // Predicated region
            $region71: #{fcabs_forward.11} parent=65 // pred_check
              _
            $region72: #{fcabs_forward.11} parent=65 // pred_check_branch
              %251 = sbr.rel target = $region74
            $region73: #{fcabs_forward.11} parent=65 // pred_region
              %s253 = ssub.s32 256, 1
              loop: start=0, step=1, limit=1
              $region75: #{fcabs_forward.11} parent=73 // loop_pre_header
                _
              $region76: #{fcabs_forward.11} parent=73 // loop_header
                %s255 = sphi 0, %s259
                %p256 = scmp.ge.s32.totalorder %s255, 1
                %s260 = sphi %s245, %s245
                %s261 = sphi %s241, %s241
              $region77: #{fcabs_forward.11} parent=73 // loop_header_branch
                %258 = sbr.rel (%p256) target = $region81
              $region78: #{fcabs_forward.11} parent=73 // loop_body
                %v262 = vld [vmem:[%s260] sm:%s253]
                %263 = vst [vmem:[%s261] sm:%s253] %v262
                %v264 = vld [vmem:[%s260 + $0x10] sm:%s253]
                %265 = vst [vmem:[%s261 + $0x8] sm:%s253] %v264
              $region79: #{fcabs_forward.11} parent=73 // loop_footer
                %s259 = sadd.s32 1, %s255
              $region80: #{fcabs_forward.11} parent=73 // loop_footer_branch
                %254 = sbr.rel target = $region76
              $region81: #{fcabs_forward.11} parent=73 // loop_exit
                _
            $region74: #{fcabs_forward.11} parent=65 // pred_fallthru
              _
          $region66: #{fcabs_forward.11} parent=61 // pred_fallthru
            _
          %282 = vnop
        $region62: #{fcabs_forward.11} parent=15 // pred_fallthru
          _
        // Predicated region
        $region97: #{fcabs_forward.11} parent=15 // pred_check
          %p283 = pneg %p126
        $region98: #{fcabs_forward.11} parent=15 // pred_check_branch
          %285 = sbr.rel (%p283) target = $region100
        $region99: #{fcabs_forward.11} parent=15 // pred_region
          %s286 = sand.u32 %s116, 1
          %s287 = sand.u32 %s116, 1
          %s288 = smul.addr %s287, 16
          %s289 = scalar_lea.vmem [#allocation4], %s288
          %s290 = smul.addr %s17, 4
          %s291 = sadd.s32 %s18, %s290
          %s292 = smul.addr %s291, 8
          %s293 = scalar_lea.vmem %s3, %s292
          // Predicated region
          $region101: #{fcabs_forward.11} parent=99 // pred_check
            _
          $region102: #{fcabs_forward.11} parent=99 // pred_check_branch
            %295 = sbr.rel (0) target = $region104
          $region103: #{fcabs_forward.11} parent=99 // pred_region
            // Predicated region
            $region105: #{fcabs_forward.11} parent=103 // pred_check
              _
            $region106: #{fcabs_forward.11} parent=103 // pred_check_branch
              %297 = sbr.rel (0) target = $region108
            $region107: #{fcabs_forward.11} parent=103 // pred_region
              // Predicated region
              $region120: #{fcabs_forward.11} parent=107 // pred_check
                _
              $region121: #{fcabs_forward.11} parent=107 // pred_check_branch
                %315 = sbr.rel (0) target = $region123
              $region122: #{fcabs_forward.11} parent=107 // pred_region
                loop: start=0, step=1, limit=1
                $region124: #{fcabs_forward.11} parent=122 // loop_pre_header
                  _
                $region125: #{fcabs_forward.11} parent=122 // loop_header
                  %s317 = sphi 0, %s321
                  %p318 = scmp.ge.s32.totalorder %s317, 1
                  %s322 = sphi %s293, %s293
                  %s323 = sphi %s289, %s289
                $region126: #{fcabs_forward.11} parent=122 // loop_header_branch
                  %320 = sbr.rel (%p318) target = $region130
                $region127: #{fcabs_forward.11} parent=122 // loop_body
                  %v324 = vld [vmem:[%s322] sm:$0xff]
                  %325 = vst [vmem:[%s323] sm:$0xff] %v324
                  %v326 = vld [vmem:[%s322 + $0x10] sm:$0xff]
                  %327 = vst [vmem:[%s323 + $0x8] sm:$0xff] %v326
                $region128: #{fcabs_forward.11} parent=122 // loop_footer
                  %s321 = sadd.s32 1, %s317
                $region129: #{fcabs_forward.11} parent=122 // loop_footer_branch
                  %316 = sbr.rel target = $region125
                $region130: #{fcabs_forward.11} parent=122 // loop_exit
                  _
              $region123: #{fcabs_forward.11} parent=107 // pred_fallthru
                _
              // Predicated region
              $region131: #{fcabs_forward.11} parent=107 // pred_check
                _
              $region132: #{fcabs_forward.11} parent=107 // pred_check_branch
                %329 = sbr.rel target = $region134
              $region133: #{fcabs_forward.11} parent=107 // pred_region
                _
              $region134: #{fcabs_forward.11} parent=107 // pred_fallthru
                _
            $region108: #{fcabs_forward.11} parent=103 // pred_fallthru
              _
            // Predicated region
            $region109: #{fcabs_forward.11} parent=103 // pred_check
              _
            $region110: #{fcabs_forward.11} parent=103 // pred_check_branch
              %299 = sbr.rel target = $region112
            $region111: #{fcabs_forward.11} parent=103 // pred_region
              %s301 = ssub.s32 256, 1
              loop: start=0, step=1, limit=1
              $region113: #{fcabs_forward.11} parent=111 // loop_pre_header
                _
              $region114: #{fcabs_forward.11} parent=111 // loop_header
                %s303 = sphi 0, %s307
                %p304 = scmp.ge.s32.totalorder %s303, 1
                %s308 = sphi %s293, %s293
                %s309 = sphi %s289, %s289
              $region115: #{fcabs_forward.11} parent=111 // loop_header_branch
                %306 = sbr.rel (%p304) target = $region119
              $region116: #{fcabs_forward.11} parent=111 // loop_body
                %v310 = vld [vmem:[%s308] sm:%s301]
                %311 = vst [vmem:[%s309] sm:%s301] %v310
                %v312 = vld [vmem:[%s308 + $0x10] sm:%s301]
                %313 = vst [vmem:[%s309 + $0x8] sm:%s301] %v312
              $region117: #{fcabs_forward.11} parent=111 // loop_footer
                %s307 = sadd.s32 1, %s303
              $region118: #{fcabs_forward.11} parent=111 // loop_footer_branch
                %302 = sbr.rel target = $region114
              $region119: #{fcabs_forward.11} parent=111 // loop_exit
                _
            $region112: #{fcabs_forward.11} parent=103 // pred_fallthru
              _
          $region104: #{fcabs_forward.11} parent=99 // pred_fallthru
            _
          %330 = vnop
        $region100: #{fcabs_forward.11} parent=15 // pred_fallthru
          _
      $region16: #{fcabs_forward.11} parent=5 // pred_fallthru
        _
      %p331 = scmp.le.s32.totalorder 1, %s10
      %p332 = scmp.lt.s32.totalorder %s10, 5
      %p333 = pnand %p331, %p332
      %p334 = pneg %p333
      // Predicated region
      $region135: #{fcabs_forward.11} parent=5 // pred_check
        _
      $region136: #{fcabs_forward.11} parent=5 // pred_check_branch
        %336 = sbr.rel (%p333) target = $region138
      $region137: #{fcabs_forward.11} parent=5 // pred_region
        %s337 = ssub.s32 %s10, 1
        %s338 = sand.u32 %s37, 1
        %s339 = sand.u32 %s37, 1
        %s340 = smul.addr %s339, 16
        %s341 = scalar_lea.vmem [#allocation2], %s340
        // Predicated region
        $region139: #{fcabs_forward.11} parent=137 // pred_check
          %p342 = pneg %p50
        $region140: #{fcabs_forward.11} parent=137 // pred_check_branch
          %344 = sbr.rel (%p342) target = $region142
        $region141: #{fcabs_forward.11} parent=137 // pred_region
          _
        $region142: #{fcabs_forward.11} parent=137 // pred_fallthru
          _
        %s345 = sand.u32 %s91, 1
        %s346 = sand.u32 %s91, 1
        %s347 = smul.addr %s346, 16
        %s348 = scalar_lea.vmem [#allocation3], %s347
        // Predicated region
        $region143: #{fcabs_forward.11} parent=137 // pred_check
          %p349 = pneg %p104
        $region144: #{fcabs_forward.11} parent=137 // pred_check_branch
          %351 = sbr.rel (%p349) target = $region146
        $region145: #{fcabs_forward.11} parent=137 // pred_region
          _
        $region146: #{fcabs_forward.11} parent=137 // pred_fallthru
          _
        %s352 = sand.u32 %s119, 1
        %s353 = sand.u32 %s119, 1
        %s354 = smul.addr %s353, 16
        %s355 = scalar_lea.vmem [#allocation4], %s354
        // Predicated region
        $region147: #{fcabs_forward.11} parent=137 // pred_check
          %p356 = pneg %p132
        $region148: #{fcabs_forward.11} parent=137 // pred_check_branch
          %358 = sbr.rel (%p356) target = $region150
        $region149: #{fcabs_forward.11} parent=137 // pred_region
          _
        $region150: #{fcabs_forward.11} parent=137 // pred_fallthru
          _
        %s359 = sand.u32 %s37, 1
        %s360 = sand.u32 %s37, 1
        %s361 = smul.addr %s360, 16
        %s362 = scalar_lea.vmem [#allocation2], %s361
        %p363 = pneg %p50
        %p364 = pneg %p47
        %p365 = scmp.lt.s32.totalorder %s19, 1
        %s366 = scalar_select %p365, %s19, 1
        %s367 = smul.addr %s366, 2
        %s368 = smul.addr %s367, 8
        %s369 = scalar_lea.vmem %s1, %s368
        %p370 = pneg %p76
        %p371 = pneg %p73
        %s372 = sand.u32 %s91, 1
        %s373 = sand.u32 %s91, 1
        %s374 = smul.addr %s373, 16
        %s375 = scalar_lea.vmem [#allocation3], %s374
        %p376 = pneg %p104
        %p377 = pneg %p101
        %s378 = sand.u32 %s119, 1
        %s379 = sand.u32 %s119, 1
        %s380 = smul.addr %s379, 16
        %s381 = scalar_lea.vmem [#allocation4], %s380
        %p382 = pneg %p132
        %p383 = pneg %p129
        %p384 = pneg %p160
        %p385 = pneg %p157
        %s386 = sand.u32 %s147, 1
        %s387 = sand.u32 %s147, 1
        %s388 = smul.addr %s387, 16
        %s389 = scalar_lea.vmem [#allocation5], %s388
        %p390 = scmp.lt.s32.totalorder %s19, 1
        %s391 = scalar_select %p390, %s19, 1
        %s392 = smul.addr %s391, 2
        %s393 = smul.addr %s392, 8
        %s394 = scalar_lea.vmem %s1, %s393
        %v395 = vld [vmem:[%s341] sm:$0xff]
        %v396 = vld [vmem:[%s341 + $0x8] sm:$0xff]
        %v397 = vld [vmem:[%s394] sm:$0xff]
        %v398 = vld [vmem:[%s394 + $0x8] sm:$0xff]
        %400 = vset.pattern.permute.xlu0 0
        %401 = vperm.xlu0 %400, %v397
        %v402 = vpop.permute.xlu0 %401
        %405 = vset.pattern.permute.xlu0 0
        %406 = vperm.xlu0 %405, %v398
        %v407 = vpop.permute.xlu0 %406
        %v409 = vmul.f32 %v395, %v402
        %v410 = vmul.f32 %v396, %v407
        %v411 = vld [vmem:[%s348] sm:$0xff]
        %v412 = vld [vmem:[%s348 + $0x8] sm:$0xff]
        %v413 = vadd.f32 %v409, %v411
        %v414 = vadd.f32 %v410, %v412
        %v415 = vld [vmem:[%s355] sm:$0xff]
        %v416 = vld [vmem:[%s355 + $0x8] sm:$0xff]
        %v417 = vadd.f32 %v413, %v415
        %v418 = vadd.f32 %v414, %v416
        %419 = vst [vmem:[%s389] sm:$0xff] %v417
        %420 = vst [vmem:[%s389 + $0x8] sm:$0xff] %v418
        %s421 = sand.u32 %s147, 1
        %s422 = sand.u32 %s147, 1
        %s423 = smul.addr %s422, 16
        %s424 = scalar_lea.vmem [#allocation5], %s423
        // Predicated region
        $region151: #{fcabs_forward.11} parent=137 // pred_check
          %p425 = pneg %p157
        $region152: #{fcabs_forward.11} parent=137 // pred_check_branch
          %427 = sbr.rel (%p425) target = $region154
        $region153: #{fcabs_forward.11} parent=137 // pred_region
          %s428 = smul.addr %s19, 4
          %s429 = sadd.s32 %s20, %s428
          %s430 = smul.addr %s429, 8
          %s431 = scalar_lea.vmem %s4, %s430
          // Predicated region
          $region155: #{fcabs_forward.11} parent=153 // pred_check
            _
          $region156: #{fcabs_forward.11} parent=153 // pred_check_branch
            %433 = sbr.rel (0) target = $region158
          $region157: #{fcabs_forward.11} parent=153 // pred_region
            // Predicated region
            $region159: #{fcabs_forward.11} parent=157 // pred_check
              _
            $region160: #{fcabs_forward.11} parent=157 // pred_check_branch
              %435 = sbr.rel (0) target = $region162
            $region161: #{fcabs_forward.11} parent=157 // pred_region
              // Predicated region
              $region174: #{fcabs_forward.11} parent=161 // pred_check
                _
              $region175: #{fcabs_forward.11} parent=161 // pred_check_branch
                %453 = sbr.rel (0) target = $region177
              $region176: #{fcabs_forward.11} parent=161 // pred_region
                loop: start=0, step=1, limit=1
                $region178: #{fcabs_forward.11} parent=176 // loop_pre_header
                  _
                $region179: #{fcabs_forward.11} parent=176 // loop_header
                  %s455 = sphi 0, %s459
                  %p456 = scmp.ge.s32.totalorder %s455, 1
                  %s460 = sphi %s424, %s424
                  %s461 = sphi %s431, %s431
                $region180: #{fcabs_forward.11} parent=176 // loop_header_branch
                  %458 = sbr.rel (%p456) target = $region184
                $region181: #{fcabs_forward.11} parent=176 // loop_body
                  %v462 = vld [vmem:[%s460] sm:$0xff]
                  %463 = vst [vmem:[%s461] sm:$0xff] %v462
                  %v464 = vld [vmem:[%s460 + $0x8] sm:$0xff]
                  %465 = vst [vmem:[%s461 + $0x10] sm:$0xff] %v464
                $region182: #{fcabs_forward.11} parent=176 // loop_footer
                  %s459 = sadd.s32 1, %s455
                $region183: #{fcabs_forward.11} parent=176 // loop_footer_branch
                  %454 = sbr.rel target = $region179
                $region184: #{fcabs_forward.11} parent=176 // loop_exit
                  _
              $region177: #{fcabs_forward.11} parent=161 // pred_fallthru
                _
              // Predicated region
              $region185: #{fcabs_forward.11} parent=161 // pred_check
                _
              $region186: #{fcabs_forward.11} parent=161 // pred_check_branch
                %467 = sbr.rel target = $region188
              $region187: #{fcabs_forward.11} parent=161 // pred_region
                _
              $region188: #{fcabs_forward.11} parent=161 // pred_fallthru
                _
            $region162: #{fcabs_forward.11} parent=157 // pred_fallthru
              _
            // Predicated region
            $region163: #{fcabs_forward.11} parent=157 // pred_check
              _
            $region164: #{fcabs_forward.11} parent=157 // pred_check_branch
              %437 = sbr.rel target = $region166
            $region165: #{fcabs_forward.11} parent=157 // pred_region
              %s439 = ssub.s32 256, 1
              loop: start=0, step=1, limit=1
              $region167: #{fcabs_forward.11} parent=165 // loop_pre_header
                _
              $region168: #{fcabs_forward.11} parent=165 // loop_header
                %s441 = sphi 0, %s445
                %p442 = scmp.ge.s32.totalorder %s441, 1
                %s446 = sphi %s424, %s424
                %s447 = sphi %s431, %s431
              $region169: #{fcabs_forward.11} parent=165 // loop_header_branch
                %444 = sbr.rel (%p442) target = $region173
              $region170: #{fcabs_forward.11} parent=165 // loop_body
                %v448 = vld [vmem:[%s446] sm:%s439]
                %449 = vst [vmem:[%s447] sm:%s439] %v448
                %v450 = vld [vmem:[%s446 + $0x8] sm:%s439]
                %451 = vst [vmem:[%s447 + $0x10] sm:%s439] %v450
              $region171: #{fcabs_forward.11} parent=165 // loop_footer
                %s445 = sadd.s32 1, %s441
              $region172: #{fcabs_forward.11} parent=165 // loop_footer_branch
                %440 = sbr.rel target = $region168
              $region173: #{fcabs_forward.11} parent=165 // loop_exit
                _
            $region166: #{fcabs_forward.11} parent=157 // pred_fallthru
              _
          $region158: #{fcabs_forward.11} parent=153 // pred_fallthru
            _
          %468 = vnop
        $region154: #{fcabs_forward.11} parent=137 // pred_fallthru
          _
      $region138: #{fcabs_forward.11} parent=5 // pred_fallthru
        _
      %p469 = scmp.le.s32.totalorder 2, %s10
      // Predicated region
      $region189: #{fcabs_forward.11} parent=5 // pred_check
        %p470 = pneg %p469
      $region190: #{fcabs_forward.11} parent=5 // pred_check_branch
        %472 = sbr.rel (%p470) target = $region192
      $region191: #{fcabs_forward.11} parent=5 // pred_region
        %s473 = ssub.s32 %s10, 2
        // Predicated region
        $region193: #{fcabs_forward.11} parent=191 // pred_check
          %p474 = pneg %p163
        $region194: #{fcabs_forward.11} parent=191 // pred_check_branch
          %476 = sbr.rel (%p474) target = $region196
        $region195: #{fcabs_forward.11} parent=191 // pred_region
          %s477 = sand.u32 %s148, 1
          %s478 = sand.u32 %s148, 1
          %s479 = smul.addr %s478, 16
          %s480 = scalar_lea.vmem [#allocation5], %s479
        $region196: #{fcabs_forward.11} parent=191 // pred_fallthru
          _
      $region192: #{fcabs_forward.11} parent=5 // pred_fallthru
        _
    $region6: #{fcabs_forward.11} parent=1 // loop_footer
      %s14 = sadd.s32 1, %s10
    $region7: #{fcabs_forward.11} parent=1 // loop_footer_branch
      %9 = sbr.rel target = $region3
    $region8: #{fcabs_forward.11} parent=1 // loop_exit
      _

</llo_original>
